<compile_context>
chip_gen: v6e
topology: v6e:2x2x1
jax: 0.10.0
libtpu: 0.0.40
codegen_flags: <defaults>
</compile_context>

<pallas_src>
import functools

import jax
import jax.numpy as jnp
from jax.experimental import pallas as pl
from jax.experimental.pallas import tpu as pltpu


# ----------------------------------------------------------------------------------
# Generation-aware VMEM limit: <=56 MiB on v7x (64 MiB physical), ~100 MiB on v5e/v6e.
# ----------------------------------------------------------------------------------
@functools.lru_cache(maxsize=None)
def _vmem_limit_bytes():
    cap = 64 * 1024 * 1024
    try:
        cap = int(getattr(pltpu.get_tpu_info(), "vmem_capacity_bytes", cap)) or cap
    except Exception:  # pragma: no cover - depends on jax version / backend
        pass
    return int(min(max(cap - 8 * 1024 * 1024, 32 * 1024 * 1024), 100 * 1024 * 1024))


# ----------------------------------------------------------------------------------
# Multi-head attention + token-mean "tail": (B*N, 3C) qkv -> (B, C) pooled features.
# Fast path (einshape head split + matvec-fused softmax-mean) and a fallback path
# built only from ops proven on older Mosaic; the fast path is probed once.
# ----------------------------------------------------------------------------------
def _mha_token_mean_fast(qkv, batch, n, c, num_heads):
    nh = num_heads
    dh = c // nh
    bh = batch * nh

    def split(x2d):                       # (B*N, C) -> (B*H, N, dh), batch-major
        x4 = pltpu.einshape("bn(hd)->bhnd", x2d.reshape(batch, n, c), h=nh, d=dh)
        return x4.reshape(bh, n, dh)

    q = split(qkv[:, :c]).astype(jnp.bfloat16)
    k = split(qkv[:, c:2 * c]).astype(jnp.bfloat16)
    v = split(qkv[:, 2 * c:]).astype(jnp.bfloat16)

    s = jax.lax.dot_general(q, k, (((2,), (2,)), ((0,), (0,))),
                            preferred_element_type=jnp.float32)          # (BH, N, N)
    s = s - jnp.max(s, axis=-1, keepdims=True)
    e = jnp.exp(s)

    # AdaptiveAvgPool1d(1) folded before the value matmul (exact: linear in tokens):
    #   mean_i softmax(s)_{i,j} = sum_i (1/(N*rowsum_i)) * e_{i,j}
    # realized as a batched (1,N)@(N,N) matvec; probabilities are never materialized.
    r = pl.reciprocal(jnp.sum(e, axis=-1), approx=True) * (1.0 / n)       # (BH, N)
    pbar = jax.lax.dot_general(r.reshape(bh, 1, n).astype(jnp.bfloat16),
                               e.astype(jnp.bfloat16),
                               (((2,), (1,)), ((0,), (0,))),
                               preferred_element_type=jnp.float32)        # (BH, 1, N)
    pooled = jax.lax.dot_general(pbar.astype(jnp.bfloat16), v,
                                 (((2,), (1,)), ((0,), (0,))),
                                 preferred_element_type=jnp.float32)      # (BH, 1, dh)
    return pooled.reshape(batch, c)       # head-major channel concat per batch element


def _mha_token_mean_safe(qkv, batch, n, c, num_heads):
    """Fallback using only ops proven on older Mosaic (per-batch loop, slice+stack)."""
    nh = num_heads
    dh = c // nh
    rows = []
    for b in range(batch):
        blk = qkv[b * n:(b + 1) * n, :]                                   # (N, 3C)
        q = jnp.stack([blk[:, h * dh:(h + 1) * dh] for h in range(nh)], axis=0)
        k = jnp.stack([blk[:, c + h * dh:c + (h + 1) * dh] for h in range(nh)], axis=0)
        v = jnp.stack([blk[:, 2 * c + h * dh:2 * c + (h + 1) * dh] for h in range(nh)],
                      axis=0)
        s = jax.lax.dot_general(q.astype(jnp.bfloat16), k.astype(jnp.bfloat16),
                                (((2,), (2,)), ((0,), (0,))),
                                preferred_element_type=jnp.float32)       # (H, N, N)
        s = s - jnp.max(s, axis=-1, keepdims=True)
        e = jnp.exp(s)
        p = e * pl.reciprocal(jnp.sum(e, axis=-1, keepdims=True), approx=True)
        pbar = jnp.mean(p, axis=1, keepdims=True)                         # (H, 1, N)
        pooled = jax.lax.dot_general(pbar.astype(jnp.bfloat16), v.astype(jnp.bfloat16),
                                     (((2,), (1,)), ((0,), (0,))),
                                     preferred_element_type=jnp.float32)  # (H, 1, dh)
        rows.append(jnp.concatenate([pooled[h] for h in range(nh)], axis=-1))  # (1, C)
    return jnp.concatenate(rows, axis=0)                                  # (B, C)


@functools.lru_cache(maxsize=None)
def _fast_mha_tail_supported():
    """Probe: einshape head split + matvec-fused softmax-mean + pooled reshape all
    lower and match a plain-JAX reference (loose tol: bf16 MXU + approx reciprocal)."""
    b_, n_, nh_, dh_ = 2, 64, 4, 8
    c_ = nh_ * dh_
    try:
        qkv = jax.random.uniform(jax.random.PRNGKey(2), (b_ * n_, 3 * c_), jnp.float32)
        # Large head-dependent offsets on the V columns make head-permutation bugs loud.
        head_off = jnp.repeat(jnp.arange(nh_, dtype=jnp.float32) * 8.0, dh_)
        qkv = qkv.at[:, 2 * c_:].add(head_off[None, :])

        def _probe(qkv_ref, o_ref):
            o_ref[...] = _mha_token_mean_fast(qkv_ref[...], b_, n_, c_, nh_)

        got = pl.pallas_call(
            _probe, out_shape=jax.ShapeDtypeStruct((b_, c_), jnp.float32))(qkv)

        def heads(x):
            return x.reshape(b_, n_, nh_, dh_).transpose(0, 2, 1, 3)

        q, k, v = heads(qkv[:, :c_]), heads(qkv[:, c_:2 * c_]), heads(qkv[:, 2 * c_:])
        p = jax.nn.softmax(jnp.einsum("bhid,bhjd->bhij", q, k), axis=-1)
        want = jnp.einsum("bhij,bhjd->bhid", p, v).mean(axis=2).reshape(b_, c_)
        return bool(jnp.allclose(got, want, rtol=5e-2, atol=5e-2))
    except Exception:  # pragma: no cover - depends on jax/mosaic version
        return False


# ----------------------------------------------------------------------------------
# Fused SE kernel: LayerNorm -> QKV -> batched MHA -> token-mean -> proj.
# Grid-less call; x_ref is (B*N, C) with the batch folded into the MXU M dimension.
# ----------------------------------------------------------------------------------
def se_attention_kernel(x_ref, ln_g_ref, ln_b_ref, wqkv_ref, bqkv_ref,
                        wproj_ref, bproj_ref, out_ref, *, batch, num_heads, fast_tail):
    bn, c = x_ref.shape
    n = bn // batch

    x = x_ref[...].astype(jnp.float32)

    # LayerNorm over channels (f32; eps matches nn.LayerNorm default).
    mean = jnp.mean(x, axis=-1, keepdims=True)
    var = jnp.mean((x - mean) ** 2, axis=-1, keepdims=True)
    xn = (x - mean) * jax.lax.rsqrt(var + 1e-5)
    xn = xn * ln_g_ref[...] + ln_b_ref[...]

    # Fused QKV projection: one (B*N, C)@(C, 3C) MXU pass (bf16 in, f32 accumulate).
    # The Q columns of Wqkv / bqkv already carry the head_dim**-0.5 scale.
    qkv = jnp.dot(xn.astype(jnp.bfloat16), wqkv_ref[...],
                  preferred_element_type=jnp.float32) + bqkv_ref[...]     # (B*N, 3C)

    if fast_tail:
        pooled = _mha_token_mean_fast(qkv, batch, n, c, num_heads)        # (B, C)
    else:
        pooled = _mha_token_mean_safe(qkv, batch, n, c, num_heads)        # (B, C)

    y = jnp.dot(pooled.astype(jnp.bfloat16), wproj_ref[...],
                preferred_element_type=jnp.float32) + bproj_ref[...]      # (B, C)
    # TODO(synk): attn_drop / proj_drop (p=0.1) treated as identity (eval semantics).
    out_ref[...] = y.astype(out_ref.dtype)


def se_forward(x_nchw, params, patch, num_heads):
    """SE block: adaptive avg pool (if needed), then the fused LN+MHA+pool+proj kernel."""
    b, c, h, w = x_nchw.shape
    if h > patch:
        # AdaptiveAvgPool2d(patch) for divisible spatial sizes.
        # TODO(synk): general adaptive pooling for non-divisible spatial sizes.
        assert h % patch == 0 and w % patch == 0
        x_nchw = x_nchw.reshape(b, c, patch, h // patch, patch, w // patch).mean(axis=(3, 5))
        h = w = patch
    n = h * w
    # TODO(synk): feed (B, C, N) directly and relayout in-kernel to skip this transpose.
    x_tok = x_nchw.reshape(b, c, n).transpose(0, 2, 1).reshape(b * n, c).astype(jnp.float32)

    dh = c // num_heads
    kernel = functools.partial(se_attention_kernel, batch=b, num_heads=num_heads,
                               fast_tail=_fast_mha_tail_supported())

    cost = pl.CostEstimate(
        flops=int(2 * b * n * c * 3 * c + 2 * b * num_heads * n * n * dh
                  + 2 * b * num_heads * n * n + 2 * b * num_heads * n * dh
                  + 2 * b * c * c),
        transcendentals=int(b * num_heads * n * n),
        bytes_accessed=int(x_tok.size * 4 + b * c * 4
                           + (3 * c * c + c * c) * 2 + 8 * c * 4),
    )

    # Grid-less call: no pipeline double-buffering, so Wqkv/Wproj are single-resident
    # in VMEM (fits the full-scale C=2048 block inside v7x's 64 MiB).
    pooled = pl.pallas_call(
        kernel,
        out_shape=jax.ShapeDtypeStruct((b, c), jnp.float32),
        compiler_params=pltpu.CompilerParams(vmem_limit_bytes=_vmem_limit_bytes()),
        cost_estimate=cost,
    )(
        x_tok,
        params["ln_g"].reshape(1, c),
        params["ln_b"].reshape(1, c),
        params["wqkv"],
        params["bqkv"].reshape(1, 3 * c),
        params["wproj"],
        params["bproj"].reshape(1, c),
    )
    return pooled                                            # (B, C)


# ----------------------------------------------------------------------------------
# Fused classifier head (index == 4): fc1/fc2/fc3 + down + classifier_concat + sum
# in a single Pallas kernel.  hw (3,) lives in SMEM (loss reweighting, ones if unused).
# Weights are bf16 (f32 accumulation); hw is folded into the activations pre-matmul.
# ----------------------------------------------------------------------------------
def fused_head_kernel(hw_ref, out1_ref, out2_ref, out3_ref,
                      fc1w_ref, fc1b_ref, fc2w_ref, fc2b_ref, fc3w_ref, fc3b_ref,
                      downw_ref, downb_ref, clsw_ref, clsb_ref,
                      ocom_ref, xcat_ref):
    o1 = out1_ref[...]
    o2 = out2_ref[...]
    o3 = out3_ref[...]
    c1, c2, c3 = o1.shape[1], o2.shape[1], o3.shape[1]

    f1 = jnp.dot(o1.astype(jnp.bfloat16), fc1w_ref[...],
                 preferred_element_type=jnp.float32) + fc1b_ref[...]
    f2 = jnp.dot(o2.astype(jnp.bfloat16), fc2w_ref[...],
                 preferred_element_type=jnp.float32) + fc2b_ref[...]
    f3 = jnp.dot(o3.astype(jnp.bfloat16), fc3w_ref[...],
                 preferred_element_type=jnp.float32) + fc3b_ref[...]

    # down(concat([hw0*o1, hw1*o2, hw2*o3])) as a split-weight sum (no concat); the
    # hidden-weight scalars are folded into the activations before the matmuls.
    s1 = (o1 * hw_ref[0]).astype(jnp.bfloat16)
    s2 = (o2 * hw_ref[1]).astype(jnp.bfloat16)
    s3 = (o3 * hw_ref[2]).astype(jnp.bfloat16)
    d = (jnp.dot(s1, downw_ref[0:c1, :], preferred_element_type=jnp.float32)
         + jnp.dot(s2, downw_ref[c1:c1 + c2, :], preferred_element_type=jnp.float32)
         + jnp.dot(s3, downw_ref[c1 + c2:c1 + c2 + c3, :],
                   preferred_element_type=jnp.float32)
         + downb_ref[...])
    # TODO(synk): F.dropout(p=0.1) after `down` treated as identity (eval semantics).
    xcat = (jnp.dot(d.astype(jnp.bfloat16), clsw_ref[...],
                    preferred_element_type=jnp.float32) + clsb_ref[...])

    xcat_ref[...] = xcat.astype(xcat_ref.dtype)
    ocom_ref[...] = (f1 + f2 + f3 + xcat).astype(ocom_ref.dtype)


def fused_classifier_head(params, out1, out2, out3, hw):
    bsz, c1 = out1.shape
    c2 = out2.shape[1]
    c3 = out3.shape[1]
    cf = params["down_w"].shape[1]
    nc = params["cls_w"].shape[1]

    def vmem2d(shape):
        return pl.BlockSpec(shape, lambda i: (0, 0))

    ocom, xcat = pl.pallas_call(
        fused_head_kernel,
        out_shape=(jax.ShapeDtypeStruct((bsz, nc), jnp.float32),
                   jax.ShapeDtypeStruct((bsz, nc), jnp.float32)),
        grid=(1,),
        in_specs=[
            pl.BlockSpec(memory_space=pltpu.MemorySpace.SMEM),            # hw (3,)
            vmem2d((bsz, c1)), vmem2d((bsz, c2)), vmem2d((bsz, c3)),
            vmem2d((c1, nc)), vmem2d((1, nc)),
            vmem2d((c2, nc)), vmem2d((1, nc)),
            vmem2d((c3, nc)), vmem2d((1, nc)),
            vmem2d((c1 + c2 + c3, cf)), vmem2d((1, cf)),
            vmem2d((cf, nc)), vmem2d((1, nc)),
        ],
        out_specs=(vmem2d((bsz, nc)), vmem2d((bsz, nc))),
    )(
        hw, out1, out2, out3,
        params["fc1_w"], params["fc1_b"].reshape(1, nc),
        params["fc2_w"], params["fc2_b"].reshape(1, nc),
        params["fc3_w"], params["fc3_b"].reshape(1, nc),
        params["down_w"], params["down_b"].reshape(1, cf),
        params["cls_w"], params["cls_b"].reshape(1, nc),
    )
    return ocom, xcat


# ----------------------------------------------------------------------------------
# Simple Pallas linear (used for the single-branch index=1/2/3 paths)
# ----------------------------------------------------------------------------------
def linear_kernel(x_ref, w_ref, b_ref, o_ref):
    o_ref[...] = (jnp.dot(x_ref[...].astype(w_ref.dtype), w_ref[...],
                          preferred_element_type=jnp.float32)
                  + b_ref[...]).astype(o_ref.dtype)


def pallas_linear(x, w, b):
    bsz, fin = x.shape
    fout = w.shape[1]
    return pl.pallas_call(
        linear_kernel,
        out_shape=jax.ShapeDtypeStruct((bsz, fout), jnp.float32),
        grid=(1,),
        in_specs=[
            pl.BlockSpec((bsz, fin), lambda i: (0, 0)),
            pl.BlockSpec((fin, fout), lambda i: (0, 0)),
            pl.BlockSpec((1, fout), lambda i: (0, 0)),
        ],
        out_specs=pl.BlockSpec((bsz, fout), lambda i: (0, 0)),
    )(x, w, b.reshape(1, fout))


# ----------------------------------------------------------------------------------
# Parameter initialization (deterministic, synthetic)
# ----------------------------------------------------------------------------------
def init_linear_params(key, fan_in, fan_out, w_dtype=jnp.float32):
    kw, kb = jax.random.split(key)
    w = jax.random.normal(kw, (fan_in, fan_out), jnp.float32) * (1.0 / jnp.sqrt(fan_in))
    b = jax.random.normal(kb, (fan_out,), jnp.float32) * 0.01
    return w.astype(w_dtype), b


def init_se_params(key, c, num_heads):
    k1, k2 = jax.random.split(key)
    wqkv, bqkv = init_linear_params(k1, c, 3 * c)
    # Fold the attention scale (head_dim ** -0.5) into the Q columns of Wqkv / bqkv,
    # removing the in-kernel `q * scale` multiply (exact).
    scale = float((c // num_heads) ** -0.5)
    col_scale = jnp.concatenate([jnp.full((c,), scale, jnp.float32),
                                 jnp.ones((2 * c,), jnp.float32)])
    wqkv = (wqkv * col_scale[None, :]).astype(jnp.bfloat16)
    bqkv = bqkv * col_scale
    wproj, bproj = init_linear_params(k2, c, c, w_dtype=jnp.bfloat16)
    return {
        "ln_g": jnp.ones((c,), jnp.float32),
        "ln_b": jnp.zeros((c,), jnp.float32),
        "wqkv": wqkv, "bqkv": bqkv,
        "wproj": wproj, "bproj": bproj,
    }


def init_rapmg_params(key, feature_size, classes_num):
    keys = jax.random.split(key, 8)
    p = {}
    p["att1"] = init_se_params(keys[0], feature_size, num_heads=8)
    p["att2"] = init_se_params(keys[1], feature_size * 2, num_heads=16)
    p["att3"] = init_se_params(keys[2], feature_size * 4, num_heads=16)
    bf16 = jnp.bfloat16
    p["fc1_w"], p["fc1_b"] = init_linear_params(keys[3], feature_size, classes_num, bf16)
    p["fc2_w"], p["fc2_b"] = init_linear_params(keys[4], feature_size * 2, classes_num, bf16)
    p["fc3_w"], p["fc3_b"] = init_linear_params(keys[5], feature_size * 4, classes_num, bf16)
    p["down_w"], p["down_b"] = init_linear_params(keys[6], feature_size * 7, feature_size, bf16)
    p["cls_w"], p["cls_b"] = init_linear_params(keys[7], feature_size, classes_num, bf16)
    return p


# ----------------------------------------------------------------------------------
# RAPMG_com forward (index selects the branch, as in the PyTorch module)
# TODO(synk): backbone `self.features` is an external model; xf3/xf4/xf5 are inputs,
#             and sc_loss (needs backbone logits + target) is returned as 0.
# ----------------------------------------------------------------------------------
def rapmg_com_forward(params, xf3, xf4, xf5, index=4, loss=None, target=None):
    sc_loss = 0.0

    if index == 1:
        out1 = se_forward(xf3, params["att1"], patch=16, num_heads=8)
        return pallas_linear(out1, params["fc1_w"], params["fc1_b"]), sc_loss
    if index == 2:
        out2 = se_forward(xf4, params["att2"], patch=8, num_heads=16)
        return pallas_linear(out2, params["fc2_w"], params["fc2_b"]), sc_loss
    if index == 3:
        out3 = se_forward(xf5, params["att3"], patch=8, num_heads=16)
        return pallas_linear(out3, params["fc3_w"], params["fc3_b"]), sc_loss
    if index == 4:
        out1 = se_forward(xf3, params["att1"], patch=16, num_heads=8)
        out2 = se_forward(xf4, params["att2"], patch=8, num_heads=16)
        out3 = se_forward(xf5, params["att3"], patch=8, num_heads=16)
        if loss is not None:
            hw = 1.0 - (loss - jnp.min(loss)) / (jnp.max(loss) - jnp.min(loss)) + jnp.mean(loss)
            hw = hw.astype(jnp.float32).reshape(3)
        else:
            hw = jnp.ones((3,), jnp.float32)
        output_com, x_concat = fused_classifier_head(params, out1, out2, out3, hw)
        return output_com, x_concat, sc_loss
    raise ValueError("index must be in {1,2,3,4}")


if __name__ == "__main__":
    FEATURE_SIZE = 64   # scaled-down stand-in for 512
    CLASSES = 4
    B = 2

    key = jax.random.PRNGKey(0)
    kp, k3, k4, k5 = jax.random.split(key, 4)
    params = init_rapmg_params(kp, FEATURE_SIZE, CLASSES)

    # Synthetic backbone feature maps (NCHW), spatial 8x8 -> N = 64 tokens per SE block
    xf3 = jax.random.normal(k3, (B, FEATURE_SIZE, 8, 8), jnp.float32)
    xf4 = jax.random.normal(k4, (B, FEATURE_SIZE * 2, 8, 8), jnp.float32)
    xf5 = jax.random.normal(k5, (B, FEATURE_SIZE * 4, 8, 8), jnp.float32)

    output_com, x_concat, sc_loss = rapmg_com_forward(params, xf3, xf4, xf5, index=4)
    jax.block_until_ready(output_com)
    jax.block_until_ready(x_concat)

    assert output_com.shape == (B, CLASSES)
    assert x_concat.shape == (B, CLASSES)
    print("KERNEL_OK")
</pallas_src>

<mosaic_0001>
module attributes {stable_mosaic.version = 11 : i64} {
  func.func @se_attention_kernel(%arg0: memref<128x64xf32, #tpu.memory_space<vmem>>, %arg1: memref<1x64xf32, #tpu.memory_space<vmem>>, %arg2: memref<1x64xf32, #tpu.memory_space<vmem>>, %arg3: memref<64x192xbf16, #tpu.memory_space<vmem>>, %arg4: memref<1x192xf32, #tpu.memory_space<vmem>>, %arg5: memref<64x64xbf16, #tpu.memory_space<vmem>>, %arg6: memref<1x64xf32, #tpu.memory_space<vmem>>, %arg7: memref<2x64xf32, #tpu.memory_space<vmem>>) attributes {dimension_semantics = [], scalar_prefetch = 0 : i64, scratch_operands = 0 : i64, tpu.core_type = #tpu.core_type<tc>} {
    %c0 = arith.constant 0 : index
    %c0_0 = arith.constant 0 : index
    %0 = vector.load %arg0[%c0, %c0_0] : memref<128x64xf32, #tpu.memory_space<vmem>>, vector<128x64xf32>
    %cst = arith.constant dense<0.000000e+00> : vector<128xf32>
    %1 = vector.multi_reduction <add>, %0, %cst [1] : vector<128x64xf32> to vector<128xf32>
    %2 = vector.shape_cast %1 : vector<128xf32> to vector<128x1xf32>
    %cst_1 = arith.constant 6.400000e+01 : f32
    %3 = vector.broadcast %cst_1 : f32 to vector<128x1xf32>
    %4 = arith.divf %2, %3 : vector<128x1xf32>
    %5 = vector.broadcast %4 : vector<128x1xf32> to vector<128x64xf32>
    %6 = arith.subf %0, %5 : vector<128x64xf32>
    %7 = arith.mulf %6, %6 : vector<128x64xf32>
    %cst_2 = arith.constant dense<0.000000e+00> : vector<128xf32>
    %8 = vector.multi_reduction <add>, %7, %cst_2 [1] : vector<128x64xf32> to vector<128xf32>
    %9 = vector.shape_cast %8 : vector<128xf32> to vector<128x1xf32>
    %cst_3 = arith.constant 6.400000e+01 : f32
    %10 = vector.broadcast %cst_3 : f32 to vector<128x1xf32>
    %11 = arith.divf %9, %10 : vector<128x1xf32>
    %12 = vector.broadcast %4 : vector<128x1xf32> to vector<128x64xf32>
    %13 = arith.subf %0, %12 : vector<128x64xf32>
    %cst_4 = arith.constant 9.99999974E-6 : f32
    %14 = vector.broadcast %cst_4 : f32 to vector<128x1xf32>
    %15 = arith.addf %11, %14 : vector<128x1xf32>
    %16 = math.rsqrt %15 : vector<128x1xf32>
    %17 = vector.broadcast %16 : vector<128x1xf32> to vector<128x64xf32>
    %18 = arith.mulf %13, %17 : vector<128x64xf32>
    %c0_5 = arith.constant 0 : index
    %c0_6 = arith.constant 0 : index
    %19 = vector.load %arg1[%c0_5, %c0_6] : memref<1x64xf32, #tpu.memory_space<vmem>>, vector<1x64xf32>
    %20 = vector.broadcast %19 : vector<1x64xf32> to vector<128x64xf32>
    %21 = arith.mulf %18, %20 : vector<128x64xf32>
    %c0_7 = arith.constant 0 : index
    %c0_8 = arith.constant 0 : index
    %22 = vector.load %arg2[%c0_7, %c0_8] : memref<1x64xf32, #tpu.memory_space<vmem>>, vector<1x64xf32>
    %23 = vector.broadcast %22 : vector<1x64xf32> to vector<128x64xf32>
    %24 = arith.addf %21, %23 : vector<128x64xf32>
    %25 = arith.truncf %24 : vector<128x64xf32> to vector<128x64xbf16>
    %c0_9 = arith.constant 0 : index
    %c0_10 = arith.constant 0 : index
    %26 = vector.load %arg3[%c0_9, %c0_10] : memref<64x192xbf16, #tpu.memory_space<vmem>>, vector<64x192xbf16>
    %cst_11 = arith.constant dense<0.000000e+00> : vector<128x192xf32>
    %27 = tpu.matmul %25, %26, %cst_11 {dimension_numbers = #tpu.dot_dimension_numbers<[1], [0], [0], [1], [0, 0, 1, 1], [], []>} : vector<128x64xbf16>, vector<64x192xbf16>, vector<128x192xf32> -> vector<128x192xf32>
    %c0_12 = arith.constant 0 : index
    %c0_13 = arith.constant 0 : index
    %28 = vector.load %arg4[%c0_12, %c0_13] : memref<1x192xf32, #tpu.memory_space<vmem>>, vector<1x192xf32>
    %29 = vector.broadcast %28 : vector<1x192xf32> to vector<128x192xf32>
    %30 = arith.addf %27, %29 : vector<128x192xf32>
    %31 = vector.extract_strided_slice %30 {offsets = [0, 0], sizes = [64, 192], strides = [1, 1]} : vector<128x192xf32> to vector<64x192xf32>
    %32 = vector.extract_strided_slice %31 {offsets = [0, 0], sizes = [64, 8], strides = [1, 1]} : vector<64x192xf32> to vector<64x8xf32>
    %33 = vector.extract_strided_slice %31 {offsets = [0, 8], sizes = [64, 8], strides = [1, 1]} : vector<64x192xf32> to vector<64x8xf32>
    %34 = vector.extract_strided_slice %31 {offsets = [0, 16], sizes = [64, 8], strides = [1, 1]} : vector<64x192xf32> to vector<64x8xf32>
    %35 = vector.extract_strided_slice %31 {offsets = [0, 24], sizes = [64, 8], strides = [1, 1]} : vector<64x192xf32> to vector<64x8xf32>
    %36 = vector.extract_strided_slice %31 {offsets = [0, 32], sizes = [64, 8], strides = [1, 1]} : vector<64x192xf32> to vector<64x8xf32>
    %37 = vector.extract_strided_slice %31 {offsets = [0, 40], sizes = [64, 8], strides = [1, 1]} : vector<64x192xf32> to vector<64x8xf32>
    %38 = vector.extract_strided_slice %31 {offsets = [0, 48], sizes = [64, 8], strides = [1, 1]} : vector<64x192xf32> to vector<64x8xf32>
    %39 = vector.extract_strided_slice %31 {offsets = [0, 56], sizes = [64, 8], strides = [1, 1]} : vector<64x192xf32> to vector<64x8xf32>
    %40 = vector.shape_cast %32 : vector<64x8xf32> to vector<1x64x8xf32>
    %41 = vector.shape_cast %33 : vector<64x8xf32> to vector<1x64x8xf32>
    %42 = vector.shape_cast %34 : vector<64x8xf32> to vector<1x64x8xf32>
    %43 = vector.shape_cast %35 : vector<64x8xf32> to vector<1x64x8xf32>
    %44 = vector.shape_cast %36 : vector<64x8xf32> to vector<1x64x8xf32>
    %45 = vector.shape_cast %37 : vector<64x8xf32> to vector<1x64x8xf32>
    %46 = vector.shape_cast %38 : vector<64x8xf32> to vector<1x64x8xf32>
    %47 = vector.shape_cast %39 : vector<64x8xf32> to vector<1x64x8xf32>
    %48 = tpu.concatenate %40, %41, %42, %43, %44, %45, %46, %47 in 0 : vector<1x64x8xf32>, vector<1x64x8xf32>, vector<1x64x8xf32>, vector<1x64x8xf32>, vector<1x64x8xf32>, vector<1x64x8xf32>, vector<1x64x8xf32>, vector<1x64x8xf32> -> vector<8x64x8xf32>
    %49 = vector.extract_strided_slice %31 {offsets = [0, 64], sizes = [64, 8], strides = [1, 1]} : vector<64x192xf32> to vector<64x8xf32>
    %50 = vector.extract_strided_slice %31 {offsets = [0, 72], sizes = [64, 8], strides = [1, 1]} : vector<64x192xf32> to vector<64x8xf32>
    %51 = vector.extract_strided_slice %31 {offsets = [0, 80], sizes = [64, 8], strides = [1, 1]} : vector<64x192xf32> to vector<64x8xf32>
    %52 = vector.extract_strided_slice %31 {offsets = [0, 88], sizes = [64, 8], strides = [1, 1]} : vector<64x192xf32> to vector<64x8xf32>
    %53 = vector.extract_strided_slice %31 {offsets = [0, 96], sizes = [64, 8], strides = [1, 1]} : vector<64x192xf32> to vector<64x8xf32>
    %54 = vector.extract_strided_slice %31 {offsets = [0, 104], sizes = [64, 8], strides = [1, 1]} : vector<64x192xf32> to vector<64x8xf32>
    %55 = vector.extract_strided_slice %31 {offsets = [0, 112], sizes = [64, 8], strides = [1, 1]} : vector<64x192xf32> to vector<64x8xf32>
    %56 = vector.extract_strided_slice %31 {offsets = [0, 120], sizes = [64, 8], strides = [1, 1]} : vector<64x192xf32> to vector<64x8xf32>
    %57 = vector.shape_cast %49 : vector<64x8xf32> to vector<1x64x8xf32>
    %58 = vector.shape_cast %50 : vector<64x8xf32> to vector<1x64x8xf32>
    %59 = vector.shape_cast %51 : vector<64x8xf32> to vector<1x64x8xf32>
    %60 = vector.shape_cast %52 : vector<64x8xf32> to vector<1x64x8xf32>
    %61 = vector.shape_cast %53 : vector<64x8xf32> to vector<1x64x8xf32>
    %62 = vector.shape_cast %54 : vector<64x8xf32> to vector<1x64x8xf32>
    %63 = vector.shape_cast %55 : vector<64x8xf32> to vector<1x64x8xf32>
    %64 = vector.shape_cast %56 : vector<64x8xf32> to vector<1x64x8xf32>
    %65 = tpu.concatenate %57, %58, %59, %60, %61, %62, %63, %64 in 0 : vector<1x64x8xf32>, vector<1x64x8xf32>, vector<1x64x8xf32>, vector<1x64x8xf32>, vector<1x64x8xf32>, vector<1x64x8xf32>, vector<1x64x8xf32>, vector<1x64x8xf32> -> vector<8x64x8xf32>
    %66 = vector.extract_strided_slice %31 {offsets = [0, 128], sizes = [64, 8], strides = [1, 1]} : vector<64x192xf32> to vector<64x8xf32>
    %67 = vector.extract_strided_slice %31 {offsets = [0, 136], sizes = [64, 8], strides = [1, 1]} : vector<64x192xf32> to vector<64x8xf32>
    %68 = vector.extract_strided_slice %31 {offsets = [0, 144], sizes = [64, 8], strides = [1, 1]} : vector<64x192xf32> to vector<64x8xf32>
    %69 = vector.extract_strided_slice %31 {offsets = [0, 152], sizes = [64, 8], strides = [1, 1]} : vector<64x192xf32> to vector<64x8xf32>
    %70 = vector.extract_strided_slice %31 {offsets = [0, 160], sizes = [64, 8], strides = [1, 1]} : vector<64x192xf32> to vector<64x8xf32>
    %71 = vector.extract_strided_slice %31 {offsets = [0, 168], sizes = [64, 8], strides = [1, 1]} : vector<64x192xf32> to vector<64x8xf32>
    %72 = vector.extract_strided_slice %31 {offsets = [0, 176], sizes = [64, 8], strides = [1, 1]} : vector<64x192xf32> to vector<64x8xf32>
    %73 = vector.extract_strided_slice %31 {offsets = [0, 184], sizes = [64, 8], strides = [1, 1]} : vector<64x192xf32> to vector<64x8xf32>
    %74 = vector.shape_cast %66 : vector<64x8xf32> to vector<1x64x8xf32>
    %75 = vector.shape_cast %67 : vector<64x8xf32> to vector<1x64x8xf32>
    %76 = vector.shape_cast %68 : vector<64x8xf32> to vector<1x64x8xf32>
    %77 = vector.shape_cast %69 : vector<64x8xf32> to vector<1x64x8xf32>
    %78 = vector.shape_cast %70 : vector<64x8xf32> to vector<1x64x8xf32>
    %79 = vector.shape_cast %71 : vector<64x8xf32> to vector<1x64x8xf32>
    %80 = vector.shape_cast %72 : vector<64x8xf32> to vector<1x64x8xf32>
    %81 = vector.shape_cast %73 : vector<64x8xf32> to vector<1x64x8xf32>
    %82 = tpu.concatenate %74, %75, %76, %77, %78, %79, %80, %81 in 0 : vector<1x64x8xf32>, vector<1x64x8xf32>, vector<1x64x8xf32>, vector<1x64x8xf32>, vector<1x64x8xf32>, vector<1x64x8xf32>, vector<1x64x8xf32>, vector<1x64x8xf32> -> vector<8x64x8xf32>
    %83 = arith.truncf %48 : vector<8x64x8xf32> to vector<8x64x8xbf16>
    %84 = arith.truncf %65 : vector<8x64x8xf32> to vector<8x64x8xbf16>
    %cst_14 = arith.constant dense<0.000000e+00> : vector<8x64x64xf32>
    %85 = tpu.matmul %83, %84, %cst_14 {dimension_numbers = #tpu.dot_dimension_numbers<[2], [2], [1], [1], [0, 0, 0, 1, 1, 1], [0], [0]>} : vector<8x64x8xbf16>, vector<8x64x8xbf16>, vector<8x64x64xf32> -> vector<8x64x64xf32>
    %cst_15 = arith.constant dense<0xFF800000> : vector<8x64xf32>
    %86 = vector.multi_reduction <maximumf>, %85, %cst_15 [2] : vector<8x64x64xf32> to vector<8x64xf32>
    %87 = vector.shape_cast %86 : vector<8x64xf32> to vector<8x64x1xf32>
    %88 = vector.broadcast %87 : vector<8x64x1xf32> to vector<8x64x64xf32>
    %89 = arith.subf %85, %88 : vector<8x64x64xf32>
    %90 = math.exp %89 : vector<8x64x64xf32>
    %cst_16 = arith.constant dense<0.000000e+00> : vector<8x64xf32>
    %91 = vector.multi_reduction <add>, %90, %cst_16 [2] : vector<8x64x64xf32> to vector<8x64xf32>
    %92 = vector.shape_cast %91 : vector<8x64xf32> to vector<8x64x1xf32>
    %93 = tpu.reciprocal %92 {approx = true} : vector<8x64x1xf32> -> vector<8x64x1xf32>
    %94 = vector.broadcast %93 : vector<8x64x1xf32> to vector<8x64x64xf32>
    %95 = arith.mulf %90, %94 : vector<8x64x64xf32>
    %cst_17 = arith.constant dense<0.000000e+00> : vector<8x64xf32>
    %96 = vector.multi_reduction <add>, %95, %cst_17 [1] : vector<8x64x64xf32> to vector<8x64xf32>
    %97 = vector.shape_cast %96 : vector<8x64xf32> to vector<8x1x64xf32>
    %cst_18 = arith.constant 6.400000e+01 : f32
    %98 = vector.broadcast %cst_18 : f32 to vector<8x1x64xf32>
    %99 = arith.divf %97, %98 : vector<8x1x64xf32>
    %100 = arith.truncf %99 : vector<8x1x64xf32> to vector<8x1x64xbf16>
    %101 = arith.truncf %82 : vector<8x64x8xf32> to vector<8x64x8xbf16>
    %cst_19 = arith.constant dense<0.000000e+00> : vector<8x1x8xf32>
    %102 = tpu.matmul %100, %101, %cst_19 {dimension_numbers = #tpu.dot_dimension_numbers<[2], [1], [1], [2], [0, 0, 0, 1, 1, 2], [0], [0]>} : vector<8x1x64xbf16>, vector<8x64x8xbf16>, vector<8x1x8xf32> -> vector<8x1x8xf32>
    %103 = vector.extract_strided_slice %102 {offsets = [0, 0, 0], sizes = [1, 1, 8], strides = [1, 1, 1]} : vector<8x1x8xf32> to vector<1x1x8xf32>
    %104 = vector.shape_cast %103 : vector<1x1x8xf32> to vector<1x8xf32>
    %105 = vector.extract_strided_slice %102 {offsets = [1, 0, 0], sizes = [1, 1, 8], strides = [1, 1, 1]} : vector<8x1x8xf32> to vector<1x1x8xf32>
    %106 = vector.shape_cast %105 : vector<1x1x8xf32> to vector<1x8xf32>
    %107 = vector.extract_strided_slice %102 {offsets = [2, 0, 0], sizes = [1, 1, 8], strides = [1, 1, 1]} : vector<8x1x8xf32> to vector<1x1x8xf32>
    %108 = vector.shape_cast %107 : vector<1x1x8xf32> to vector<1x8xf32>
    %109 = vector.extract_strided_slice %102 {offsets = [3, 0, 0], sizes = [1, 1, 8], strides = [1, 1, 1]} : vector<8x1x8xf32> to vector<1x1x8xf32>
    %110 = vector.shape_cast %109 : vector<1x1x8xf32> to vector<1x8xf32>
    %111 = vector.extract_strided_slice %102 {offsets = [4, 0, 0], sizes = [1, 1, 8], strides = [1, 1, 1]} : vector<8x1x8xf32> to vector<1x1x8xf32>
    %112 = vector.shape_cast %111 : vector<1x1x8xf32> to vector<1x8xf32>
    %113 = vector.extract_strided_slice %102 {offsets = [5, 0, 0], sizes = [1, 1, 8], strides = [1, 1, 1]} : vector<8x1x8xf32> to vector<1x1x8xf32>
    %114 = vector.shape_cast %113 : vector<1x1x8xf32> to vector<1x8xf32>
    %115 = vector.extract_strided_slice %102 {offsets = [6, 0, 0], sizes = [1, 1, 8], strides = [1, 1, 1]} : vector<8x1x8xf32> to vector<1x1x8xf32>
    %116 = vector.shape_cast %115 : vector<1x1x8xf32> to vector<1x8xf32>
    %117 = vector.extract_strided_slice %102 {offsets = [7, 0, 0], sizes = [1, 1, 8], strides = [1, 1, 1]} : vector<8x1x8xf32> to vector<1x1x8xf32>
    %118 = vector.shape_cast %117 : vector<1x1x8xf32> to vector<1x8xf32>
    %119 = tpu.concatenate %104, %106, %108, %110, %112, %114, %116, %118 in 1 : vector<1x8xf32>, vector<1x8xf32>, vector<1x8xf32>, vector<1x8xf32>, vector<1x8xf32>, vector<1x8xf32>, vector<1x8xf32>, vector<1x8xf32> -> vector<1x64xf32>
    %120 = vector.extract_strided_slice %30 {offsets = [64, 0], sizes = [64, 192], strides = [1, 1]} : vector<128x192xf32> to vector<64x192xf32>
    %121 = vector.extract_strided_slice %120 {offsets = [0, 0], sizes = [64, 8], strides = [1, 1]} : vector<64x192xf32> to vector<64x8xf32>
    %122 = vector.extract_strided_slice %120 {offsets = [0, 8], sizes = [64, 8], strides = [1, 1]} : vector<64x192xf32> to vector<64x8xf32>
    %123 = vector.extract_strided_slice %120 {offsets = [0, 16], sizes = [64, 8], strides = [1, 1]} : vector<64x192xf32> to vector<64x8xf32>
    %124 = vector.extract_strided_slice %120 {offsets = [0, 24], sizes = [64, 8], strides = [1, 1]} : vector<64x192xf32> to vector<64x8xf32>
    %125 = vector.extract_strided_slice %120 {offsets = [0, 32], sizes = [64, 8], strides = [1, 1]} : vector<64x192xf32> to vector<64x8xf32>
    %126 = vector.extract_strided_slice %120 {offsets = [0, 40], sizes = [64, 8], strides = [1, 1]} : vector<64x192xf32> to vector<64x8xf32>
    %127 = vector.extract_strided_slice %120 {offsets = [0, 48], sizes = [64, 8], strides = [1, 1]} : vector<64x192xf32> to vector<64x8xf32>
    %128 = vector.extract_strided_slice %120 {offsets = [0, 56], sizes = [64, 8], strides = [1, 1]} : vector<64x192xf32> to vector<64x8xf32>
    %129 = vector.shape_cast %121 : vector<64x8xf32> to vector<1x64x8xf32>
    %130 = vector.shape_cast %122 : vector<64x8xf32> to vector<1x64x8xf32>
    %131 = vector.shape_cast %123 : vector<64x8xf32> to vector<1x64x8xf32>
    %132 = vector.shape_cast %124 : vector<64x8xf32> to vector<1x64x8xf32>
    %133 = vector.shape_cast %125 : vector<64x8xf32> to vector<1x64x8xf32>
    %134 = vector.shape_cast %126 : vector<64x8xf32> to vector<1x64x8xf32>
    %135 = vector.shape_cast %127 : vector<64x8xf32> to vector<1x64x8xf32>
    %136 = vector.shape_cast %128 : vector<64x8xf32> to vector<1x64x8xf32>
    %137 = tpu.concatenate %129, %130, %131, %132, %133, %134, %135, %136 in 0 : vector<1x64x8xf32>, vector<1x64x8xf32>, vector<1x64x8xf32>, vector<1x64x8xf32>, vector<1x64x8xf32>, vector<1x64x8xf32>, vector<1x64x8xf32>, vector<1x64x8xf32> -> vector<8x64x8xf32>
    %138 = vector.extract_strided_slice %120 {offsets = [0, 64], sizes = [64, 8], strides = [1, 1]} : vector<64x192xf32> to vector<64x8xf32>
    %139 = vector.extract_strided_slice %120 {offsets = [0, 72], sizes = [64, 8], strides = [1, 1]} : vector<64x192xf32> to vector<64x8xf32>
    %140 = vector.extract_strided_slice %120 {offsets = [0, 80], sizes = [64, 8], strides = [1, 1]} : vector<64x192xf32> to vector<64x8xf32>
    %141 = vector.extract_strided_slice %120 {offsets = [0, 88], sizes = [64, 8], strides = [1, 1]} : vector<64x192xf32> to vector<64x8xf32>
    %142 = vector.extract_strided_slice %120 {offsets = [0, 96], sizes = [64, 8], strides = [1, 1]} : vector<64x192xf32> to vector<64x8xf32>
    %143 = vector.extract_strided_slice %120 {offsets = [0, 104], sizes = [64, 8], strides = [1, 1]} : vector<64x192xf32> to vector<64x8xf32>
    %144 = vector.extract_strided_slice %120 {offsets = [0, 112], sizes = [64, 8], strides = [1, 1]} : vector<64x192xf32> to vector<64x8xf32>
    %145 = vector.extract_strided_slice %120 {offsets = [0, 120], sizes = [64, 8], strides = [1, 1]} : vector<64x192xf32> to vector<64x8xf32>
    %146 = vector.shape_cast %138 : vector<64x8xf32> to vector<1x64x8xf32>
    %147 = vector.shape_cast %139 : vector<64x8xf32> to vector<1x64x8xf32>
    %148 = vector.shape_cast %140 : vector<64x8xf32> to vector<1x64x8xf32>
    %149 = vector.shape_cast %141 : vector<64x8xf32> to vector<1x64x8xf32>
    %150 = vector.shape_cast %142 : vector<64x8xf32> to vector<1x64x8xf32>
    %151 = vector.shape_cast %143 : vector<64x8xf32> to vector<1x64x8xf32>
    %152 = vector.shape_cast %144 : vector<64x8xf32> to vector<1x64x8xf32>
    %153 = vector.shape_cast %145 : vector<64x8xf32> to vector<1x64x8xf32>
    %154 = tpu.concatenate %146, %147, %148, %149, %150, %151, %152, %153 in 0 : vector<1x64x8xf32>, vector<1x64x8xf32>, vector<1x64x8xf32>, vector<1x64x8xf32>, vector<1x64x8xf32>, vector<1x64x8xf32>, vector<1x64x8xf32>, vector<1x64x8xf32> -> vector<8x64x8xf32>
    %155 = vector.extract_strided_slice %120 {offsets = [0, 128], sizes = [64, 8], strides = [1, 1]} : vector<64x192xf32> to vector<64x8xf32>
    %156 = vector.extract_strided_slice %120 {offsets = [0, 136], sizes = [64, 8], strides = [1, 1]} : vector<64x192xf32> to vector<64x8xf32>
    %157 = vector.extract_strided_slice %120 {offsets = [0, 144], sizes = [64, 8], strides = [1, 1]} : vector<64x192xf32> to vector<64x8xf32>
    %158 = vector.extract_strided_slice %120 {offsets = [0, 152], sizes = [64, 8], strides = [1, 1]} : vector<64x192xf32> to vector<64x8xf32>
    %159 = vector.extract_strided_slice %120 {offsets = [0, 160], sizes = [64, 8], strides = [1, 1]} : vector<64x192xf32> to vector<64x8xf32>
    %160 = vector.extract_strided_slice %120 {offsets = [0, 168], sizes = [64, 8], strides = [1, 1]} : vector<64x192xf32> to vector<64x8xf32>
    %161 = vector.extract_strided_slice %120 {offsets = [0, 176], sizes = [64, 8], strides = [1, 1]} : vector<64x192xf32> to vector<64x8xf32>
    %162 = vector.extract_strided_slice %120 {offsets = [0, 184], sizes = [64, 8], strides = [1, 1]} : vector<64x192xf32> to vector<64x8xf32>
    %163 = vector.shape_cast %155 : vector<64x8xf32> to vector<1x64x8xf32>
    %164 = vector.shape_cast %156 : vector<64x8xf32> to vector<1x64x8xf32>
    %165 = vector.shape_cast %157 : vector<64x8xf32> to vector<1x64x8xf32>
    %166 = vector.shape_cast %158 : vector<64x8xf32> to vector<1x64x8xf32>
    %167 = vector.shape_cast %159 : vector<64x8xf32> to vector<1x64x8xf32>
    %168 = vector.shape_cast %160 : vector<64x8xf32> to vector<1x64x8xf32>
    %169 = vector.shape_cast %161 : vector<64x8xf32> to vector<1x64x8xf32>
    %170 = vector.shape_cast %162 : vector<64x8xf32> to vector<1x64x8xf32>
    %171 = tpu.concatenate %163, %164, %165, %166, %167, %168, %169, %170 in 0 : vector<1x64x8xf32>, vector<1x64x8xf32>, vector<1x64x8xf32>, vector<1x64x8xf32>, vector<1x64x8xf32>, vector<1x64x8xf32>, vector<1x64x8xf32>, vector<1x64x8xf32> -> vector<8x64x8xf32>
    %172 = arith.truncf %137 : vector<8x64x8xf32> to vector<8x64x8xbf16>
    %173 = arith.truncf %154 : vector<8x64x8xf32> to vector<8x64x8xbf16>
    %cst_20 = arith.constant dense<0.000000e+00> : vector<8x64x64xf32>
    %174 = tpu.matmul %172, %173, %cst_20 {dimension_numbers = #tpu.dot_dimension_numbers<[2], [2], [1], [1], [0, 0, 0, 1, 1, 1], [0], [0]>} : vector<8x64x8xbf16>, vector<8x64x8xbf16>, vector<8x64x64xf32> -> vector<8x64x64xf32>
    %cst_21 = arith.constant dense<0xFF800000> : vector<8x64xf32>
    %175 = vector.multi_reduction <maximumf>, %174, %cst_21 [2] : vector<8x64x64xf32> to vector<8x64xf32>
    %176 = vector.shape_cast %175 : vector<8x64xf32> to vector<8x64x1xf32>
    %177 = vector.broadcast %176 : vector<8x64x1xf32> to vector<8x64x64xf32>
    %178 = arith.subf %174, %177 : vector<8x64x64xf32>
    %179 = math.exp %178 : vector<8x64x64xf32>
    %cst_22 = arith.constant dense<0.000000e+00> : vector<8x64xf32>
    %180 = vector.multi_reduction <add>, %179, %cst_22 [2] : vector<8x64x64xf32> to vector<8x64xf32>
    %181 = vector.shape_cast %180 : vector<8x64xf32> to vector<8x64x1xf32>
    %182 = tpu.reciprocal %181 {approx = true} : vector<8x64x1xf32> -> vector<8x64x1xf32>
    %183 = vector.broadcast %182 : vector<8x64x1xf32> to vector<8x64x64xf32>
    %184 = arith.mulf %179, %183 : vector<8x64x64xf32>
    %cst_23 = arith.constant dense<0.000000e+00> : vector<8x64xf32>
    %185 = vector.multi_reduction <add>, %184, %cst_23 [1] : vector<8x64x64xf32> to vector<8x64xf32>
    %186 = vector.shape_cast %185 : vector<8x64xf32> to vector<8x1x64xf32>
    %cst_24 = arith.constant 6.400000e+01 : f32
    %187 = vector.broadcast %cst_24 : f32 to vector<8x1x64xf32>
    %188 = arith.divf %186, %187 : vector<8x1x64xf32>
    %189 = arith.truncf %188 : vector<8x1x64xf32> to vector<8x1x64xbf16>
    %190 = arith.truncf %171 : vector<8x64x8xf32> to vector<8x64x8xbf16>
    %cst_25 = arith.constant dense<0.000000e+00> : vector<8x1x8xf32>
    %191 = tpu.matmul %189, %190, %cst_25 {dimension_numbers = #tpu.dot_dimension_numbers<[2], [1], [1], [2], [0, 0, 0, 1, 1, 2], [0], [0]>} : vector<8x1x64xbf16>, vector<8x64x8xbf16>, vector<8x1x8xf32> -> vector<8x1x8xf32>
    %192 = vector.extract_strided_slice %191 {offsets = [0, 0, 0], sizes = [1, 1, 8], strides = [1, 1, 1]} : vector<8x1x8xf32> to vector<1x1x8xf32>
    %193 = vector.shape_cast %192 : vector<1x1x8xf32> to vector<1x8xf32>
    %194 = vector.extract_strided_slice %191 {offsets = [1, 0, 0], sizes = [1, 1, 8], strides = [1, 1, 1]} : vector<8x1x8xf32> to vector<1x1x8xf32>
    %195 = vector.shape_cast %194 : vector<1x1x8xf32> to vector<1x8xf32>
    %196 = vector.extract_strided_slice %191 {offsets = [2, 0, 0], sizes = [1, 1, 8], strides = [1, 1, 1]} : vector<8x1x8xf32> to vector<1x1x8xf32>
    %197 = vector.shape_cast %196 : vector<1x1x8xf32> to vector<1x8xf32>
    %198 = vector.extract_strided_slice %191 {offsets = [3, 0, 0], sizes = [1, 1, 8], strides = [1, 1, 1]} : vector<8x1x8xf32> to vector<1x1x8xf32>
    %199 = vector.shape_cast %198 : vector<1x1x8xf32> to vector<1x8xf32>
    %200 = vector.extract_strided_slice %191 {offsets = [4, 0, 0], sizes = [1, 1, 8], strides = [1, 1, 1]} : vector<8x1x8xf32> to vector<1x1x8xf32>
    %201 = vector.shape_cast %200 : vector<1x1x8xf32> to vector<1x8xf32>
    %202 = vector.extract_strided_slice %191 {offsets = [5, 0, 0], sizes = [1, 1, 8], strides = [1, 1, 1]} : vector<8x1x8xf32> to vector<1x1x8xf32>
    %203 = vector.shape_cast %202 : vector<1x1x8xf32> to vector<1x8xf32>
    %204 = vector.extract_strided_slice %191 {offsets = [6, 0, 0], sizes = [1, 1, 8], strides = [1, 1, 1]} : vector<8x1x8xf32> to vector<1x1x8xf32>
    %205 = vector.shape_cast %204 : vector<1x1x8xf32> to vector<1x8xf32>
    %206 = vector.extract_strided_slice %191 {offsets = [7, 0, 0], sizes = [1, 1, 8], strides = [1, 1, 1]} : vector<8x1x8xf32> to vector<1x1x8xf32>
    %207 = vector.shape_cast %206 : vector<1x1x8xf32> to vector<1x8xf32>
    %208 = tpu.concatenate %193, %195, %197, %199, %201, %203, %205, %207 in 1 : vector<1x8xf32>, vector<1x8xf32>, vector<1x8xf32>, vector<1x8xf32>, vector<1x8xf32>, vector<1x8xf32>, vector<1x8xf32>, vector<1x8xf32> -> vector<1x64xf32>
    %209 = tpu.concatenate %119, %208 in 0 : vector<1x64xf32>, vector<1x64xf32> -> vector<2x64xf32>
    %210 = arith.truncf %209 : vector<2x64xf32> to vector<2x64xbf16>
    %c0_26 = arith.constant 0 : index
    %c0_27 = arith.constant 0 : index
    %211 = vector.load %arg5[%c0_26, %c0_27] : memref<64x64xbf16, #tpu.memory_space<vmem>>, vector<64x64xbf16>
    %cst_28 = arith.constant dense<0.000000e+00> : vector<2x64xf32>
    %212 = tpu.matmul %210, %211, %cst_28 {dimension_numbers = #tpu.dot_dimension_numbers<[1], [0], [0], [1], [0, 0, 1, 1], [], []>} : vector<2x64xbf16>, vector<64x64xbf16>, vector<2x64xf32> -> vector<2x64xf32>
    %c0_29 = arith.constant 0 : index
    %c0_30 = arith.constant 0 : index
    %213 = vector.load %arg6[%c0_29, %c0_30] : memref<1x64xf32, #tpu.memory_space<vmem>>, vector<1x64xf32>
    %214 = vector.broadcast %213 : vector<1x64xf32> to vector<2x64xf32>
    %215 = arith.addf %212, %214 : vector<2x64xf32>
    %c0_31 = arith.constant 0 : index
    %c0_32 = arith.constant 0 : index
    %216 = vector.load %arg7[%c0_31, %c0_32] : memref<2x64xf32, #tpu.memory_space<vmem>>, vector<2x64xf32>
    tpu.vector_store %arg7[%c0_31, %c0_32], %215 {strides = array<i32>} : memref<2x64xf32, #tpu.memory_space<vmem>>, vector<2x64xf32>,
    return
  }
}

</mosaic_0001>

<llo_original>
// kernel: tpu_custom_call.1
$region0: #{tpu_custom_call.1}
  #allocation0 [shape = 'u32[]', space=smem, size = 0x4, offset = 0x4, fixed_abs, tag = 'smem constant byte address 0x4 - core index']
  #allocation1 [shape = 'u32[144,128]{1,0:T(1,128)}', space=vmem, size = 0x12000, scoped, tag = 'internal scratch']
  %s0 = inlined_call_operand.vmem [shape: f32[128,64], index: 0, kind: input, shape index: {}]
  %s1 = inlined_call_operand.vmem [shape: f32[1,64], index: 1, kind: input, shape index: {}]
  %s2 = inlined_call_operand.vmem [shape: f32[1,64], index: 2, kind: input, shape index: {}]
  %s3 = inlined_call_operand.vmem [shape: bf16[64,192], index: 3, kind: input, shape index: {}]
  %s4 = inlined_call_operand.vmem [shape: f32[1,192], index: 4, kind: input, shape index: {}]
  %s5 = inlined_call_operand.vmem [shape: bf16[64,64], index: 5, kind: input, shape index: {}]
  %s6 = inlined_call_operand.vmem [shape: f32[1,64], index: 6, kind: input, shape index: {}]
  %s7 = inlined_call_operand.hbm [shape: f32[2,64], index: 7, kind: output, shape index: {}]
  %s8 = sld [smem:[#allocation0]]
  $region38: #{tpu_custom_call.1} parent=0
    _
  %s10 = ssub.s32 1, %s8
  %s11 = scalar_select 0, %s10, %s8
  $region1: #{tpu_custom_call.1} parent=0
    #allocation2 [shape = 'u8[1024]{0}', space=vmem, size = 0x400, scoped, tag = 'output window, operand 0, single buffered']
    #allocation3 [shape = 's32[1]{0}', space=sflag, size = 0x4, scoped, tag = 'scoped memory for tpu_custom_call.1']
    %12 = vsyncpa [#allocation3], 0
    // Predicated region
    $region2: #{tpu_custom_call.1} parent=1 // pred_check
      _
    $region3: #{tpu_custom_call.1} parent=1 // pred_check_branch
      %14 = sbr.rel (0) target = $region5
    $region4: #{tpu_custom_call.1} parent=1 // pred_region
      _
    $region5: #{tpu_custom_call.1} parent=1 // pred_fallthru
      _
    // Predicated region
    $region6: #{tpu_custom_call.1} parent=1 // pred_check
      _
    $region7: #{tpu_custom_call.1} parent=1 // pred_check_branch
      %16 = sbr.rel (0) target = $region9
    $region8: #{tpu_custom_call.1} parent=1 // pred_region
      _
    $region9: #{tpu_custom_call.1} parent=1 // pred_fallthru
      _
    // Predicated region
    $region10: #{tpu_custom_call.1} parent=1 // pred_check
      _
    $region11: #{tpu_custom_call.1} parent=1 // pred_check_branch
      %18 = sbr.rel (0) target = $region13
    $region12: #{tpu_custom_call.1} parent=1 // pred_region
      _
    $region13: #{tpu_custom_call.1} parent=1 // pred_fallthru
      _
    // Predicated region
    $region14: #{tpu_custom_call.1} parent=1 // pred_check
      _
    $region15: #{tpu_custom_call.1} parent=1 // pred_check_branch
      %20 = sbr.rel (0) target = $region17
    $region16: #{tpu_custom_call.1} parent=1 // pred_region
      _
    $region17: #{tpu_custom_call.1} parent=1 // pred_fallthru
      _
    // Predicated region
    $region18: #{tpu_custom_call.1} parent=1 // pred_check
      _
    $region19: #{tpu_custom_call.1} parent=1 // pred_check_branch
      %22 = sbr.rel (0) target = $region21
    $region20: #{tpu_custom_call.1} parent=1 // pred_region
      _
    $region21: #{tpu_custom_call.1} parent=1 // pred_fallthru
      _
    // Predicated region
    $region22: #{tpu_custom_call.1} parent=1 // pred_check
      _
    $region23: #{tpu_custom_call.1} parent=1 // pred_check_branch
      %24 = sbr.rel (0) target = $region25
    $region24: #{tpu_custom_call.1} parent=1 // pred_region
      _
    $region25: #{tpu_custom_call.1} parent=1 // pred_fallthru
      _
    // Predicated region
    $region26: #{tpu_custom_call.1} parent=1 // pred_check
      _
    $region27: #{tpu_custom_call.1} parent=1 // pred_check_branch
      %26 = sbr.rel (0) target = $region29
    $region28: #{tpu_custom_call.1} parent=1 // pred_region
      _
    $region29: #{tpu_custom_call.1} parent=1 // pred_fallthru
      _
    %v28 = vld [vmem:[%s0] sm:$0xff]
    %v29 = vld [vmem:[%s0 + $0x8] sm:$0xff]
    %v30 = vld [vmem:[%s0 + $0x10] sm:$0xff]
    %v31 = vld [vmem:[%s0 + $0x18] sm:$0xff]
    %v32 = vld [vmem:[%s0 + $0x20] sm:$0xff]
    %v33 = vld [vmem:[%s0 + $0x28] sm:$0xff]
    %v34 = vld [vmem:[%s0 + $0x30] sm:$0xff]
    %v35 = vld [vmem:[%s0 + $0x38] sm:$0xff]
    %v36 = vld [vmem:[%s0 + $0x40] sm:$0xff]
    %v37 = vld [vmem:[%s0 + $0x48] sm:$0xff]
    %v38 = vld [vmem:[%s0 + $0x50] sm:$0xff]
    %v39 = vld [vmem:[%s0 + $0x58] sm:$0xff]
    %v40 = vld [vmem:[%s0 + $0x60] sm:$0xff]
    %v41 = vld [vmem:[%s0 + $0x68] sm:$0xff]
    %v42 = vld [vmem:[%s0 + $0x70] sm:$0xff]
    %v43 = vld [vmem:[%s0 + $0x78] sm:$0xff]
    %vm44 = vcmask 523264
    %v45 = vsel %vm44, %v28, 0.0
    %46 = vadd.xlane.f32.xlu0 %v45
    %v47 = vpop.xlane.xlu0 %46
    %v48 = vsel %vm44, %v29, 0.0
    %49 = vadd.xlane.f32.xlu0 %v48
    %v50 = vpop.xlane.xlu0 %49
    %v51 = vsel %vm44, %v30, 0.0
    %52 = vadd.xlane.f32.xlu0 %v51
    %v53 = vpop.xlane.xlu0 %52
    %v54 = vsel %vm44, %v31, 0.0
    %55 = vadd.xlane.f32.xlu0 %v54
    %v56 = vpop.xlane.xlu0 %55
    %v57 = vsel %vm44, %v32, 0.0
    %58 = vadd.xlane.f32.xlu0 %v57
    %v59 = vpop.xlane.xlu0 %58
    %v60 = vsel %vm44, %v33, 0.0
    %61 = vadd.xlane.f32.xlu0 %v60
    %v62 = vpop.xlane.xlu0 %61
    %v63 = vsel %vm44, %v34, 0.0
    %64 = vadd.xlane.f32.xlu0 %v63
    %v65 = vpop.xlane.xlu0 %64
    %v66 = vsel %vm44, %v35, 0.0
    %67 = vadd.xlane.f32.xlu0 %v66
    %v68 = vpop.xlane.xlu0 %67
    %v69 = vsel %vm44, %v36, 0.0
    %70 = vadd.xlane.f32.xlu0 %v69
    %v71 = vpop.xlane.xlu0 %70
    %v72 = vsel %vm44, %v37, 0.0
    %73 = vadd.xlane.f32.xlu0 %v72
    %v74 = vpop.xlane.xlu0 %73
    %v75 = vsel %vm44, %v38, 0.0
    %76 = vadd.xlane.f32.xlu0 %v75
    %v77 = vpop.xlane.xlu0 %76
    %v78 = vsel %vm44, %v39, 0.0
    %79 = vadd.xlane.f32.xlu0 %v78
    %v80 = vpop.xlane.xlu0 %79
    %v81 = vsel %vm44, %v40, 0.0
    %82 = vadd.xlane.f32.xlu0 %v81
    %v83 = vpop.xlane.xlu0 %82
    %v84 = vsel %vm44, %v41, 0.0
    %85 = vadd.xlane.f32.xlu0 %v84
    %v86 = vpop.xlane.xlu0 %85
    %v87 = vsel %vm44, %v42, 0.0
    %88 = vadd.xlane.f32.xlu0 %v87
    %v89 = vpop.xlane.xlu0 %88
    %v90 = vsel %vm44, %v43, 0.0
    %91 = vadd.xlane.f32.xlu0 %v90
    %v92 = vpop.xlane.xlu0 %91
    %v93 = vrcp.pop 64.0
    %v94 = vmul.f32 %v47, %v93
    %v95 = vmul.f32 %v50, %v93
    %v96 = vmul.f32 %v53, %v93
    %v97 = vmul.f32 %v56, %v93
    %v98 = vmul.f32 %v59, %v93
    %v99 = vmul.f32 %v62, %v93
    %v100 = vmul.f32 %v65, %v93
    %v101 = vmul.f32 %v68, %v93
    %v102 = vmul.f32 %v71, %v93
    %v103 = vmul.f32 %v74, %v93
    %v104 = vmul.f32 %v77, %v93
    %v105 = vmul.f32 %v80, %v93
    %v106 = vmul.f32 %v83, %v93
    %v107 = vmul.f32 %v86, %v93
    %v108 = vmul.f32 %v89, %v93
    %v109 = vmul.f32 %v92, %v93
    %v110 = vsub.f32 %v28, %v94
    %v111 = vsub.f32 %v29, %v95
    %v112 = vsub.f32 %v30, %v96
    %v113 = vsub.f32 %v31, %v97
    %v114 = vsub.f32 %v32, %v98
    %v115 = vsub.f32 %v33, %v99
    %v116 = vsub.f32 %v34, %v100
    %v117 = vsub.f32 %v35, %v101
    %v118 = vsub.f32 %v36, %v102
    %v119 = vsub.f32 %v37, %v103
    %v120 = vsub.f32 %v38, %v104
    %v121 = vsub.f32 %v39, %v105
    %v122 = vsub.f32 %v40, %v106
    %v123 = vsub.f32 %v41, %v107
    %v124 = vsub.f32 %v42, %v108
    %v125 = vsub.f32 %v43, %v109
    %v126 = vmul.f32 %v110, %v110
    %v127 = vmul.f32 %v111, %v111
    %v128 = vmul.f32 %v112, %v112
    %v129 = vmul.f32 %v113, %v113
    %v130 = vmul.f32 %v114, %v114
    %v131 = vmul.f32 %v115, %v115
    %v132 = vmul.f32 %v116, %v116
    %v133 = vmul.f32 %v117, %v117
    %v134 = vmul.f32 %v118, %v118
    %v135 = vmul.f32 %v119, %v119
    %v136 = vmul.f32 %v120, %v120
    %v137 = vmul.f32 %v121, %v121
    %v138 = vmul.f32 %v122, %v122
    %v139 = vmul.f32 %v123, %v123
    %v140 = vmul.f32 %v124, %v124
    %v141 = vmul.f32 %v125, %v125
    %v142 = vsel %vm44, %v126, 0.0
    %143 = vadd.xlane.f32.xlu0 %v142
    %v144 = vpop.xlane.xlu0 %143
    %v145 = vsel %vm44, %v127, 0.0
    %146 = vadd.xlane.f32.xlu0 %v145
    %v147 = vpop.xlane.xlu0 %146
    %v148 = vsel %vm44, %v128, 0.0
    %149 = vadd.xlane.f32.xlu0 %v148
    %v150 = vpop.xlane.xlu0 %149
    %v151 = vsel %vm44, %v129, 0.0
    %152 = vadd.xlane.f32.xlu0 %v151
    %v153 = vpop.xlane.xlu0 %152
    %v154 = vsel %vm44, %v130, 0.0
    %155 = vadd.xlane.f32.xlu0 %v154
    %v156 = vpop.xlane.xlu0 %155
    %v157 = vsel %vm44, %v131, 0.0
    %158 = vadd.xlane.f32.xlu0 %v157
    %v159 = vpop.xlane.xlu0 %158
    %v160 = vsel %vm44, %v132, 0.0
    %161 = vadd.xlane.f32.xlu0 %v160
    %v162 = vpop.xlane.xlu0 %161
    %v163 = vsel %vm44, %v133, 0.0
    %164 = vadd.xlane.f32.xlu0 %v163
    %v165 = vpop.xlane.xlu0 %164
    %v166 = vsel %vm44, %v134, 0.0
    %167 = vadd.xlane.f32.xlu0 %v166
    %v168 = vpop.xlane.xlu0 %167
    %v169 = vsel %vm44, %v135, 0.0
    %170 = vadd.xlane.f32.xlu0 %v169
    %v171 = vpop.xlane.xlu0 %170
    %v172 = vsel %vm44, %v136, 0.0
    %173 = vadd.xlane.f32.xlu0 %v172
    %v174 = vpop.xlane.xlu0 %173
    %v175 = vsel %vm44, %v137, 0.0
    %176 = vadd.xlane.f32.xlu0 %v175
    %v177 = vpop.xlane.xlu0 %176
    %v178 = vsel %vm44, %v138, 0.0
    %179 = vadd.xlane.f32.xlu0 %v178
    %v180 = vpop.xlane.xlu0 %179
    %v181 = vsel %vm44, %v139, 0.0
    %182 = vadd.xlane.f32.xlu0 %v181
    %v183 = vpop.xlane.xlu0 %182
    %v184 = vsel %vm44, %v140, 0.0
    %185 = vadd.xlane.f32.xlu0 %v184
    %v186 = vpop.xlane.xlu0 %185
    %v187 = vsel %vm44, %v141, 0.0
    %188 = vadd.xlane.f32.xlu0 %v187
    %v189 = vpop.xlane.xlu0 %188
    %v190 = vmul.f32 %v144, %v93
    %v191 = vmul.f32 %v147, %v93
    %v192 = vmul.f32 %v150, %v93
    %v193 = vmul.f32 %v153, %v93
    %v194 = vmul.f32 %v156, %v93
    %v195 = vmul.f32 %v159, %v93
    %v196 = vmul.f32 %v162, %v93
    %v197 = vmul.f32 %v165, %v93
    %v198 = vmul.f32 %v168, %v93
    %v199 = vmul.f32 %v171, %v93
    %v200 = vmul.f32 %v174, %v93
    %v201 = vmul.f32 %v177, %v93
    %v202 = vmul.f32 %v180, %v93
    %v203 = vmul.f32 %v183, %v93
    %v204 = vmul.f32 %v186, %v93
    %v205 = vmul.f32 %v189, %v93
    %v206 = vadd.f32 %v190, 1e-05
    %v207 = vadd.f32 %v191, 1e-05
    %v208 = vadd.f32 %v192, 1e-05
    %v209 = vadd.f32 %v193, 1e-05
    %v210 = vadd.f32 %v194, 1e-05
    %v211 = vadd.f32 %v195, 1e-05
    %v212 = vadd.f32 %v196, 1e-05
    %v213 = vadd.f32 %v197, 1e-05
    %v214 = vadd.f32 %v198, 1e-05
    %v215 = vadd.f32 %v199, 1e-05
    %v216 = vadd.f32 %v200, 1e-05
    %v217 = vadd.f32 %v201, 1e-05
    %v218 = vadd.f32 %v202, 1e-05
    %v219 = vadd.f32 %v203, 1e-05
    %v220 = vadd.f32 %v204, 1e-05
    %v221 = vadd.f32 %v205, 1e-05
    %v222 = vrsqrt.pop %v206
    %v223 = vrsqrt.pop %v207
    %v224 = vrsqrt.pop %v208
    %v225 = vrsqrt.pop %v209
    %v226 = vrsqrt.pop %v210
    %v227 = vrsqrt.pop %v211
    %v228 = vrsqrt.pop %v212
    %v229 = vrsqrt.pop %v213
    %v230 = vrsqrt.pop %v214
    %v231 = vrsqrt.pop %v215
    %v232 = vrsqrt.pop %v216
    %v233 = vrsqrt.pop %v217
    %v234 = vrsqrt.pop %v218
    %v235 = vrsqrt.pop %v219
    %v236 = vrsqrt.pop %v220
    %v237 = vrsqrt.pop %v221
    %v238 = vmul.f32 %v110, %v222
    %v239 = vmul.f32 %v111, %v223
    %v240 = vmul.f32 %v112, %v224
    %v241 = vmul.f32 %v113, %v225
    %v242 = vmul.f32 %v114, %v226
    %v243 = vmul.f32 %v115, %v227
    %v244 = vmul.f32 %v116, %v228
    %v245 = vmul.f32 %v117, %v229
    %v246 = vmul.f32 %v118, %v230
    %v247 = vmul.f32 %v119, %v231
    %v248 = vmul.f32 %v120, %v232
    %v249 = vmul.f32 %v121, %v233
    %v250 = vmul.f32 %v122, %v234
    %v251 = vmul.f32 %v123, %v235
    %v252 = vmul.f32 %v124, %v236
    %v253 = vmul.f32 %v125, %v237
    %v254 = vld [vmem:[%s1] sm:$0x1]
    %v256 = vlaneseq
    %v257 = vshrl.u32 %v256, 7
    %v258 = vsub.s32 0, %v257
    %v259 = vrot.slane %v254, %v258
    %v261 = vmul.f32 %v238, %v259
    %v262 = vmul.f32 %v239, %v259
    %v263 = vmul.f32 %v240, %v259
    %v264 = vmul.f32 %v241, %v259
    %v265 = vmul.f32 %v242, %v259
    %v266 = vmul.f32 %v243, %v259
    %v267 = vmul.f32 %v244, %v259
    %v268 = vmul.f32 %v245, %v259
    %v269 = vmul.f32 %v246, %v259
    %v270 = vmul.f32 %v247, %v259
    %v271 = vmul.f32 %v248, %v259
    %v272 = vmul.f32 %v249, %v259
    %v273 = vmul.f32 %v250, %v259
    %v274 = vmul.f32 %v251, %v259
    %v275 = vmul.f32 %v252, %v259
    %v276 = vmul.f32 %v253, %v259
    %v277 = vld [vmem:[%s2] sm:$0x1]
    %v279 = vlaneseq
    %v280 = vshrl.u32 %v279, 7
    %v281 = vsub.s32 0, %v280
    %v282 = vrot.slane %v277, %v281
    %v284 = vadd.f32 %v261, %v282
    %v285 = vadd.f32 %v262, %v282
    %v286 = vadd.f32 %v263, %v282
    %v287 = vadd.f32 %v264, %v282
    %v288 = vadd.f32 %v265, %v282
    %v289 = vadd.f32 %v266, %v282
    %v290 = vadd.f32 %v267, %v282
    %v291 = vadd.f32 %v268, %v282
    %v292 = vadd.f32 %v269, %v282
    %v293 = vadd.f32 %v270, %v282
    %v294 = vadd.f32 %v271, %v282
    %v295 = vadd.f32 %v272, %v282
    %v296 = vadd.f32 %v273, %v282
    %v297 = vadd.f32 %v274, %v282
    %v298 = vadd.f32 %v275, %v282
    %v299 = vadd.f32 %v276, %v282
    %v300 = vpack.c.bf16 %v285, %v284
    %v301 = vpack.c.bf16 %v287, %v286
    %v302 = vpack.c.bf16 %v289, %v288
    %v303 = vpack.c.bf16 %v291, %v290
    %v304 = vpack.c.bf16 %v293, %v292
    %v305 = vpack.c.bf16 %v295, %v294
    %v306 = vpack.c.bf16 %v297, %v296
    %v307 = vpack.c.bf16 %v299, %v298
    %v308 = vld [vmem:[%s3] sm:$0xff]
    %v309 = vld [vmem:[%s3 + $0x8] sm:$0xff]
    %v310 = vld [vmem:[%s3 + $0x10] sm:$0xff]
    %v311 = vld [vmem:[%s3 + $0x18] sm:$0xff]
    %v312 = vld [vmem:[%s3 + $0x20] sm:$0xff]
    %v313 = vld [vmem:[%s3 + $0x28] sm:$0xff]
    %v314 = vld [vmem:[%s3 + $0x30] sm:$0xff]
    %v315 = vld [vmem:[%s3 + $0x38] sm:$0xff]
    %v316 = vld [vmem:[%s4] sm:$0x3]
    %v318 = vlaneseq
    %v319 = vshrl.u32 %v318, 7
    %v320 = vsub.s32 0, %v319
    %v321 = vrot.slane %v316, %v320
    %v322 = vlaneseq
    %v323 = vshrl.u32 %v322, 7
    %v324 = vsub.s32 1, %v323
    %v325 = vrot.slane %v316, %v324
    %v336 = vunpack.c.l.b16 %v308
    %v337 = vunpack.c.h.b16 %v308
    %v338 = vunpack.c.l.b16 %v309
    %v339 = vunpack.c.h.b16 %v309
    %v340 = vunpack.c.l.b16 %v310
    %v341 = vunpack.c.h.b16 %v310
    %v342 = vunpack.c.l.b16 %v311
    %v343 = vunpack.c.h.b16 %v311
    %v344 = vunpack.c.l.b16 %v312
    %v345 = vunpack.c.h.b16 %v312
    %v346 = vunpack.c.l.b16 %v313
    %v347 = vunpack.c.h.b16 %v313
    %v348 = vunpack.c.l.b16 %v314
    %v349 = vunpack.c.h.b16 %v314
    %v350 = vunpack.c.l.b16 %v315
    %v351 = vunpack.c.h.b16 %v315
    %v352 = vpack.c.b16 %v338, %v336
    %v353 = vpack.c.b16 %v339, %v337
    %v354 = vpack.c.b16 %v342, %v340
    %v355 = vpack.c.b16 %v343, %v341
    %v356 = vpack.c.b16 %v346, %v344
    %v357 = vpack.c.b16 %v347, %v345
    %v358 = vpack.c.b16 %v350, %v348
    %v359 = vpack.c.b16 %v351, %v349
    %v369 = vsel %vm44, %v300, 0
    %v372 = vsel %vm44, %v301, 0
    %v375 = vsel %vm44, %v302, 0
    %v378 = vsel %vm44, %v303, 0
    %v381 = vsel %vm44, %v304, 0
    %v384 = vsel %vm44, %v305, 0
    %v387 = vsel %vm44, %v306, 0
    %v390 = vsel %vm44, %v307, 0
    %392 = vmatprep.subr.bf16.mxu0 0
    %393 = vmatpush1.bf16.msra.mxu0 0
    %394 = vmatprep.subr.bf16.mxu0 0
    %395 = vmatpush1.bf16.msra.mxu0 0
    %396 = vmatprep.subr.bf16.mxu0 0
    %397 = vmatpush1.bf16.msra.mxu0 0
    %398 = vmatprep.subr.bf16.mxu0 0
    %399 = vmatpush1.bf16.msra.mxu0 0
    %400 = vmatprep.subr.bf16.mxu0 %v359
    %401 = vmatpush1.bf16.msra.mxu0 %v358
    %402 = vmatprep.subr.bf16.mxu0 %v357
    %403 = vmatpush1.bf16.msra.mxu0 %v356
    %404 = vmatprep.subr.bf16.mxu0 %v355
    %405 = vmatpush1.bf16.msra.mxu0 %v354
    %406 = vmatprep.subr.bf16.mxu0 %v353
    %407 = vmatpush1.bf16.msra.mxu0 %v352
    %408 = vmatprep.subr.bf16.mxu0 0
    %409 = vmatpush2.bf16.msra.mxu0 0
    %410 = vmatprep.subr.bf16.mxu0 0
    %411 = vmatpush2.bf16.msra.mxu0 0
    %412 = vmatprep.subr.bf16.mxu0 0
    %413 = vmatpush2.bf16.msra.mxu0 0
    %414 = vmatprep.subr.bf16.mxu0 0
    %415 = vmatpush2.bf16.msra.mxu0 0
    %416 = vmatprep.subr.bf16.mxu0 0
    %417 = vmatpush2.bf16.msra.mxu0 0
    %418 = vmatprep.subr.bf16.mxu0 0
    %419 = vmatpush2.bf16.msra.mxu0 0
    %420 = vmatprep.subr.bf16.mxu0 0
    %421 = vmatpush2.bf16.msra.mxu0 0
    %422 = vmatprep.subr.bf16.mxu0 0
    %423 = vmatpush2.bf16.msra.mxu0 0
    %424 = vmatprep.mubr.bf16.mxu0 0
    %425 = vmatmul.mubr.bf16.gmra.mxu0 %v369
    %v426 = vpop.f32.mrf.mxu0
    %v427 = vadd.f32 %v321, %v426
    %v428 = vpop.f32.mrf.mxu0
    %v429 = vadd.f32 %v325, %v428
    %v430 = vpop.f32.mrf.mxu0
    %v431 = vadd.f32 %v321, %v430
    %v432 = vpop.f32.mrf.mxu0
    %v433 = vadd.f32 %v325, %v432
    %434 = vmatprep.mubr.bf16.mxu0 0
    %435 = vmatmul.mubr.bf16.gmra.mxu0 %v372
    %v436 = vpop.f32.mrf.mxu0
    %v437 = vadd.f32 %v321, %v436
    %v438 = vpop.f32.mrf.mxu0
    %v439 = vadd.f32 %v325, %v438
    %v440 = vpop.f32.mrf.mxu0
    %v441 = vadd.f32 %v321, %v440
    %v442 = vpop.f32.mrf.mxu0
    %v443 = vadd.f32 %v325, %v442
    %444 = vmatprep.mubr.bf16.mxu0 0
    %445 = vmatmul.mubr.bf16.gmra.mxu0 %v375
    %v446 = vpop.f32.mrf.mxu0
    %v447 = vadd.f32 %v321, %v446
    %v448 = vpop.f32.mrf.mxu0
    %v449 = vadd.f32 %v325, %v448
    %v450 = vpop.f32.mrf.mxu0
    %v451 = vadd.f32 %v321, %v450
    %v452 = vpop.f32.mrf.mxu0
    %v453 = vadd.f32 %v325, %v452
    %454 = vmatprep.mubr.bf16.mxu0 0
    %455 = vmatmul.mubr.bf16.gmra.mxu0 %v378
    %v456 = vpop.f32.mrf.mxu0
    %v457 = vadd.f32 %v321, %v456
    %v458 = vpop.f32.mrf.mxu0
    %v459 = vadd.f32 %v325, %v458
    %v460 = vpop.f32.mrf.mxu0
    %v461 = vadd.f32 %v321, %v460
    %v462 = vpop.f32.mrf.mxu0
    %v463 = vadd.f32 %v325, %v462
    %464 = vmatprep.mubr.bf16.mxu0 0
    %465 = vmatmul.mubr.bf16.gmra.mxu0 %v381
    %v466 = vpop.f32.mrf.mxu0
    %v467 = vadd.f32 %v321, %v466
    %v468 = vpop.f32.mrf.mxu0
    %v469 = vadd.f32 %v325, %v468
    %v470 = vpop.f32.mrf.mxu0
    %v471 = vadd.f32 %v321, %v470
    %v472 = vpop.f32.mrf.mxu0
    %v473 = vadd.f32 %v325, %v472
    %474 = vmatprep.mubr.bf16.mxu0 0
    %475 = vmatmul.mubr.bf16.gmra.mxu0 %v384
    %v476 = vpop.f32.mrf.mxu0
    %v477 = vadd.f32 %v321, %v476
    %v478 = vpop.f32.mrf.mxu0
    %v479 = vadd.f32 %v325, %v478
    %v480 = vpop.f32.mrf.mxu0
    %v481 = vadd.f32 %v321, %v480
    %v482 = vpop.f32.mrf.mxu0
    %v483 = vadd.f32 %v325, %v482
    %484 = vmatprep.mubr.bf16.mxu0 0
    %485 = vmatmul.mubr.bf16.gmra.mxu0 %v387
    %v486 = vpop.f32.mrf.mxu0
    %v487 = vadd.f32 %v321, %v486
    %v488 = vpop.f32.mrf.mxu0
    %v489 = vadd.f32 %v325, %v488
    %v490 = vpop.f32.mrf.mxu0
    %v491 = vadd.f32 %v321, %v490
    %v492 = vpop.f32.mrf.mxu0
    %v493 = vadd.f32 %v325, %v492
    %494 = vmatprep.mubr.bf16.mxu0 0
    %495 = vmatmul.mubr.bf16.gmra.mxu0 %v390
    %v496 = vpop.f32.mrf.mxu0
    %v497 = vadd.f32 %v321, %v496
    %v498 = vpop.f32.mrf.mxu0
    %v499 = vadd.f32 %v325, %v498
    %v500 = vpop.f32.mrf.mxu0
    %v501 = vadd.f32 %v321, %v500
    %v502 = vpop.f32.mrf.mxu0
    %v503 = vadd.f32 %v325, %v502
    %504 = vdwg.mxu0
    %513 = vrot.lane.b32.xlu0 %v427, 120
    %v514 = vpop.permute.xlu0 %513
    %515 = vrot.lane.b32.xlu0 %v431, 120
    %v516 = vpop.permute.xlu0 %515
    %517 = vrot.lane.b32.xlu0 %v437, 120
    %v518 = vpop.permute.xlu0 %517
    %519 = vrot.lane.b32.xlu0 %v441, 120
    %v520 = vpop.permute.xlu0 %519
    %521 = vrot.lane.b32.xlu0 %v447, 120
    %v522 = vpop.permute.xlu0 %521
    %523 = vrot.lane.b32.xlu0 %v451, 120
    %v524 = vpop.permute.xlu0 %523
    %525 = vrot.lane.b32.xlu0 %v457, 120
    %v526 = vpop.permute.xlu0 %525
    %527 = vrot.lane.b32.xlu0 %v461, 120
    %v528 = vpop.permute.xlu0 %527
    %537 = vrot.lane.b32.xlu0 %v427, 112
    %v538 = vpop.permute.xlu0 %537
    %539 = vrot.lane.b32.xlu0 %v431, 112
    %v540 = vpop.permute.xlu0 %539
    %541 = vrot.lane.b32.xlu0 %v437, 112
    %v542 = vpop.permute.xlu0 %541
    %543 = vrot.lane.b32.xlu0 %v441, 112
    %v544 = vpop.permute.xlu0 %543
    %545 = vrot.lane.b32.xlu0 %v447, 112
    %v546 = vpop.permute.xlu0 %545
    %547 = vrot.lane.b32.xlu0 %v451, 112
    %v548 = vpop.permute.xlu0 %547
    %549 = vrot.lane.b32.xlu0 %v457, 112
    %v550 = vpop.permute.xlu0 %549
    %551 = vrot.lane.b32.xlu0 %v461, 112
    %v552 = vpop.permute.xlu0 %551
    %561 = vrot.lane.b32.xlu0 %v427, 104
    %v562 = vpop.permute.xlu0 %561
    %563 = vrot.lane.b32.xlu0 %v431, 104
    %v564 = vpop.permute.xlu0 %563
    %565 = vrot.lane.b32.xlu0 %v437, 104
    %v566 = vpop.permute.xlu0 %565
    %567 = vrot.lane.b32.xlu0 %v441, 104
    %v568 = vpop.permute.xlu0 %567
    %569 = vrot.lane.b32.xlu0 %v447, 104
    %v570 = vpop.permute.xlu0 %569
    %571 = vrot.lane.b32.xlu0 %v451, 104
    %v572 = vpop.permute.xlu0 %571
    %573 = vrot.lane.b32.xlu0 %v457, 104
    %v574 = vpop.permute.xlu0 %573
    %575 = vrot.lane.b32.xlu0 %v461, 104
    %v576 = vpop.permute.xlu0 %575
    %585 = vrot.lane.b32.xlu0 %v427, 96
    %v586 = vpop.permute.xlu0 %585
    %587 = vrot.lane.b32.xlu0 %v431, 96
    %v588 = vpop.permute.xlu0 %587
    %589 = vrot.lane.b32.xlu0 %v437, 96
    %v590 = vpop.permute.xlu0 %589
    %591 = vrot.lane.b32.xlu0 %v441, 96
    %v592 = vpop.permute.xlu0 %591
    %593 = vrot.lane.b32.xlu0 %v447, 96
    %v594 = vpop.permute.xlu0 %593
    %595 = vrot.lane.b32.xlu0 %v451, 96
    %v596 = vpop.permute.xlu0 %595
    %597 = vrot.lane.b32.xlu0 %v457, 96
    %v598 = vpop.permute.xlu0 %597
    %599 = vrot.lane.b32.xlu0 %v461, 96
    %v600 = vpop.permute.xlu0 %599
    %609 = vrot.lane.b32.xlu0 %v427, 88
    %v610 = vpop.permute.xlu0 %609
    %611 = vrot.lane.b32.xlu0 %v431, 88
    %v612 = vpop.permute.xlu0 %611
    %613 = vrot.lane.b32.xlu0 %v437, 88
    %v614 = vpop.permute.xlu0 %613
    %615 = vrot.lane.b32.xlu0 %v441, 88
    %v616 = vpop.permute.xlu0 %615
    %617 = vrot.lane.b32.xlu0 %v447, 88
    %v618 = vpop.permute.xlu0 %617
    %619 = vrot.lane.b32.xlu0 %v451, 88
    %v620 = vpop.permute.xlu0 %619
    %621 = vrot.lane.b32.xlu0 %v457, 88
    %v622 = vpop.permute.xlu0 %621
    %623 = vrot.lane.b32.xlu0 %v461, 88
    %v624 = vpop.permute.xlu0 %623
    %633 = vrot.lane.b32.xlu0 %v427, 80
    %v634 = vpop.permute.xlu0 %633
    %635 = vrot.lane.b32.xlu0 %v431, 80
    %v636 = vpop.permute.xlu0 %635
    %637 = vrot.lane.b32.xlu0 %v437, 80
    %v638 = vpop.permute.xlu0 %637
    %639 = vrot.lane.b32.xlu0 %v441, 80
    %v640 = vpop.permute.xlu0 %639
    %641 = vrot.lane.b32.xlu0 %v447, 80
    %v642 = vpop.permute.xlu0 %641
    %643 = vrot.lane.b32.xlu0 %v451, 80
    %v644 = vpop.permute.xlu0 %643
    %645 = vrot.lane.b32.xlu0 %v457, 80
    %v646 = vpop.permute.xlu0 %645
    %647 = vrot.lane.b32.xlu0 %v461, 80
    %v648 = vpop.permute.xlu0 %647
    %657 = vrot.lane.b32.xlu0 %v427, 72
    %v658 = vpop.permute.xlu0 %657
    %659 = vrot.lane.b32.xlu0 %v431, 72
    %v660 = vpop.permute.xlu0 %659
    %661 = vrot.lane.b32.xlu0 %v437, 72
    %v662 = vpop.permute.xlu0 %661
    %663 = vrot.lane.b32.xlu0 %v441, 72
    %v664 = vpop.permute.xlu0 %663
    %665 = vrot.lane.b32.xlu0 %v447, 72
    %v666 = vpop.permute.xlu0 %665
    %667 = vrot.lane.b32.xlu0 %v451, 72
    %v668 = vpop.permute.xlu0 %667
    %669 = vrot.lane.b32.xlu0 %v457, 72
    %v670 = vpop.permute.xlu0 %669
    %671 = vrot.lane.b32.xlu0 %v461, 72
    %v672 = vpop.permute.xlu0 %671
    %689 = vrot.lane.b32.xlu0 %v429, 120
    %v690 = vpop.permute.xlu0 %689
    %691 = vrot.lane.b32.xlu0 %v433, 120
    %v692 = vpop.permute.xlu0 %691
    %693 = vrot.lane.b32.xlu0 %v439, 120
    %v694 = vpop.permute.xlu0 %693
    %695 = vrot.lane.b32.xlu0 %v443, 120
    %v696 = vpop.permute.xlu0 %695
    %697 = vrot.lane.b32.xlu0 %v449, 120
    %v698 = vpop.permute.xlu0 %697
    %699 = vrot.lane.b32.xlu0 %v453, 120
    %v700 = vpop.permute.xlu0 %699
    %701 = vrot.lane.b32.xlu0 %v459, 120
    %v702 = vpop.permute.xlu0 %701
    %703 = vrot.lane.b32.xlu0 %v463, 120
    %v704 = vpop.permute.xlu0 %703
    %713 = vrot.lane.b32.xlu0 %v429, 112
    %v714 = vpop.permute.xlu0 %713
    %715 = vrot.lane.b32.xlu0 %v433, 112
    %v716 = vpop.permute.xlu0 %715
    %717 = vrot.lane.b32.xlu0 %v439, 112
    %v718 = vpop.permute.xlu0 %717
    %719 = vrot.lane.b32.xlu0 %v443, 112
    %v720 = vpop.permute.xlu0 %719
    %721 = vrot.lane.b32.xlu0 %v449, 112
    %v722 = vpop.permute.xlu0 %721
    %723 = vrot.lane.b32.xlu0 %v453, 112
    %v724 = vpop.permute.xlu0 %723
    %725 = vrot.lane.b32.xlu0 %v459, 112
    %v726 = vpop.permute.xlu0 %725
    %727 = vrot.lane.b32.xlu0 %v463, 112
    %v728 = vpop.permute.xlu0 %727
    %737 = vrot.lane.b32.xlu0 %v429, 104
    %v738 = vpop.permute.xlu0 %737
    %739 = vrot.lane.b32.xlu0 %v433, 104
    %v740 = vpop.permute.xlu0 %739
    %741 = vrot.lane.b32.xlu0 %v439, 104
    %v742 = vpop.permute.xlu0 %741
    %743 = vrot.lane.b32.xlu0 %v443, 104
    %v744 = vpop.permute.xlu0 %743
    %745 = vrot.lane.b32.xlu0 %v449, 104
    %v746 = vpop.permute.xlu0 %745
    %747 = vrot.lane.b32.xlu0 %v453, 104
    %v748 = vpop.permute.xlu0 %747
    %749 = vrot.lane.b32.xlu0 %v459, 104
    %v750 = vpop.permute.xlu0 %749
    %751 = vrot.lane.b32.xlu0 %v463, 104
    %v752 = vpop.permute.xlu0 %751
    %761 = vrot.lane.b32.xlu0 %v429, 96
    %v762 = vpop.permute.xlu0 %761
    %763 = vrot.lane.b32.xlu0 %v433, 96
    %v764 = vpop.permute.xlu0 %763
    %765 = vrot.lane.b32.xlu0 %v439, 96
    %v766 = vpop.permute.xlu0 %765
    %767 = vrot.lane.b32.xlu0 %v443, 96
    %v768 = vpop.permute.xlu0 %767
    %769 = vrot.lane.b32.xlu0 %v449, 96
    %v770 = vpop.permute.xlu0 %769
    %771 = vrot.lane.b32.xlu0 %v453, 96
    %v772 = vpop.permute.xlu0 %771
    %773 = vrot.lane.b32.xlu0 %v459, 96
    %v774 = vpop.permute.xlu0 %773
    %775 = vrot.lane.b32.xlu0 %v463, 96
    %v776 = vpop.permute.xlu0 %775
    %785 = vrot.lane.b32.xlu0 %v429, 88
    %v786 = vpop.permute.xlu0 %785
    %787 = vrot.lane.b32.xlu0 %v433, 88
    %v788 = vpop.permute.xlu0 %787
    %789 = vrot.lane.b32.xlu0 %v439, 88
    %v790 = vpop.permute.xlu0 %789
    %791 = vrot.lane.b32.xlu0 %v443, 88
    %v792 = vpop.permute.xlu0 %791
    %793 = vrot.lane.b32.xlu0 %v449, 88
    %v794 = vpop.permute.xlu0 %793
    %795 = vrot.lane.b32.xlu0 %v453, 88
    %v796 = vpop.permute.xlu0 %795
    %797 = vrot.lane.b32.xlu0 %v459, 88
    %v798 = vpop.permute.xlu0 %797
    %799 = vrot.lane.b32.xlu0 %v463, 88
    %v800 = vpop.permute.xlu0 %799
    %809 = vrot.lane.b32.xlu0 %v429, 80
    %v810 = vpop.permute.xlu0 %809
    %811 = vrot.lane.b32.xlu0 %v433, 80
    %v812 = vpop.permute.xlu0 %811
    %813 = vrot.lane.b32.xlu0 %v439, 80
    %v814 = vpop.permute.xlu0 %813
    %815 = vrot.lane.b32.xlu0 %v443, 80
    %v816 = vpop.permute.xlu0 %815
    %817 = vrot.lane.b32.xlu0 %v449, 80
    %v818 = vpop.permute.xlu0 %817
    %819 = vrot.lane.b32.xlu0 %v453, 80
    %v820 = vpop.permute.xlu0 %819
    %821 = vrot.lane.b32.xlu0 %v459, 80
    %v822 = vpop.permute.xlu0 %821
    %823 = vrot.lane.b32.xlu0 %v463, 80
    %v824 = vpop.permute.xlu0 %823
    %833 = vrot.lane.b32.xlu0 %v429, 72
    %v834 = vpop.permute.xlu0 %833
    %835 = vrot.lane.b32.xlu0 %v433, 72
    %v836 = vpop.permute.xlu0 %835
    %837 = vrot.lane.b32.xlu0 %v439, 72
    %v838 = vpop.permute.xlu0 %837
    %839 = vrot.lane.b32.xlu0 %v443, 72
    %v840 = vpop.permute.xlu0 %839
    %841 = vrot.lane.b32.xlu0 %v449, 72
    %v842 = vpop.permute.xlu0 %841
    %843 = vrot.lane.b32.xlu0 %v453, 72
    %v844 = vpop.permute.xlu0 %843
    %845 = vrot.lane.b32.xlu0 %v459, 72
    %v846 = vpop.permute.xlu0 %845
    %847 = vrot.lane.b32.xlu0 %v463, 72
    %v848 = vpop.permute.xlu0 %847
    %v857 = vpack.c.bf16 %v431, %v427
    %v858 = vpack.c.bf16 %v441, %v437
    %v859 = vpack.c.bf16 %v451, %v447
    %v860 = vpack.c.bf16 %v461, %v457
    %v861 = vpack.c.bf16 %v516, %v514
    %v862 = vpack.c.bf16 %v520, %v518
    %v863 = vpack.c.bf16 %v524, %v522
    %v864 = vpack.c.bf16 %v528, %v526
    %v865 = vpack.c.bf16 %v540, %v538
    %v866 = vpack.c.bf16 %v544, %v542
    %v867 = vpack.c.bf16 %v548, %v546
    %v868 = vpack.c.bf16 %v552, %v550
    %v869 = vpack.c.bf16 %v564, %v562
    %v870 = vpack.c.bf16 %v568, %v566
    %v871 = vpack.c.bf16 %v572, %v570
    %v872 = vpack.c.bf16 %v576, %v574
    %v873 = vpack.c.bf16 %v588, %v586
    %v874 = vpack.c.bf16 %v592, %v590
    %v875 = vpack.c.bf16 %v596, %v594
    %v876 = vpack.c.bf16 %v600, %v598
    %v877 = vpack.c.bf16 %v612, %v610
    %v878 = vpack.c.bf16 %v616, %v614
    %v879 = vpack.c.bf16 %v620, %v618
    %v880 = vpack.c.bf16 %v624, %v622
    %v881 = vpack.c.bf16 %v636, %v634
    %v882 = vpack.c.bf16 %v640, %v638
    %v883 = vpack.c.bf16 %v644, %v642
    %v884 = vpack.c.bf16 %v648, %v646
    %v885 = vpack.c.bf16 %v660, %v658
    %v886 = vpack.c.bf16 %v664, %v662
    %v887 = vpack.c.bf16 %v668, %v666
    %v888 = vpack.c.bf16 %v672, %v670
    %893 = vrot.lane.b32.xlu0 %v857, 64
    %v894 = vpop.permute.xlu0 %893
    %895 = vrot.lane.b32.xlu0 %v858, 64
    %v896 = vpop.permute.xlu0 %895
    %897 = vrot.lane.b32.xlu0 %v859, 64
    %v898 = vpop.permute.xlu0 %897
    %899 = vrot.lane.b32.xlu0 %v860, 64
    %v900 = vpop.permute.xlu0 %899
    %vm901 = vcmask 64512
    %v903 = vsel %vm901, %v857, 0
    %v906 = vsel %vm901, %v858, 0
    %v909 = vsel %vm901, %v859, 0
    %v912 = vsel %vm901, %v860, 0
    %v915 = vsel %vm901, %v894, 0
    %v918 = vsel %vm901, %v896, 0
    %v921 = vsel %vm901, %v898, 0
    %v924 = vsel %vm901, %v900, 0
    %926 = vmatprep.subr.bf16.mxu0 0
    %927 = vmatpush1.bf16.xpose.msra.mxu0 0
    %928 = vmatprep.subr.bf16.mxu0 0
    %929 = vmatpush1.bf16.xpose.msra.mxu0 0
    %930 = vmatprep.subr.bf16.mxu0 0
    %931 = vmatpush1.bf16.xpose.msra.mxu0 0
    %932 = vmatprep.subr.bf16.mxu0 0
    %933 = vmatpush1.bf16.xpose.msra.mxu0 0
    %934 = vmatprep.subr.bf16.mxu0 0
    %935 = vmatpush1.bf16.xpose.msra.mxu0 %v924
    %936 = vmatprep.subr.bf16.mxu0 0
    %937 = vmatpush1.bf16.xpose.msra.mxu0 %v921
    %938 = vmatprep.subr.bf16.mxu0 0
    %939 = vmatpush1.bf16.xpose.msra.mxu0 %v918
    %940 = vmatprep.subr.bf16.mxu0 0
    %941 = vmatpush1.bf16.xpose.msra.mxu0 %v915
    %942 = vmatprep.subr.bf16.mxu0 0
    %943 = vmatpush2.bf16.xpose.msra.mxu0 0
    %944 = vmatprep.subr.bf16.mxu0 0
    %945 = vmatpush2.bf16.xpose.msra.mxu0 0
    %946 = vmatprep.subr.bf16.mxu0 0
    %947 = vmatpush2.bf16.xpose.msra.mxu0 0
    %948 = vmatprep.subr.bf16.mxu0 0
    %949 = vmatpush2.bf16.xpose.msra.mxu0 0
    %950 = vmatprep.subr.bf16.mxu0 0
    %951 = vmatpush2.bf16.xpose.msra.mxu0 0
    %952 = vmatprep.subr.bf16.mxu0 0
    %953 = vmatpush2.bf16.xpose.msra.mxu0 0
    %954 = vmatprep.subr.bf16.mxu0 0
    %955 = vmatpush2.bf16.xpose.msra.mxu0 0
    %956 = vmatprep.subr.bf16.mxu0 0
    %957 = vmatpush2.bf16.xpose.msra.mxu0 0
    %958 = vmatprep.mubr.bf16.mxu0 0
    %959 = vmatmul.mubr.bf16.gmra.mxu0 %v903
    %v960 = vpop.f32.mrf.mxu0
    %v961 = vadd.f32 0.0, %v960
    %v962 = vpop.f32.mrf.mxu0
    %v963 = vpop.f32.mrf.mxu0
    %v964 = vadd.f32 0.0, %v963
    %v965 = vpop.f32.mrf.mxu0
    %966 = vmatprep.mubr.bf16.mxu0 0
    %967 = vmatmul.mubr.bf16.gmra.mxu0 %v906
    %v968 = vpop.f32.mrf.mxu0
    %v969 = vadd.f32 0.0, %v968
    %v970 = vpop.f32.mrf.mxu0
    %v971 = vpop.f32.mrf.mxu0
    %v972 = vadd.f32 0.0, %v971
    %v973 = vpop.f32.mrf.mxu0
    %974 = vmatprep.mubr.bf16.mxu0 0
    %975 = vmatmul.mubr.bf16.gmra.mxu0 %v909
    %v976 = vpop.f32.mrf.mxu0
    %v977 = vadd.f32 0.0, %v976
    %v978 = vpop.f32.mrf.mxu0
    %v979 = vpop.f32.mrf.mxu0
    %v980 = vadd.f32 0.0, %v979
    %v981 = vpop.f32.mrf.mxu0
    %982 = vmatprep.mubr.bf16.mxu0 0
    %983 = vmatmul.mubr.bf16.gmra.mxu0 %v912
    %v984 = vpop.f32.mrf.mxu0
    %v985 = vadd.f32 0.0, %v984
    %v986 = vpop.f32.mrf.mxu0
    %v987 = vpop.f32.mrf.mxu0
    %v988 = vadd.f32 0.0, %v987
    %v989 = vpop.f32.mrf.mxu0
    %990 = vdwg.mxu0
    %995 = vrot.lane.b32.xlu0 %v861, 64
    %v996 = vpop.permute.xlu0 %995
    %997 = vrot.lane.b32.xlu0 %v862, 64
    %v998 = vpop.permute.xlu0 %997
    %999 = vrot.lane.b32.xlu0 %v863, 64
    %v1000 = vpop.permute.xlu0 %999
    %1001 = vrot.lane.b32.xlu0 %v864, 64
    %v1002 = vpop.permute.xlu0 %1001
    %v1004 = vsel %vm901, %v861, 0
    %v1007 = vsel %vm901, %v862, 0
    %v1010 = vsel %vm901, %v863, 0
    %v1013 = vsel %vm901, %v864, 0
    %v1016 = vsel %vm901, %v996, 0
    %v1019 = vsel %vm901, %v998, 0
    %v1022 = vsel %vm901, %v1000, 0
    %v1025 = vsel %vm901, %v1002, 0
    %1027 = vmatprep.subr.bf16.mxu0 0
    %1028 = vmatpush1.bf16.xpose.msra.mxu0 0
    %1029 = vmatprep.subr.bf16.mxu0 0
    %1030 = vmatpush1.bf16.xpose.msra.mxu0 0
    %1031 = vmatprep.subr.bf16.mxu0 0
    %1032 = vmatpush1.bf16.xpose.msra.mxu0 0
    %1033 = vmatprep.subr.bf16.mxu0 0
    %1034 = vmatpush1.bf16.xpose.msra.mxu0 0
    %1035 = vmatprep.subr.bf16.mxu0 0
    %1036 = vmatpush1.bf16.xpose.msra.mxu0 %v1025
    %1037 = vmatprep.subr.bf16.mxu0 0
    %1038 = vmatpush1.bf16.xpose.msra.mxu0 %v1022
    %1039 = vmatprep.subr.bf16.mxu0 0
    %1040 = vmatpush1.bf16.xpose.msra.mxu0 %v1019
    %1041 = vmatprep.subr.bf16.mxu0 0
    %1042 = vmatpush1.bf16.xpose.msra.mxu0 %v1016
    %1043 = vmatprep.subr.bf16.mxu0 0
    %1044 = vmatpush2.bf16.xpose.msra.mxu0 0
    %1045 = vmatprep.subr.bf16.mxu0 0
    %1046 = vmatpush2.bf16.xpose.msra.mxu0 0
    %1047 = vmatprep.subr.bf16.mxu0 0
    %1048 = vmatpush2.bf16.xpose.msra.mxu0 0
    %1049 = vmatprep.subr.bf16.mxu0 0
    %1050 = vmatpush2.bf16.xpose.msra.mxu0 0
    %1051 = vmatprep.subr.bf16.mxu0 0
    %1052 = vmatpush2.bf16.xpose.msra.mxu0 0
    %1053 = vmatprep.subr.bf16.mxu0 0
    %1054 = vmatpush2.bf16.xpose.msra.mxu0 0
    %1055 = vmatprep.subr.bf16.mxu0 0
    %1056 = vmatpush2.bf16.xpose.msra.mxu0 0
    %1057 = vmatprep.subr.bf16.mxu0 0
    %1058 = vmatpush2.bf16.xpose.msra.mxu0 0
    %1059 = vmatprep.mubr.bf16.mxu0 0
    %1060 = vmatmul.mubr.bf16.gmra.mxu0 %v1004
    %v1061 = vpop.f32.mrf.mxu0
    %v1062 = vadd.f32 0.0, %v1061
    %v1063 = vpop.f32.mrf.mxu0
    %v1064 = vpop.f32.mrf.mxu0
    %v1065 = vadd.f32 0.0, %v1064
    %v1066 = vpop.f32.mrf.mxu0
    %1067 = vmatprep.mubr.bf16.mxu0 0
    %1068 = vmatmul.mubr.bf16.gmra.mxu0 %v1007
    %v1069 = vpop.f32.mrf.mxu0
    %v1070 = vadd.f32 0.0, %v1069
    %v1071 = vpop.f32.mrf.mxu0
    %v1072 = vpop.f32.mrf.mxu0
    %v1073 = vadd.f32 0.0, %v1072
    %v1074 = vpop.f32.mrf.mxu0
    %1075 = vmatprep.mubr.bf16.mxu0 0
    %1076 = vmatmul.mubr.bf16.gmra.mxu0 %v1010
    %v1077 = vpop.f32.mrf.mxu0
    %v1078 = vadd.f32 0.0, %v1077
    %v1079 = vpop.f32.mrf.mxu0
    %v1080 = vpop.f32.mrf.mxu0
    %v1081 = vadd.f32 0.0, %v1080
    %v1082 = vpop.f32.mrf.mxu0
    %1083 = vmatprep.mubr.bf16.mxu0 0
    %1084 = vmatmul.mubr.bf16.gmra.mxu0 %v1013
    %v1085 = vpop.f32.mrf.mxu0
    %v1086 = vadd.f32 0.0, %v1085
    %v1087 = vpop.f32.mrf.mxu0
    %v1088 = vpop.f32.mrf.mxu0
    %v1089 = vadd.f32 0.0, %v1088
    %v1090 = vpop.f32.mrf.mxu0
    %1091 = vdwg.mxu0
    %1096 = vrot.lane.b32.xlu0 %v865, 64
    %v1097 = vpop.permute.xlu0 %1096
    %1098 = vrot.lane.b32.xlu0 %v866, 64
    %v1099 = vpop.permute.xlu0 %1098
    %1100 = vrot.lane.b32.xlu0 %v867, 64
    %v1101 = vpop.permute.xlu0 %1100
    %1102 = vrot.lane.b32.xlu0 %v868, 64
    %v1103 = vpop.permute.xlu0 %1102
    %v1105 = vsel %vm901, %v865, 0
    %v1108 = vsel %vm901, %v866, 0
    %v1111 = vsel %vm901, %v867, 0
    %v1114 = vsel %vm901, %v868, 0
    %v1117 = vsel %vm901, %v1097, 0
    %v1120 = vsel %vm901, %v1099, 0
    %v1123 = vsel %vm901, %v1101, 0
    %v1126 = vsel %vm901, %v1103, 0
    %1128 = vmatprep.subr.bf16.mxu0 0
    %1129 = vmatpush1.bf16.xpose.msra.mxu0 0
    %1130 = vmatprep.subr.bf16.mxu0 0
    %1131 = vmatpush1.bf16.xpose.msra.mxu0 0
    %1132 = vmatprep.subr.bf16.mxu0 0
    %1133 = vmatpush1.bf16.xpose.msra.mxu0 0
    %1134 = vmatprep.subr.bf16.mxu0 0
    %1135 = vmatpush1.bf16.xpose.msra.mxu0 0
    %1136 = vmatprep.subr.bf16.mxu0 0
    %1137 = vmatpush1.bf16.xpose.msra.mxu0 %v1126
    %1138 = vmatprep.subr.bf16.mxu0 0
    %1139 = vmatpush1.bf16.xpose.msra.mxu0 %v1123
    %1140 = vmatprep.subr.bf16.mxu0 0
    %1141 = vmatpush1.bf16.xpose.msra.mxu0 %v1120
    %1142 = vmatprep.subr.bf16.mxu0 0
    %1143 = vmatpush1.bf16.xpose.msra.mxu0 %v1117
    %1144 = vmatprep.subr.bf16.mxu0 0
    %1145 = vmatpush2.bf16.xpose.msra.mxu0 0
    %1146 = vmatprep.subr.bf16.mxu0 0
    %1147 = vmatpush2.bf16.xpose.msra.mxu0 0
    %1148 = vmatprep.subr.bf16.mxu0 0
    %1149 = vmatpush2.bf16.xpose.msra.mxu0 0
    %1150 = vmatprep.subr.bf16.mxu0 0
    %1151 = vmatpush2.bf16.xpose.msra.mxu0 0
    %1152 = vmatprep.subr.bf16.mxu0 0
    %1153 = vmatpush2.bf16.xpose.msra.mxu0 0
    %1154 = vmatprep.subr.bf16.mxu0 0
    %1155 = vmatpush2.bf16.xpose.msra.mxu0 0
    %1156 = vmatprep.subr.bf16.mxu0 0
    %1157 = vmatpush2.bf16.xpose.msra.mxu0 0
    %1158 = vmatprep.subr.bf16.mxu0 0
    %1159 = vmatpush2.bf16.xpose.msra.mxu0 0
    %1160 = vmatprep.mubr.bf16.mxu0 0
    %1161 = vmatmul.mubr.bf16.gmra.mxu0 %v1105
    %v1162 = vpop.f32.mrf.mxu0
    %v1163 = vadd.f32 0.0, %v1162
    %v1164 = vpop.f32.mrf.mxu0
    %v1165 = vpop.f32.mrf.mxu0
    %v1166 = vadd.f32 0.0, %v1165
    %v1167 = vpop.f32.mrf.mxu0
    %1168 = vmatprep.mubr.bf16.mxu0 0
    %1169 = vmatmul.mubr.bf16.gmra.mxu0 %v1108
    %v1170 = vpop.f32.mrf.mxu0
    %v1171 = vadd.f32 0.0, %v1170
    %v1172 = vpop.f32.mrf.mxu0
    %v1173 = vpop.f32.mrf.mxu0
    %v1174 = vadd.f32 0.0, %v1173
    %v1175 = vpop.f32.mrf.mxu0
    %1176 = vmatprep.mubr.bf16.mxu0 0
    %1177 = vmatmul.mubr.bf16.gmra.mxu0 %v1111
    %v1178 = vpop.f32.mrf.mxu0
    %v1179 = vadd.f32 0.0, %v1178
    %v1180 = vpop.f32.mrf.mxu0
    %v1181 = vpop.f32.mrf.mxu0
    %v1182 = vadd.f32 0.0, %v1181
    %v1183 = vpop.f32.mrf.mxu0
    %1184 = vmatprep.mubr.bf16.mxu0 0
    %1185 = vmatmul.mubr.bf16.gmra.mxu0 %v1114
    %v1186 = vpop.f32.mrf.mxu0
    %v1187 = vadd.f32 0.0, %v1186
    %v1188 = vpop.f32.mrf.mxu0
    %v1189 = vpop.f32.mrf.mxu0
    %v1190 = vadd.f32 0.0, %v1189
    %v1191 = vpop.f32.mrf.mxu0
    %1192 = vdwg.mxu0
    %1197 = vrot.lane.b32.xlu0 %v869, 64
    %v1198 = vpop.permute.xlu0 %1197
    %1199 = vrot.lane.b32.xlu0 %v870, 64
    %v1200 = vpop.permute.xlu0 %1199
    %1201 = vrot.lane.b32.xlu0 %v871, 64
    %v1202 = vpop.permute.xlu0 %1201
    %1203 = vrot.lane.b32.xlu0 %v872, 64
    %v1204 = vpop.permute.xlu0 %1203
    %v1206 = vsel %vm901, %v869, 0
    %v1209 = vsel %vm901, %v870, 0
    %v1212 = vsel %vm901, %v871, 0
    %v1215 = vsel %vm901, %v872, 0
    %v1218 = vsel %vm901, %v1198, 0
    %v1221 = vsel %vm901, %v1200, 0
    %v1224 = vsel %vm901, %v1202, 0
    %v1227 = vsel %vm901, %v1204, 0
    %1229 = vmatprep.subr.bf16.mxu0 0
    %1230 = vmatpush1.bf16.xpose.msra.mxu0 0
    %1231 = vmatprep.subr.bf16.mxu0 0
    %1232 = vmatpush1.bf16.xpose.msra.mxu0 0
    %1233 = vmatprep.subr.bf16.mxu0 0
    %1234 = vmatpush1.bf16.xpose.msra.mxu0 0
    %1235 = vmatprep.subr.bf16.mxu0 0
    %1236 = vmatpush1.bf16.xpose.msra.mxu0 0
    %1237 = vmatprep.subr.bf16.mxu0 0
    %1238 = vmatpush1.bf16.xpose.msra.mxu0 %v1227
    %1239 = vmatprep.subr.bf16.mxu0 0
    %1240 = vmatpush1.bf16.xpose.msra.mxu0 %v1224
    %1241 = vmatprep.subr.bf16.mxu0 0
    %1242 = vmatpush1.bf16.xpose.msra.mxu0 %v1221
    %1243 = vmatprep.subr.bf16.mxu0 0
    %1244 = vmatpush1.bf16.xpose.msra.mxu0 %v1218
    %1245 = vmatprep.subr.bf16.mxu0 0
    %1246 = vmatpush2.bf16.xpose.msra.mxu0 0
    %1247 = vmatprep.subr.bf16.mxu0 0
    %1248 = vmatpush2.bf16.xpose.msra.mxu0 0
    %1249 = vmatprep.subr.bf16.mxu0 0
    %1250 = vmatpush2.bf16.xpose.msra.mxu0 0
    %1251 = vmatprep.subr.bf16.mxu0 0
    %1252 = vmatpush2.bf16.xpose.msra.mxu0 0
    %1253 = vmatprep.subr.bf16.mxu0 0
    %1254 = vmatpush2.bf16.xpose.msra.mxu0 0
    %1255 = vmatprep.subr.bf16.mxu0 0
    %1256 = vmatpush2.bf16.xpose.msra.mxu0 0
    %1257 = vmatprep.subr.bf16.mxu0 0
    %1258 = vmatpush2.bf16.xpose.msra.mxu0 0
    %1259 = vmatprep.subr.bf16.mxu0 0
    %1260 = vmatpush2.bf16.xpose.msra.mxu0 0
    %1261 = vmatprep.mubr.bf16.mxu0 0
    %1262 = vmatmul.mubr.bf16.gmra.mxu0 %v1206
    %v1263 = vpop.f32.mrf.mxu0
    %v1264 = vadd.f32 0.0, %v1263
    %v1265 = vpop.f32.mrf.mxu0
    %v1266 = vpop.f32.mrf.mxu0
    %v1267 = vadd.f32 0.0, %v1266
    %v1268 = vpop.f32.mrf.mxu0
    %1269 = vmatprep.mubr.bf16.mxu0 0
    %1270 = vmatmul.mubr.bf16.gmra.mxu0 %v1209
    %v1271 = vpop.f32.mrf.mxu0
    %v1272 = vadd.f32 0.0, %v1271
    %v1273 = vpop.f32.mrf.mxu0
    %v1274 = vpop.f32.mrf.mxu0
    %v1275 = vadd.f32 0.0, %v1274
    %v1276 = vpop.f32.mrf.mxu0
    %1277 = vmatprep.mubr.bf16.mxu0 0
    %1278 = vmatmul.mubr.bf16.gmra.mxu0 %v1212
    %v1279 = vpop.f32.mrf.mxu0
    %v1280 = vadd.f32 0.0, %v1279
    %v1281 = vpop.f32.mrf.mxu0
    %v1282 = vpop.f32.mrf.mxu0
    %v1283 = vadd.f32 0.0, %v1282
    %v1284 = vpop.f32.mrf.mxu0
    %1285 = vmatprep.mubr.bf16.mxu0 0
    %1286 = vmatmul.mubr.bf16.gmra.mxu0 %v1215
    %v1287 = vpop.f32.mrf.mxu0
    %v1288 = vadd.f32 0.0, %v1287
    %v1289 = vpop.f32.mrf.mxu0
    %v1290 = vpop.f32.mrf.mxu0
    %v1291 = vadd.f32 0.0, %v1290
    %v1292 = vpop.f32.mrf.mxu0
    %1293 = vdwg.mxu0
    %1298 = vrot.lane.b32.xlu0 %v873, 64
    %v1299 = vpop.permute.xlu0 %1298
    %1300 = vrot.lane.b32.xlu0 %v874, 64
    %v1301 = vpop.permute.xlu0 %1300
    %1302 = vrot.lane.b32.xlu0 %v875, 64
    %v1303 = vpop.permute.xlu0 %1302
    %1304 = vrot.lane.b32.xlu0 %v876, 64
    %v1305 = vpop.permute.xlu0 %1304
    %v1307 = vsel %vm901, %v873, 0
    %v1310 = vsel %vm901, %v874, 0
    %v1313 = vsel %vm901, %v875, 0
    %v1316 = vsel %vm901, %v876, 0
    %v1319 = vsel %vm901, %v1299, 0
    %v1322 = vsel %vm901, %v1301, 0
    %v1325 = vsel %vm901, %v1303, 0
    %v1328 = vsel %vm901, %v1305, 0
    %1330 = vmatprep.subr.bf16.mxu0 0
    %1331 = vmatpush1.bf16.xpose.msra.mxu0 0
    %1332 = vmatprep.subr.bf16.mxu0 0
    %1333 = vmatpush1.bf16.xpose.msra.mxu0 0
    %1334 = vmatprep.subr.bf16.mxu0 0
    %1335 = vmatpush1.bf16.xpose.msra.mxu0 0
    %1336 = vmatprep.subr.bf16.mxu0 0
    %1337 = vmatpush1.bf16.xpose.msra.mxu0 0
    %1338 = vmatprep.subr.bf16.mxu0 0
    %1339 = vmatpush1.bf16.xpose.msra.mxu0 %v1328
    %1340 = vmatprep.subr.bf16.mxu0 0
    %1341 = vmatpush1.bf16.xpose.msra.mxu0 %v1325
    %1342 = vmatprep.subr.bf16.mxu0 0
    %1343 = vmatpush1.bf16.xpose.msra.mxu0 %v1322
    %1344 = vmatprep.subr.bf16.mxu0 0
    %1345 = vmatpush1.bf16.xpose.msra.mxu0 %v1319
    %1346 = vmatprep.subr.bf16.mxu0 0
    %1347 = vmatpush2.bf16.xpose.msra.mxu0 0
    %1348 = vmatprep.subr.bf16.mxu0 0
    %1349 = vmatpush2.bf16.xpose.msra.mxu0 0
    %1350 = vmatprep.subr.bf16.mxu0 0
    %1351 = vmatpush2.bf16.xpose.msra.mxu0 0
    %1352 = vmatprep.subr.bf16.mxu0 0
    %1353 = vmatpush2.bf16.xpose.msra.mxu0 0
    %1354 = vmatprep.subr.bf16.mxu0 0
    %1355 = vmatpush2.bf16.xpose.msra.mxu0 0
    %1356 = vmatprep.subr.bf16.mxu0 0
    %1357 = vmatpush2.bf16.xpose.msra.mxu0 0
    %1358 = vmatprep.subr.bf16.mxu0 0
    %1359 = vmatpush2.bf16.xpose.msra.mxu0 0
    %1360 = vmatprep.subr.bf16.mxu0 0
    %1361 = vmatpush2.bf16.xpose.msra.mxu0 0
    %1362 = vmatprep.mubr.bf16.mxu0 0
    %1363 = vmatmul.mubr.bf16.gmra.mxu0 %v1307
    %v1364 = vpop.f32.mrf.mxu0
    %v1365 = vadd.f32 0.0, %v1364
    %v1366 = vpop.f32.mrf.mxu0
    %v1367 = vpop.f32.mrf.mxu0
    %v1368 = vadd.f32 0.0, %v1367
    %v1369 = vpop.f32.mrf.mxu0
    %1370 = vmatprep.mubr.bf16.mxu0 0
    %1371 = vmatmul.mubr.bf16.gmra.mxu0 %v1310
    %v1372 = vpop.f32.mrf.mxu0
    %v1373 = vadd.f32 0.0, %v1372
    %v1374 = vpop.f32.mrf.mxu0
    %v1375 = vpop.f32.mrf.mxu0
    %v1376 = vadd.f32 0.0, %v1375
    %v1377 = vpop.f32.mrf.mxu0
    %1378 = vmatprep.mubr.bf16.mxu0 0
    %1379 = vmatmul.mubr.bf16.gmra.mxu0 %v1313
    %v1380 = vpop.f32.mrf.mxu0
    %v1381 = vadd.f32 0.0, %v1380
    %v1382 = vpop.f32.mrf.mxu0
    %v1383 = vpop.f32.mrf.mxu0
    %v1384 = vadd.f32 0.0, %v1383
    %v1385 = vpop.f32.mrf.mxu0
    %1386 = vmatprep.mubr.bf16.mxu0 0
    %1387 = vmatmul.mubr.bf16.gmra.mxu0 %v1316
    %v1388 = vpop.f32.mrf.mxu0
    %v1389 = vadd.f32 0.0, %v1388
    %v1390 = vpop.f32.mrf.mxu0
    %v1391 = vpop.f32.mrf.mxu0
    %v1392 = vadd.f32 0.0, %v1391
    %v1393 = vpop.f32.mrf.mxu0
    %1394 = vdwg.mxu0
    %1399 = vrot.lane.b32.xlu0 %v877, 64
    %v1400 = vpop.permute.xlu0 %1399
    %1401 = vrot.lane.b32.xlu0 %v878, 64
    %v1402 = vpop.permute.xlu0 %1401
    %1403 = vrot.lane.b32.xlu0 %v879, 64
    %v1404 = vpop.permute.xlu0 %1403
    %1405 = vrot.lane.b32.xlu0 %v880, 64
    %v1406 = vpop.permute.xlu0 %1405
    %v1408 = vsel %vm901, %v877, 0
    %v1411 = vsel %vm901, %v878, 0
    %v1414 = vsel %vm901, %v879, 0
    %v1417 = vsel %vm901, %v880, 0
    %v1420 = vsel %vm901, %v1400, 0
    %v1423 = vsel %vm901, %v1402, 0
    %v1426 = vsel %vm901, %v1404, 0
    %v1429 = vsel %vm901, %v1406, 0
    %1431 = vmatprep.subr.bf16.mxu0 0
    %1432 = vmatpush1.bf16.xpose.msra.mxu0 0
    %1433 = vmatprep.subr.bf16.mxu0 0
    %1434 = vmatpush1.bf16.xpose.msra.mxu0 0
    %1435 = vmatprep.subr.bf16.mxu0 0
    %1436 = vmatpush1.bf16.xpose.msra.mxu0 0
    %1437 = vmatprep.subr.bf16.mxu0 0
    %1438 = vmatpush1.bf16.xpose.msra.mxu0 0
    %1439 = vmatprep.subr.bf16.mxu0 0
    %1440 = vmatpush1.bf16.xpose.msra.mxu0 %v1429
    %1441 = vmatprep.subr.bf16.mxu0 0
    %1442 = vmatpush1.bf16.xpose.msra.mxu0 %v1426
    %1443 = vmatprep.subr.bf16.mxu0 0
    %1444 = vmatpush1.bf16.xpose.msra.mxu0 %v1423
    %1445 = vmatprep.subr.bf16.mxu0 0
    %1446 = vmatpush1.bf16.xpose.msra.mxu0 %v1420
    %1447 = vmatprep.subr.bf16.mxu0 0
    %1448 = vmatpush2.bf16.xpose.msra.mxu0 0
    %1449 = vmatprep.subr.bf16.mxu0 0
    %1450 = vmatpush2.bf16.xpose.msra.mxu0 0
    %1451 = vmatprep.subr.bf16.mxu0 0
    %1452 = vmatpush2.bf16.xpose.msra.mxu0 0
    %1453 = vmatprep.subr.bf16.mxu0 0
    %1454 = vmatpush2.bf16.xpose.msra.mxu0 0
    %1455 = vmatprep.subr.bf16.mxu0 0
    %1456 = vmatpush2.bf16.xpose.msra.mxu0 0
    %1457 = vmatprep.subr.bf16.mxu0 0
    %1458 = vmatpush2.bf16.xpose.msra.mxu0 0
    %1459 = vmatprep.subr.bf16.mxu0 0
    %1460 = vmatpush2.bf16.xpose.msra.mxu0 0
    %1461 = vmatprep.subr.bf16.mxu0 0
    %1462 = vmatpush2.bf16.xpose.msra.mxu0 0
    %1463 = vmatprep.mubr.bf16.mxu0 0
    %1464 = vmatmul.mubr.bf16.gmra.mxu0 %v1408
    %v1465 = vpop.f32.mrf.mxu0
    %v1466 = vadd.f32 0.0, %v1465
    %v1467 = vpop.f32.mrf.mxu0
    %v1468 = vpop.f32.mrf.mxu0
    %v1469 = vadd.f32 0.0, %v1468
    %v1470 = vpop.f32.mrf.mxu0
    %1471 = vmatprep.mubr.bf16.mxu0 0
    %1472 = vmatmul.mubr.bf16.gmra.mxu0 %v1411
    %v1473 = vpop.f32.mrf.mxu0
    %v1474 = vadd.f32 0.0, %v1473
    %v1475 = vpop.f32.mrf.mxu0
    %v1476 = vpop.f32.mrf.mxu0
    %v1477 = vadd.f32 0.0, %v1476
    %v1478 = vpop.f32.mrf.mxu0
    %1479 = vmatprep.mubr.bf16.mxu0 0
    %1480 = vmatmul.mubr.bf16.gmra.mxu0 %v1414
    %v1481 = vpop.f32.mrf.mxu0
    %v1482 = vadd.f32 0.0, %v1481
    %v1483 = vpop.f32.mrf.mxu0
    %v1484 = vpop.f32.mrf.mxu0
    %v1485 = vadd.f32 0.0, %v1484
    %v1486 = vpop.f32.mrf.mxu0
    %1487 = vmatprep.mubr.bf16.mxu0 0
    %1488 = vmatmul.mubr.bf16.gmra.mxu0 %v1417
    %v1489 = vpop.f32.mrf.mxu0
    %v1490 = vadd.f32 0.0, %v1489
    %v1491 = vpop.f32.mrf.mxu0
    %v1492 = vpop.f32.mrf.mxu0
    %v1493 = vadd.f32 0.0, %v1492
    %v1494 = vpop.f32.mrf.mxu0
    %1495 = vdwg.mxu0
    %1500 = vrot.lane.b32.xlu0 %v881, 64
    %v1501 = vpop.permute.xlu0 %1500
    %1502 = vrot.lane.b32.xlu0 %v882, 64
    %v1503 = vpop.permute.xlu0 %1502
    %1504 = vrot.lane.b32.xlu0 %v883, 64
    %v1505 = vpop.permute.xlu0 %1504
    %1506 = vrot.lane.b32.xlu0 %v884, 64
    %v1507 = vpop.permute.xlu0 %1506
    %v1509 = vsel %vm901, %v881, 0
    %v1512 = vsel %vm901, %v882, 0
    %v1515 = vsel %vm901, %v883, 0
    %v1518 = vsel %vm901, %v884, 0
    %v1521 = vsel %vm901, %v1501, 0
    %v1524 = vsel %vm901, %v1503, 0
    %v1527 = vsel %vm901, %v1505, 0
    %v1530 = vsel %vm901, %v1507, 0
    %1532 = vmatprep.subr.bf16.mxu0 0
    %1533 = vmatpush1.bf16.xpose.msra.mxu0 0
    %1534 = vmatprep.subr.bf16.mxu0 0
    %1535 = vmatpush1.bf16.xpose.msra.mxu0 0
    %1536 = vmatprep.subr.bf16.mxu0 0
    %1537 = vmatpush1.bf16.xpose.msra.mxu0 0
    %1538 = vmatprep.subr.bf16.mxu0 0
    %1539 = vmatpush1.bf16.xpose.msra.mxu0 0
    %1540 = vmatprep.subr.bf16.mxu0 0
    %1541 = vmatpush1.bf16.xpose.msra.mxu0 %v1530
    %1542 = vmatprep.subr.bf16.mxu0 0
    %1543 = vmatpush1.bf16.xpose.msra.mxu0 %v1527
    %1544 = vmatprep.subr.bf16.mxu0 0
    %1545 = vmatpush1.bf16.xpose.msra.mxu0 %v1524
    %1546 = vmatprep.subr.bf16.mxu0 0
    %1547 = vmatpush1.bf16.xpose.msra.mxu0 %v1521
    %1548 = vmatprep.subr.bf16.mxu0 0
    %1549 = vmatpush2.bf16.xpose.msra.mxu0 0
    %1550 = vmatprep.subr.bf16.mxu0 0
    %1551 = vmatpush2.bf16.xpose.msra.mxu0 0
    %1552 = vmatprep.subr.bf16.mxu0 0
    %1553 = vmatpush2.bf16.xpose.msra.mxu0 0
    %1554 = vmatprep.subr.bf16.mxu0 0
    %1555 = vmatpush2.bf16.xpose.msra.mxu0 0
    %1556 = vmatprep.subr.bf16.mxu0 0
    %1557 = vmatpush2.bf16.xpose.msra.mxu0 0
    %1558 = vmatprep.subr.bf16.mxu0 0
    %1559 = vmatpush2.bf16.xpose.msra.mxu0 0
    %1560 = vmatprep.subr.bf16.mxu0 0
    %1561 = vmatpush2.bf16.xpose.msra.mxu0 0
    %1562 = vmatprep.subr.bf16.mxu0 0
    %1563 = vmatpush2.bf16.xpose.msra.mxu0 0
    %1564 = vmatprep.mubr.bf16.mxu0 0
    %1565 = vmatmul.mubr.bf16.gmra.mxu0 %v1509
    %v1566 = vpop.f32.mrf.mxu0
    %v1567 = vadd.f32 0.0, %v1566
    %v1568 = vpop.f32.mrf.mxu0
    %v1569 = vpop.f32.mrf.mxu0
    %v1570 = vadd.f32 0.0, %v1569
    %v1571 = vpop.f32.mrf.mxu0
    %1572 = vmatprep.mubr.bf16.mxu0 0
    %1573 = vmatmul.mubr.bf16.gmra.mxu0 %v1512
    %v1574 = vpop.f32.mrf.mxu0
    %v1575 = vadd.f32 0.0, %v1574
    %v1576 = vpop.f32.mrf.mxu0
    %v1577 = vpop.f32.mrf.mxu0
    %v1578 = vadd.f32 0.0, %v1577
    %v1579 = vpop.f32.mrf.mxu0
    %1580 = vmatprep.mubr.bf16.mxu0 0
    %1581 = vmatmul.mubr.bf16.gmra.mxu0 %v1515
    %v1582 = vpop.f32.mrf.mxu0
    %v1583 = vadd.f32 0.0, %v1582
    %v1584 = vpop.f32.mrf.mxu0
    %v1585 = vpop.f32.mrf.mxu0
    %v1586 = vadd.f32 0.0, %v1585
    %v1587 = vpop.f32.mrf.mxu0
    %1588 = vmatprep.mubr.bf16.mxu0 0
    %1589 = vmatmul.mubr.bf16.gmra.mxu0 %v1518
    %v1590 = vpop.f32.mrf.mxu0
    %v1591 = vadd.f32 0.0, %v1590
    %v1592 = vpop.f32.mrf.mxu0
    %v1593 = vpop.f32.mrf.mxu0
    %v1594 = vadd.f32 0.0, %v1593
    %v1595 = vpop.f32.mrf.mxu0
    %1596 = vdwg.mxu0
    %1601 = vrot.lane.b32.xlu0 %v885, 64
    %v1602 = vpop.permute.xlu0 %1601
    %1603 = vrot.lane.b32.xlu0 %v886, 64
    %v1604 = vpop.permute.xlu0 %1603
    %1605 = vrot.lane.b32.xlu0 %v887, 64
    %v1606 = vpop.permute.xlu0 %1605
    %1607 = vrot.lane.b32.xlu0 %v888, 64
    %v1608 = vpop.permute.xlu0 %1607
    %v1610 = vsel %vm901, %v885, 0
    %v1613 = vsel %vm901, %v886, 0
    %v1616 = vsel %vm901, %v887, 0
    %v1619 = vsel %vm901, %v888, 0
    %v1622 = vsel %vm901, %v1602, 0
    %v1625 = vsel %vm901, %v1604, 0
    %v1628 = vsel %vm901, %v1606, 0
    %v1631 = vsel %vm901, %v1608, 0
    %1633 = vmatprep.subr.bf16.mxu0 0
    %1634 = vmatpush1.bf16.xpose.msra.mxu0 0
    %1635 = vmatprep.subr.bf16.mxu0 0
    %1636 = vmatpush1.bf16.xpose.msra.mxu0 0
    %1637 = vmatprep.subr.bf16.mxu0 0
    %1638 = vmatpush1.bf16.xpose.msra.mxu0 0
    %1639 = vmatprep.subr.bf16.mxu0 0
    %1640 = vmatpush1.bf16.xpose.msra.mxu0 0
    %1641 = vmatprep.subr.bf16.mxu0 0
    %1642 = vmatpush1.bf16.xpose.msra.mxu0 %v1631
    %1643 = vmatprep.subr.bf16.mxu0 0
    %1644 = vmatpush1.bf16.xpose.msra.mxu0 %v1628
    %1645 = vmatprep.subr.bf16.mxu0 0
    %1646 = vmatpush1.bf16.xpose.msra.mxu0 %v1625
    %1647 = vmatprep.subr.bf16.mxu0 0
    %1648 = vmatpush1.bf16.xpose.msra.mxu0 %v1622
    %1649 = vmatprep.subr.bf16.mxu0 0
    %1650 = vmatpush2.bf16.xpose.msra.mxu0 0
    %1651 = vmatprep.subr.bf16.mxu0 0
    %1652 = vmatpush2.bf16.xpose.msra.mxu0 0
    %1653 = vmatprep.subr.bf16.mxu0 0
    %1654 = vmatpush2.bf16.xpose.msra.mxu0 0
    %1655 = vmatprep.subr.bf16.mxu0 0
    %1656 = vmatpush2.bf16.xpose.msra.mxu0 0
    %1657 = vmatprep.subr.bf16.mxu0 0
    %1658 = vmatpush2.bf16.xpose.msra.mxu0 0
    %1659 = vmatprep.subr.bf16.mxu0 0
    %1660 = vmatpush2.bf16.xpose.msra.mxu0 0
    %1661 = vmatprep.subr.bf16.mxu0 0
    %1662 = vmatpush2.bf16.xpose.msra.mxu0 0
    %1663 = vmatprep.subr.bf16.mxu0 0
    %1664 = vmatpush2.bf16.xpose.msra.mxu0 0
    %1665 = vmatprep.mubr.bf16.mxu0 0
    %1666 = vmatmul.mubr.bf16.gmra.mxu0 %v1610
    %v1667 = vpop.f32.mrf.mxu0
    %v1668 = vadd.f32 0.0, %v1667
    %v1669 = vpop.f32.mrf.mxu0
    %v1670 = vpop.f32.mrf.mxu0
    %v1671 = vadd.f32 0.0, %v1670
    %v1672 = vpop.f32.mrf.mxu0
    %1673 = vmatprep.mubr.bf16.mxu0 0
    %1674 = vmatmul.mubr.bf16.gmra.mxu0 %v1613
    %v1675 = vpop.f32.mrf.mxu0
    %v1676 = vadd.f32 0.0, %v1675
    %v1677 = vpop.f32.mrf.mxu0
    %v1678 = vpop.f32.mrf.mxu0
    %v1679 = vadd.f32 0.0, %v1678
    %v1680 = vpop.f32.mrf.mxu0
    %1681 = vmatprep.mubr.bf16.mxu0 0
    %1682 = vmatmul.mubr.bf16.gmra.mxu0 %v1616
    %v1683 = vpop.f32.mrf.mxu0
    %v1684 = vadd.f32 0.0, %v1683
    %v1685 = vpop.f32.mrf.mxu0
    %v1686 = vpop.f32.mrf.mxu0
    %v1687 = vadd.f32 0.0, %v1686
    %v1688 = vpop.f32.mrf.mxu0
    %1689 = vmatprep.mubr.bf16.mxu0 0
    %1690 = vmatmul.mubr.bf16.gmra.mxu0 %v1619
    %v1691 = vpop.f32.mrf.mxu0
    %v1692 = vadd.f32 0.0, %v1691
    %v1693 = vpop.f32.mrf.mxu0
    %v1694 = vpop.f32.mrf.mxu0
    %v1695 = vadd.f32 0.0, %v1694
    %v1696 = vpop.f32.mrf.mxu0
    %1697 = vdwg.mxu0
    %v1698 = vsel %vm44, %v961, -inf
    %1699 = vmax.xlane.f32.xlu0 %v1698
    %v1700 = vpop.xlane.xlu0 %1699
    %v1701 = vsel %vm44, %v964, -inf
    %1702 = vmax.xlane.f32.xlu0 %v1701
    %v1703 = vpop.xlane.xlu0 %1702
    %v1704 = vsel %vm44, %v969, -inf
    %1705 = vmax.xlane.f32.xlu0 %v1704
    %v1706 = vpop.xlane.xlu0 %1705
    %v1707 = vsel %vm44, %v972, -inf
    %1708 = vmax.xlane.f32.xlu0 %v1707
    %v1709 = vpop.xlane.xlu0 %1708
    %v1710 = vsel %vm44, %v977, -inf
    %1711 = vmax.xlane.f32.xlu0 %v1710
    %v1712 = vpop.xlane.xlu0 %1711
    %v1713 = vsel %vm44, %v980, -inf
    %1714 = vmax.xlane.f32.xlu0 %v1713
    %v1715 = vpop.xlane.xlu0 %1714
    %v1716 = vsel %vm44, %v985, -inf
    %1717 = vmax.xlane.f32.xlu0 %v1716
    %v1718 = vpop.xlane.xlu0 %1717
    %v1719 = vsel %vm44, %v988, -inf
    %1720 = vmax.xlane.f32.xlu0 %v1719
    %v1721 = vpop.xlane.xlu0 %1720
    %v1722 = vsel %vm44, %v1062, -inf
    %1723 = vmax.xlane.f32.xlu0 %v1722
    %v1724 = vpop.xlane.xlu0 %1723
    %v1725 = vsel %vm44, %v1065, -inf
    %1726 = vmax.xlane.f32.xlu0 %v1725
    %v1727 = vpop.xlane.xlu0 %1726
    %v1728 = vsel %vm44, %v1070, -inf
    %1729 = vmax.xlane.f32.xlu0 %v1728
    %v1730 = vpop.xlane.xlu0 %1729
    %v1731 = vsel %vm44, %v1073, -inf
    %1732 = vmax.xlane.f32.xlu0 %v1731
    %v1733 = vpop.xlane.xlu0 %1732
    %v1734 = vsel %vm44, %v1078, -inf
    %1735 = vmax.xlane.f32.xlu0 %v1734
    %v1736 = vpop.xlane.xlu0 %1735
    %v1737 = vsel %vm44, %v1081, -inf
    %1738 = vmax.xlane.f32.xlu0 %v1737
    %v1739 = vpop.xlane.xlu0 %1738
    %v1740 = vsel %vm44, %v1086, -inf
    %1741 = vmax.xlane.f32.xlu0 %v1740
    %v1742 = vpop.xlane.xlu0 %1741
    %v1743 = vsel %vm44, %v1089, -inf
    %1744 = vmax.xlane.f32.xlu0 %v1743
    %v1745 = vpop.xlane.xlu0 %1744
    %v1746 = vsel %vm44, %v1163, -inf
    %1747 = vmax.xlane.f32.xlu0 %v1746
    %v1748 = vpop.xlane.xlu0 %1747
    %v1749 = vsel %vm44, %v1166, -inf
    %1750 = vmax.xlane.f32.xlu0 %v1749
    %v1751 = vpop.xlane.xlu0 %1750
    %v1752 = vsel %vm44, %v1171, -inf
    %1753 = vmax.xlane.f32.xlu0 %v1752
    %v1754 = vpop.xlane.xlu0 %1753
    %v1755 = vsel %vm44, %v1174, -inf
    %1756 = vmax.xlane.f32.xlu0 %v1755
    %v1757 = vpop.xlane.xlu0 %1756
    %v1758 = vsel %vm44, %v1179, -inf
    %1759 = vmax.xlane.f32.xlu0 %v1758
    %v1760 = vpop.xlane.xlu0 %1759
    %v1761 = vsel %vm44, %v1182, -inf
    %1762 = vmax.xlane.f32.xlu0 %v1761
    %v1763 = vpop.xlane.xlu0 %1762
    %v1764 = vsel %vm44, %v1187, -inf
    %1765 = vmax.xlane.f32.xlu0 %v1764
    %v1766 = vpop.xlane.xlu0 %1765
    %v1767 = vsel %vm44, %v1190, -inf
    %1768 = vmax.xlane.f32.xlu0 %v1767
    %v1769 = vpop.xlane.xlu0 %1768
    %v1770 = vsel %vm44, %v1264, -inf
    %1771 = vmax.xlane.f32.xlu0 %v1770
    %v1772 = vpop.xlane.xlu0 %1771
    %v1773 = vsel %vm44, %v1267, -inf
    %1774 = vmax.xlane.f32.xlu0 %v1773
    %v1775 = vpop.xlane.xlu0 %1774
    %v1776 = vsel %vm44, %v1272, -inf
    %1777 = vmax.xlane.f32.xlu0 %v1776
    %v1778 = vpop.xlane.xlu0 %1777
    %v1779 = vsel %vm44, %v1275, -inf
    %1780 = vmax.xlane.f32.xlu0 %v1779
    %v1781 = vpop.xlane.xlu0 %1780
    %v1782 = vsel %vm44, %v1280, -inf
    %1783 = vmax.xlane.f32.xlu0 %v1782
    %v1784 = vpop.xlane.xlu0 %1783
    %v1785 = vsel %vm44, %v1283, -inf
    %1786 = vmax.xlane.f32.xlu0 %v1785
    %v1787 = vpop.xlane.xlu0 %1786
    %v1788 = vsel %vm44, %v1288, -inf
    %1789 = vmax.xlane.f32.xlu0 %v1788
    %v1790 = vpop.xlane.xlu0 %1789
    %v1791 = vsel %vm44, %v1291, -inf
    %1792 = vmax.xlane.f32.xlu0 %v1791
    %v1793 = vpop.xlane.xlu0 %1792
    %v1794 = vsel %vm44, %v1365, -inf
    %1795 = vmax.xlane.f32.xlu0 %v1794
    %v1796 = vpop.xlane.xlu0 %1795
    %v1797 = vsel %vm44, %v1368, -inf
    %1798 = vmax.xlane.f32.xlu0 %v1797
    %v1799 = vpop.xlane.xlu0 %1798
    %v1800 = vsel %vm44, %v1373, -inf
    %1801 = vmax.xlane.f32.xlu0 %v1800
    %v1802 = vpop.xlane.xlu0 %1801
    %v1803 = vsel %vm44, %v1376, -inf
    %1804 = vmax.xlane.f32.xlu0 %v1803
    %v1805 = vpop.xlane.xlu0 %1804
    %v1806 = vsel %vm44, %v1381, -inf
    %1807 = vmax.xlane.f32.xlu0 %v1806
    %v1808 = vpop.xlane.xlu0 %1807
    %v1809 = vsel %vm44, %v1384, -inf
    %1810 = vmax.xlane.f32.xlu0 %v1809
    %v1811 = vpop.xlane.xlu0 %1810
    %v1812 = vsel %vm44, %v1389, -inf
    %1813 = vmax.xlane.f32.xlu0 %v1812
    %v1814 = vpop.xlane.xlu0 %1813
    %v1815 = vsel %vm44, %v1392, -inf
    %1816 = vmax.xlane.f32.xlu0 %v1815
    %v1817 = vpop.xlane.xlu0 %1816
    %v1818 = vsel %vm44, %v1466, -inf
    %1819 = vmax.xlane.f32.xlu0 %v1818
    %v1820 = vpop.xlane.xlu0 %1819
    %v1821 = vsel %vm44, %v1469, -inf
    %1822 = vmax.xlane.f32.xlu0 %v1821
    %v1823 = vpop.xlane.xlu0 %1822
    %v1824 = vsel %vm44, %v1474, -inf
    %1825 = vmax.xlane.f32.xlu0 %v1824
    %v1826 = vpop.xlane.xlu0 %1825
    %v1827 = vsel %vm44, %v1477, -inf
    %1828 = vmax.xlane.f32.xlu0 %v1827
    %v1829 = vpop.xlane.xlu0 %1828
    %v1830 = vsel %vm44, %v1482, -inf
    %1831 = vmax.xlane.f32.xlu0 %v1830
    %v1832 = vpop.xlane.xlu0 %1831
    %v1833 = vsel %vm44, %v1485, -inf
    %1834 = vmax.xlane.f32.xlu0 %v1833
    %v1835 = vpop.xlane.xlu0 %1834
    %v1836 = vsel %vm44, %v1490, -inf
    %1837 = vmax.xlane.f32.xlu0 %v1836
    %v1838 = vpop.xlane.xlu0 %1837
    %v1839 = vsel %vm44, %v1493, -inf
    %1840 = vmax.xlane.f32.xlu0 %v1839
    %v1841 = vpop.xlane.xlu0 %1840
    %v1842 = vsel %vm44, %v1567, -inf
    %1843 = vmax.xlane.f32.xlu0 %v1842
    %v1844 = vpop.xlane.xlu0 %1843
    %v1845 = vsel %vm44, %v1570, -inf
    %1846 = vmax.xlane.f32.xlu0 %v1845
    %v1847 = vpop.xlane.xlu0 %1846
    %v1848 = vsel %vm44, %v1575, -inf
    %1849 = vmax.xlane.f32.xlu0 %v1848
    %v1850 = vpop.xlane.xlu0 %1849
    %v1851 = vsel %vm44, %v1578, -inf
    %1852 = vmax.xlane.f32.xlu0 %v1851
    %v1853 = vpop.xlane.xlu0 %1852
    %v1854 = vsel %vm44, %v1583, -inf
    %1855 = vmax.xlane.f32.xlu0 %v1854
    %v1856 = vpop.xlane.xlu0 %1855
    %v1857 = vsel %vm44, %v1586, -inf
    %1858 = vmax.xlane.f32.xlu0 %v1857
    %v1859 = vpop.xlane.xlu0 %1858
    %v1860 = vsel %vm44, %v1591, -inf
    %1861 = vmax.xlane.f32.xlu0 %v1860
    %v1862 = vpop.xlane.xlu0 %1861
    %v1863 = vsel %vm44, %v1594, -inf
    %1864 = vmax.xlane.f32.xlu0 %v1863
    %v1865 = vpop.xlane.xlu0 %1864
    %v1866 = vsel %vm44, %v1668, -inf
    %1867 = vmax.xlane.f32.xlu0 %v1866
    %v1868 = vpop.xlane.xlu0 %1867
    %v1869 = vsel %vm44, %v1671, -inf
    %1870 = vmax.xlane.f32.xlu0 %v1869
    %v1871 = vpop.xlane.xlu0 %1870
    %v1872 = vsel %vm44, %v1676, -inf
    %1873 = vmax.xlane.f32.xlu0 %v1872
    %v1874 = vpop.xlane.xlu0 %1873
    %v1875 = vsel %vm44, %v1679, -inf
    %1876 = vmax.xlane.f32.xlu0 %v1875
    %v1877 = vpop.xlane.xlu0 %1876
    %v1878 = vsel %vm44, %v1684, -inf
    %1879 = vmax.xlane.f32.xlu0 %v1878
    %v1880 = vpop.xlane.xlu0 %1879
    %v1881 = vsel %vm44, %v1687, -inf
    %1882 = vmax.xlane.f32.xlu0 %v1881
    %v1883 = vpop.xlane.xlu0 %1882
    %v1884 = vsel %vm44, %v1692, -inf
    %1885 = vmax.xlane.f32.xlu0 %v1884
    %v1886 = vpop.xlane.xlu0 %1885
    %v1887 = vsel %vm44, %v1695, -inf
    %1888 = vmax.xlane.f32.xlu0 %v1887
    %v1889 = vpop.xlane.xlu0 %1888
    %v1890 = vsub.f32 %v961, %v1700
    %v1891 = vsub.f32 %v964, %v1703
    %v1892 = vsub.f32 %v969, %v1706
    %v1893 = vsub.f32 %v972, %v1709
    %v1894 = vsub.f32 %v977, %v1712
    %v1895 = vsub.f32 %v980, %v1715
    %v1896 = vsub.f32 %v985, %v1718
    %v1897 = vsub.f32 %v988, %v1721
    %v1898 = vsub.f32 %v1062, %v1724
    %v1899 = vsub.f32 %v1065, %v1727
    %v1900 = vsub.f32 %v1070, %v1730
    %v1901 = vsub.f32 %v1073, %v1733
    %v1902 = vsub.f32 %v1078, %v1736
    %v1903 = vsub.f32 %v1081, %v1739
    %v1904 = vsub.f32 %v1086, %v1742
    %v1905 = vsub.f32 %v1089, %v1745
    %v1906 = vsub.f32 %v1163, %v1748
    %v1907 = vsub.f32 %v1166, %v1751
    %v1908 = vsub.f32 %v1171, %v1754
    %v1909 = vsub.f32 %v1174, %v1757
    %v1910 = vsub.f32 %v1179, %v1760
    %v1911 = vsub.f32 %v1182, %v1763
    %v1912 = vsub.f32 %v1187, %v1766
    %v1913 = vsub.f32 %v1190, %v1769
    %v1914 = vsub.f32 %v1264, %v1772
    %v1915 = vsub.f32 %v1267, %v1775
    %v1916 = vsub.f32 %v1272, %v1778
    %v1917 = vsub.f32 %v1275, %v1781
    %v1918 = vsub.f32 %v1280, %v1784
    %v1919 = vsub.f32 %v1283, %v1787
    %v1920 = vsub.f32 %v1288, %v1790
    %v1921 = vsub.f32 %v1291, %v1793
    %v1922 = vsub.f32 %v1365, %v1796
    %v1923 = vsub.f32 %v1368, %v1799
    %v1924 = vsub.f32 %v1373, %v1802
    %v1925 = vsub.f32 %v1376, %v1805
    %v1926 = vsub.f32 %v1381, %v1808
    %v1927 = vsub.f32 %v1384, %v1811
    %v1928 = vsub.f32 %v1389, %v1814
    %v1929 = vsub.f32 %v1392, %v1817
    %v1930 = vsub.f32 %v1466, %v1820
    %v1931 = vsub.f32 %v1469, %v1823
    %v1932 = vsub.f32 %v1474, %v1826
    %v1933 = vsub.f32 %v1477, %v1829
    %v1934 = vsub.f32 %v1482, %v1832
    %v1935 = vsub.f32 %v1485, %v1835
    %v1936 = vsub.f32 %v1490, %v1838
    %v1937 = vsub.f32 %v1493, %v1841
    %v1938 = vsub.f32 %v1567, %v1844
    %v1939 = vsub.f32 %v1570, %v1847
    %v1940 = vsub.f32 %v1575, %v1850
    %v1941 = vsub.f32 %v1578, %v1853
    %v1942 = vsub.f32 %v1583, %v1856
    %v1943 = vsub.f32 %v1586, %v1859
    %v1944 = vsub.f32 %v1591, %v1862
    %v1945 = vsub.f32 %v1594, %v1865
    %v1946 = vsub.f32 %v1668, %v1868
    %v1947 = vsub.f32 %v1671, %v1871
    %v1948 = vsub.f32 %v1676, %v1874
    %v1949 = vsub.f32 %v1679, %v1877
    %v1950 = vsub.f32 %v1684, %v1880
    %v1951 = vsub.f32 %v1687, %v1883
    %v1952 = vsub.f32 %v1692, %v1886
    %v1953 = vsub.f32 %v1695, %v1889
    %v1954 = vmul.f32 %v1890, 1.442695
    %v1955 = vpow.pop %v1954
    %v1956 = vmul.f32 %v1891, 1.442695
    %v1957 = vpow.pop %v1956
    %v1958 = vmul.f32 %v1892, 1.442695
    %v1959 = vpow.pop %v1958
    %v1960 = vmul.f32 %v1893, 1.442695
    %v1961 = vpow.pop %v1960
    %v1962 = vmul.f32 %v1894, 1.442695
    %v1963 = vpow.pop %v1962
    %v1964 = vmul.f32 %v1895, 1.442695
    %v1965 = vpow.pop %v1964
    %v1966 = vmul.f32 %v1896, 1.442695
    %v1967 = vpow.pop %v1966
    %v1968 = vmul.f32 %v1897, 1.442695
    %v1969 = vpow.pop %v1968
    %v1970 = vmul.f32 %v1898, 1.442695
    %v1971 = vpow.pop %v1970
    %v1972 = vmul.f32 %v1899, 1.442695
    %v1973 = vpow.pop %v1972
    %v1974 = vmul.f32 %v1900, 1.442695
    %v1975 = vpow.pop %v1974
    %v1976 = vmul.f32 %v1901, 1.442695
    %v1977 = vpow.pop %v1976
    %v1978 = vmul.f32 %v1902, 1.442695
    %v1979 = vpow.pop %v1978
    %v1980 = vmul.f32 %v1903, 1.442695
    %v1981 = vpow.pop %v1980
    %v1982 = vmul.f32 %v1904, 1.442695
    %v1983 = vpow.pop %v1982
    %v1984 = vmul.f32 %v1905, 1.442695
    %v1985 = vpow.pop %v1984
    %v1986 = vmul.f32 %v1906, 1.442695
    %v1987 = vpow.pop %v1986
    %v1988 = vmul.f32 %v1907, 1.442695
    %v1989 = vpow.pop %v1988
    %v1990 = vmul.f32 %v1908, 1.442695
    %v1991 = vpow.pop %v1990
    %v1992 = vmul.f32 %v1909, 1.442695
    %v1993 = vpow.pop %v1992
    %v1994 = vmul.f32 %v1910, 1.442695
    %v1995 = vpow.pop %v1994
    %v1996 = vmul.f32 %v1911, 1.442695
    %v1997 = vpow.pop %v1996
    %v1998 = vmul.f32 %v1912, 1.442695
    %v1999 = vpow.pop %v1998
    %v2000 = vmul.f32 %v1913, 1.442695
    %v2001 = vpow.pop %v2000
    %v2002 = vmul.f32 %v1914, 1.442695
    %v2003 = vpow.pop %v2002
    %v2004 = vmul.f32 %v1915, 1.442695
    %v2005 = vpow.pop %v2004
    %v2006 = vmul.f32 %v1916, 1.442695
    %v2007 = vpow.pop %v2006
    %v2008 = vmul.f32 %v1917, 1.442695
    %v2009 = vpow.pop %v2008
    %v2010 = vmul.f32 %v1918, 1.442695
    %v2011 = vpow.pop %v2010
    %v2012 = vmul.f32 %v1919, 1.442695
    %v2013 = vpow.pop %v2012
    %v2014 = vmul.f32 %v1920, 1.442695
    %v2015 = vpow.pop %v2014
    %v2016 = vmul.f32 %v1921, 1.442695
    %v2017 = vpow.pop %v2016
    %v2018 = vmul.f32 %v1922, 1.442695
    %v2019 = vpow.pop %v2018
    %v2020 = vmul.f32 %v1923, 1.442695
    %v2021 = vpow.pop %v2020
    %v2022 = vmul.f32 %v1924, 1.442695
    %v2023 = vpow.pop %v2022
    %v2024 = vmul.f32 %v1925, 1.442695
    %v2025 = vpow.pop %v2024
    %v2026 = vmul.f32 %v1926, 1.442695
    %v2027 = vpow.pop %v2026
    %v2028 = vmul.f32 %v1927, 1.442695
    %v2029 = vpow.pop %v2028
    %v2030 = vmul.f32 %v1928, 1.442695
    %v2031 = vpow.pop %v2030
    %v2032 = vmul.f32 %v1929, 1.442695
    %v2033 = vpow.pop %v2032
    %v2034 = vmul.f32 %v1930, 1.442695
    %v2035 = vpow.pop %v2034
    %v2036 = vmul.f32 %v1931, 1.442695
    %v2037 = vpow.pop %v2036
    %v2038 = vmul.f32 %v1932, 1.442695
    %v2039 = vpow.pop %v2038
    %v2040 = vmul.f32 %v1933, 1.442695
    %v2041 = vpow.pop %v2040
    %v2042 = vmul.f32 %v1934, 1.442695
    %v2043 = vpow.pop %v2042
    %v2044 = vmul.f32 %v1935, 1.442695
    %v2045 = vpow.pop %v2044
    %v2046 = vmul.f32 %v1936, 1.442695
    %v2047 = vpow.pop %v2046
    %v2048 = vmul.f32 %v1937, 1.442695
    %v2049 = vpow.pop %v2048
    %v2050 = vmul.f32 %v1938, 1.442695
    %v2051 = vpow.pop %v2050
    %v2052 = vmul.f32 %v1939, 1.442695
    %v2053 = vpow.pop %v2052
    %v2054 = vmul.f32 %v1940, 1.442695
    %v2055 = vpow.pop %v2054
    %v2056 = vmul.f32 %v1941, 1.442695
    %v2057 = vpow.pop %v2056
    %v2058 = vmul.f32 %v1942, 1.442695
    %v2059 = vpow.pop %v2058
    %v2060 = vmul.f32 %v1943, 1.442695
    %v2061 = vpow.pop %v2060
    %v2062 = vmul.f32 %v1944, 1.442695
    %v2063 = vpow.pop %v2062
    %v2064 = vmul.f32 %v1945, 1.442695
    %v2065 = vpow.pop %v2064
    %v2066 = vmul.f32 %v1946, 1.442695
    %v2067 = vpow.pop %v2066
    %v2068 = vmul.f32 %v1947, 1.442695
    %v2069 = vpow.pop %v2068
    %v2070 = vmul.f32 %v1948, 1.442695
    %v2071 = vpow.pop %v2070
    %v2072 = vmul.f32 %v1949, 1.442695
    %v2073 = vpow.pop %v2072
    %v2074 = vmul.f32 %v1950, 1.442695
    %v2075 = vpow.pop %v2074
    %v2076 = vmul.f32 %v1951, 1.442695
    %v2077 = vpow.pop %v2076
    %v2078 = vmul.f32 %v1952, 1.442695
    %v2079 = vpow.pop %v2078
    %v2080 = vmul.f32 %v1953, 1.442695
    %v2081 = vpow.pop %v2080
    %v2082 = vsel %vm44, %v1955, 0.0
    %2083 = vadd.xlane.f32.xlu0 %v2082
    %v2084 = vpop.xlane.xlu0 %2083
    %v2085 = vsel %vm44, %v1957, 0.0
    %2086 = vadd.xlane.f32.xlu0 %v2085
    %v2087 = vpop.xlane.xlu0 %2086
    %v2088 = vsel %vm44, %v1959, 0.0
    %2089 = vadd.xlane.f32.xlu0 %v2088
    %v2090 = vpop.xlane.xlu0 %2089
    %v2091 = vsel %vm44, %v1961, 0.0
    %2092 = vadd.xlane.f32.xlu0 %v2091
    %v2093 = vpop.xlane.xlu0 %2092
    %v2094 = vsel %vm44, %v1963, 0.0
    %2095 = vadd.xlane.f32.xlu0 %v2094
    %v2096 = vpop.xlane.xlu0 %2095
    %v2097 = vsel %vm44, %v1965, 0.0
    %2098 = vadd.xlane.f32.xlu0 %v2097
    %v2099 = vpop.xlane.xlu0 %2098
    %v2100 = vsel %vm44, %v1967, 0.0
    %2101 = vadd.xlane.f32.xlu0 %v2100
    %v2102 = vpop.xlane.xlu0 %2101
    %v2103 = vsel %vm44, %v1969, 0.0
    %2104 = vadd.xlane.f32.xlu0 %v2103
    %v2105 = vpop.xlane.xlu0 %2104
    %v2106 = vsel %vm44, %v1971, 0.0
    %2107 = vadd.xlane.f32.xlu0 %v2106
    %v2108 = vpop.xlane.xlu0 %2107
    %v2109 = vsel %vm44, %v1973, 0.0
    %2110 = vadd.xlane.f32.xlu0 %v2109
    %v2111 = vpop.xlane.xlu0 %2110
    %v2112 = vsel %vm44, %v1975, 0.0
    %2113 = vadd.xlane.f32.xlu0 %v2112
    %v2114 = vpop.xlane.xlu0 %2113
    %v2115 = vsel %vm44, %v1977, 0.0
    %2116 = vadd.xlane.f32.xlu0 %v2115
    %v2117 = vpop.xlane.xlu0 %2116
    %v2118 = vsel %vm44, %v1979, 0.0
    %2119 = vadd.xlane.f32.xlu0 %v2118
    %v2120 = vpop.xlane.xlu0 %2119
    %v2121 = vsel %vm44, %v1981, 0.0
    %2122 = vadd.xlane.f32.xlu0 %v2121
    %v2123 = vpop.xlane.xlu0 %2122
    %v2124 = vsel %vm44, %v1983, 0.0
    %2125 = vadd.xlane.f32.xlu0 %v2124
    %v2126 = vpop.xlane.xlu0 %2125
    %v2127 = vsel %vm44, %v1985, 0.0
    %2128 = vadd.xlane.f32.xlu0 %v2127
    %v2129 = vpop.xlane.xlu0 %2128
    %v2130 = vsel %vm44, %v1987, 0.0
    %2131 = vadd.xlane.f32.xlu0 %v2130
    %v2132 = vpop.xlane.xlu0 %2131
    %v2133 = vsel %vm44, %v1989, 0.0
    %2134 = vadd.xlane.f32.xlu0 %v2133
    %v2135 = vpop.xlane.xlu0 %2134
    %v2136 = vsel %vm44, %v1991, 0.0
    %2137 = vadd.xlane.f32.xlu0 %v2136
    %v2138 = vpop.xlane.xlu0 %2137
    %v2139 = vsel %vm44, %v1993, 0.0
    %2140 = vadd.xlane.f32.xlu0 %v2139
    %v2141 = vpop.xlane.xlu0 %2140
    %v2142 = vsel %vm44, %v1995, 0.0
    %2143 = vadd.xlane.f32.xlu0 %v2142
    %v2144 = vpop.xlane.xlu0 %2143
    %v2145 = vsel %vm44, %v1997, 0.0
    %2146 = vadd.xlane.f32.xlu0 %v2145
    %v2147 = vpop.xlane.xlu0 %2146
    %v2148 = vsel %vm44, %v1999, 0.0
    %2149 = vadd.xlane.f32.xlu0 %v2148
    %v2150 = vpop.xlane.xlu0 %2149
    %v2151 = vsel %vm44, %v2001, 0.0
    %2152 = vadd.xlane.f32.xlu0 %v2151
    %v2153 = vpop.xlane.xlu0 %2152
    %v2154 = vsel %vm44, %v2003, 0.0
    %2155 = vadd.xlane.f32.xlu0 %v2154
    %v2156 = vpop.xlane.xlu0 %2155
    %v2157 = vsel %vm44, %v2005, 0.0
    %2158 = vadd.xlane.f32.xlu0 %v2157
    %v2159 = vpop.xlane.xlu0 %2158
    %v2160 = vsel %vm44, %v2007, 0.0
    %2161 = vadd.xlane.f32.xlu0 %v2160
    %v2162 = vpop.xlane.xlu0 %2161
    %v2163 = vsel %vm44, %v2009, 0.0
    %2164 = vadd.xlane.f32.xlu0 %v2163
    %v2165 = vpop.xlane.xlu0 %2164
    %v2166 = vsel %vm44, %v2011, 0.0
    %2167 = vadd.xlane.f32.xlu0 %v2166
    %v2168 = vpop.xlane.xlu0 %2167
    %v2169 = vsel %vm44, %v2013, 0.0
    %2170 = vadd.xlane.f32.xlu0 %v2169
    %v2171 = vpop.xlane.xlu0 %2170
    %v2172 = vsel %vm44, %v2015, 0.0
    %2173 = vadd.xlane.f32.xlu0 %v2172
    %v2174 = vpop.xlane.xlu0 %2173
    %v2175 = vsel %vm44, %v2017, 0.0
    %2176 = vadd.xlane.f32.xlu0 %v2175
    %v2177 = vpop.xlane.xlu0 %2176
    %v2178 = vsel %vm44, %v2019, 0.0
    %2179 = vadd.xlane.f32.xlu0 %v2178
    %v2180 = vpop.xlane.xlu0 %2179
    %v2181 = vsel %vm44, %v2021, 0.0
    %2182 = vadd.xlane.f32.xlu0 %v2181
    %v2183 = vpop.xlane.xlu0 %2182
    %v2184 = vsel %vm44, %v2023, 0.0
    %2185 = vadd.xlane.f32.xlu0 %v2184
    %v2186 = vpop.xlane.xlu0 %2185
    %v2187 = vsel %vm44, %v2025, 0.0
    %2188 = vadd.xlane.f32.xlu0 %v2187
    %v2189 = vpop.xlane.xlu0 %2188
    %v2190 = vsel %vm44, %v2027, 0.0
    %2191 = vadd.xlane.f32.xlu0 %v2190
    %v2192 = vpop.xlane.xlu0 %2191
    %v2193 = vsel %vm44, %v2029, 0.0
    %2194 = vadd.xlane.f32.xlu0 %v2193
    %v2195 = vpop.xlane.xlu0 %2194
    %v2196 = vsel %vm44, %v2031, 0.0
    %2197 = vadd.xlane.f32.xlu0 %v2196
    %v2198 = vpop.xlane.xlu0 %2197
    %v2199 = vsel %vm44, %v2033, 0.0
    %2200 = vadd.xlane.f32.xlu0 %v2199
    %v2201 = vpop.xlane.xlu0 %2200
    %v2202 = vsel %vm44, %v2035, 0.0
    %2203 = vadd.xlane.f32.xlu0 %v2202
    %v2204 = vpop.xlane.xlu0 %2203
    %v2205 = vsel %vm44, %v2037, 0.0
    %2206 = vadd.xlane.f32.xlu0 %v2205
    %v2207 = vpop.xlane.xlu0 %2206
    %v2208 = vsel %vm44, %v2039, 0.0
    %2209 = vadd.xlane.f32.xlu0 %v2208
    %v2210 = vpop.xlane.xlu0 %2209
    %v2211 = vsel %vm44, %v2041, 0.0
    %2212 = vadd.xlane.f32.xlu0 %v2211
    %v2213 = vpop.xlane.xlu0 %2212
    %v2214 = vsel %vm44, %v2043, 0.0
    %2215 = vadd.xlane.f32.xlu0 %v2214
    %v2216 = vpop.xlane.xlu0 %2215
    %v2217 = vsel %vm44, %v2045, 0.0
    %2218 = vadd.xlane.f32.xlu0 %v2217
    %v2219 = vpop.xlane.xlu0 %2218
    %v2220 = vsel %vm44, %v2047, 0.0
    %2221 = vadd.xlane.f32.xlu0 %v2220
    %v2222 = vpop.xlane.xlu0 %2221
    %v2223 = vsel %vm44, %v2049, 0.0
    %2224 = vadd.xlane.f32.xlu0 %v2223
    %v2225 = vpop.xlane.xlu0 %2224
    %v2226 = vsel %vm44, %v2051, 0.0
    %2227 = vadd.xlane.f32.xlu0 %v2226
    %v2228 = vpop.xlane.xlu0 %2227
    %v2229 = vsel %vm44, %v2053, 0.0
    %2230 = vadd.xlane.f32.xlu0 %v2229
    %v2231 = vpop.xlane.xlu0 %2230
    %v2232 = vsel %vm44, %v2055, 0.0
    %2233 = vadd.xlane.f32.xlu0 %v2232
    %v2234 = vpop.xlane.xlu0 %2233
    %v2235 = vsel %vm44, %v2057, 0.0
    %2236 = vadd.xlane.f32.xlu0 %v2235
    %v2237 = vpop.xlane.xlu0 %2236
    %v2238 = vsel %vm44, %v2059, 0.0
    %2239 = vadd.xlane.f32.xlu0 %v2238
    %v2240 = vpop.xlane.xlu0 %2239
    %v2241 = vsel %vm44, %v2061, 0.0
    %2242 = vadd.xlane.f32.xlu0 %v2241
    %v2243 = vpop.xlane.xlu0 %2242
    %v2244 = vsel %vm44, %v2063, 0.0
    %2245 = vadd.xlane.f32.xlu0 %v2244
    %v2246 = vpop.xlane.xlu0 %2245
    %v2247 = vsel %vm44, %v2065, 0.0
    %2248 = vadd.xlane.f32.xlu0 %v2247
    %v2249 = vpop.xlane.xlu0 %2248
    %v2250 = vsel %vm44, %v2067, 0.0
    %2251 = vadd.xlane.f32.xlu0 %v2250
    %v2252 = vpop.xlane.xlu0 %2251
    %v2253 = vsel %vm44, %v2069, 0.0
    %2254 = vadd.xlane.f32.xlu0 %v2253
    %v2255 = vpop.xlane.xlu0 %2254
    %v2256 = vsel %vm44, %v2071, 0.0
    %2257 = vadd.xlane.f32.xlu0 %v2256
    %v2258 = vpop.xlane.xlu0 %2257
    %v2259 = vsel %vm44, %v2073, 0.0
    %2260 = vadd.xlane.f32.xlu0 %v2259
    %v2261 = vpop.xlane.xlu0 %2260
    %v2262 = vsel %vm44, %v2075, 0.0
    %2263 = vadd.xlane.f32.xlu0 %v2262
    %v2264 = vpop.xlane.xlu0 %2263
    %v2265 = vsel %vm44, %v2077, 0.0
    %2266 = vadd.xlane.f32.xlu0 %v2265
    %v2267 = vpop.xlane.xlu0 %2266
    %v2268 = vsel %vm44, %v2079, 0.0
    %2269 = vadd.xlane.f32.xlu0 %v2268
    %v2270 = vpop.xlane.xlu0 %2269
    %v2271 = vsel %vm44, %v2081, 0.0
    %2272 = vadd.xlane.f32.xlu0 %v2271
    %v2273 = vpop.xlane.xlu0 %2272
    %v2274 = vrcp.pop %v2084
    %v2275 = vrcp.pop %v2087
    %v2276 = vrcp.pop %v2090
    %v2277 = vrcp.pop %v2093
    %v2278 = vrcp.pop %v2096
    %v2279 = vrcp.pop %v2099
    %v2280 = vrcp.pop %v2102
    %v2281 = vrcp.pop %v2105
    %v2282 = vrcp.pop %v2108
    %v2283 = vrcp.pop %v2111
    %v2284 = vrcp.pop %v2114
    %v2285 = vrcp.pop %v2117
    %v2286 = vrcp.pop %v2120
    %v2287 = vrcp.pop %v2123
    %v2288 = vrcp.pop %v2126
    %v2289 = vrcp.pop %v2129
    %v2290 = vrcp.pop %v2132
    %v2291 = vrcp.pop %v2135
    %v2292 = vrcp.pop %v2138
    %v2293 = vrcp.pop %v2141
    %v2294 = vrcp.pop %v2144
    %v2295 = vrcp.pop %v2147
    %v2296 = vrcp.pop %v2150
    %v2297 = vrcp.pop %v2153
    %v2298 = vrcp.pop %v2156
    %v2299 = vrcp.pop %v2159
    %v2300 = vrcp.pop %v2162
    %v2301 = vrcp.pop %v2165
    %v2302 = vrcp.pop %v2168
    %v2303 = vrcp.pop %v2171
    %v2304 = vrcp.pop %v2174
    %v2305 = vrcp.pop %v2177
    %v2306 = vrcp.pop %v2180
    %v2307 = vrcp.pop %v2183
    %v2308 = vrcp.pop %v2186
    %v2309 = vrcp.pop %v2189
    %v2310 = vrcp.pop %v2192
    %v2311 = vrcp.pop %v2195
    %v2312 = vrcp.pop %v2198
    %v2313 = vrcp.pop %v2201
    %v2314 = vrcp.pop %v2204
    %v2315 = vrcp.pop %v2207
    %v2316 = vrcp.pop %v2210
    %v2317 = vrcp.pop %v2213
    %v2318 = vrcp.pop %v2216
    %v2319 = vrcp.pop %v2219
    %v2320 = vrcp.pop %v2222
    %v2321 = vrcp.pop %v2225
    %v2322 = vrcp.pop %v2228
    %v2323 = vrcp.pop %v2231
    %v2324 = vrcp.pop %v2234
    %v2325 = vrcp.pop %v2237
    %v2326 = vrcp.pop %v2240
    %v2327 = vrcp.pop %v2243
    %v2328 = vrcp.pop %v2246
    %v2329 = vrcp.pop %v2249
    %v2330 = vrcp.pop %v2252
    %v2331 = vrcp.pop %v2255
    %v2332 = vrcp.pop %v2258
    %v2333 = vrcp.pop %v2261
    %v2334 = vrcp.pop %v2264
    %v2335 = vrcp.pop %v2267
    %v2336 = vrcp.pop %v2270
    %v2337 = vrcp.pop %v2273
    %v2338 = vmul.f32 %v1955, %v2274
    %v2339 = vmul.f32 %v1957, %v2275
    %v2340 = vmul.f32 %v1959, %v2276
    %v2341 = vmul.f32 %v1961, %v2277
    %v2342 = vmul.f32 %v1963, %v2278
    %v2343 = vmul.f32 %v1965, %v2279
    %v2344 = vmul.f32 %v1967, %v2280
    %v2345 = vmul.f32 %v1969, %v2281
    %v2346 = vmul.f32 %v1971, %v2282
    %v2347 = vmul.f32 %v1973, %v2283
    %v2348 = vmul.f32 %v1975, %v2284
    %v2349 = vmul.f32 %v1977, %v2285
    %v2350 = vmul.f32 %v1979, %v2286
    %v2351 = vmul.f32 %v1981, %v2287
    %v2352 = vmul.f32 %v1983, %v2288
    %v2353 = vmul.f32 %v1985, %v2289
    %v2354 = vmul.f32 %v1987, %v2290
    %v2355 = vmul.f32 %v1989, %v2291
    %v2356 = vmul.f32 %v1991, %v2292
    %v2357 = vmul.f32 %v1993, %v2293
    %v2358 = vmul.f32 %v1995, %v2294
    %v2359 = vmul.f32 %v1997, %v2295
    %v2360 = vmul.f32 %v1999, %v2296
    %v2361 = vmul.f32 %v2001, %v2297
    %v2362 = vmul.f32 %v2003, %v2298
    %v2363 = vmul.f32 %v2005, %v2299
    %v2364 = vmul.f32 %v2007, %v2300
    %v2365 = vmul.f32 %v2009, %v2301
    %v2366 = vmul.f32 %v2011, %v2302
    %v2367 = vmul.f32 %v2013, %v2303
    %v2368 = vmul.f32 %v2015, %v2304
    %v2369 = vmul.f32 %v2017, %v2305
    %v2370 = vmul.f32 %v2019, %v2306
    %v2371 = vmul.f32 %v2021, %v2307
    %v2372 = vmul.f32 %v2023, %v2308
    %v2373 = vmul.f32 %v2025, %v2309
    %v2374 = vmul.f32 %v2027, %v2310
    %v2375 = vmul.f32 %v2029, %v2311
    %v2376 = vmul.f32 %v2031, %v2312
    %v2377 = vmul.f32 %v2033, %v2313
    %v2378 = vmul.f32 %v2035, %v2314
    %v2379 = vmul.f32 %v2037, %v2315
    %v2380 = vmul.f32 %v2039, %v2316
    %v2381 = vmul.f32 %v2041, %v2317
    %v2382 = vmul.f32 %v2043, %v2318
    %v2383 = vmul.f32 %v2045, %v2319
    %v2384 = vmul.f32 %v2047, %v2320
    %v2385 = vmul.f32 %v2049, %v2321
    %v2386 = vmul.f32 %v2051, %v2322
    %v2387 = vmul.f32 %v2053, %v2323
    %v2388 = vmul.f32 %v2055, %v2324
    %v2389 = vmul.f32 %v2057, %v2325
    %v2390 = vmul.f32 %v2059, %v2326
    %v2391 = vmul.f32 %v2061, %v2327
    %v2392 = vmul.f32 %v2063, %v2328
    %v2393 = vmul.f32 %v2065, %v2329
    %v2394 = vmul.f32 %v2067, %v2330
    %v2395 = vmul.f32 %v2069, %v2331
    %v2396 = vmul.f32 %v2071, %v2332
    %v2397 = vmul.f32 %v2073, %v2333
    %v2398 = vmul.f32 %v2075, %v2334
    %v2399 = vmul.f32 %v2077, %v2335
    %v2400 = vmul.f32 %v2079, %v2336
    %v2401 = vmul.f32 %v2081, %v2337
    %v2402 = vsel %vm44, %v2338, 0.0
    %v2403 = vsel %vm44, %v2339, 0.0
    %v2404 = vadd.f32 %v2402, %v2403
    %v2405 = vsel %vm44, %v2340, 0.0
    %v2406 = vadd.f32 %v2404, %v2405
    %v2407 = vsel %vm44, %v2341, 0.0
    %v2408 = vadd.f32 %v2406, %v2407
    %v2409 = vsel %vm44, %v2342, 0.0
    %v2410 = vadd.f32 %v2408, %v2409
    %v2411 = vsel %vm44, %v2343, 0.0
    %v2412 = vadd.f32 %v2410, %v2411
    %v2413 = vsel %vm44, %v2344, 0.0
    %v2414 = vadd.f32 %v2412, %v2413
    %v2415 = vsel %vm44, %v2345, 0.0
    %v2416 = vadd.f32 %v2414, %v2415
    %v2417 = vrot.slane %v2416, 4
    %v2418 = vadd.f32 %v2416, %v2417
    %v2419 = vrot.slane %v2418, 2
    %v2420 = vadd.f32 %v2418, %v2419
    %v2421 = vrot.slane %v2420, 1
    %v2422 = vadd.f32 %v2420, %v2421
    %v2423 = vsel %vm44, %v2346, 0.0
    %v2424 = vsel %vm44, %v2347, 0.0
    %v2425 = vadd.f32 %v2423, %v2424
    %v2426 = vsel %vm44, %v2348, 0.0
    %v2427 = vadd.f32 %v2425, %v2426
    %v2428 = vsel %vm44, %v2349, 0.0
    %v2429 = vadd.f32 %v2427, %v2428
    %v2430 = vsel %vm44, %v2350, 0.0
    %v2431 = vadd.f32 %v2429, %v2430
    %v2432 = vsel %vm44, %v2351, 0.0
    %v2433 = vadd.f32 %v2431, %v2432
    %v2434 = vsel %vm44, %v2352, 0.0
    %v2435 = vadd.f32 %v2433, %v2434
    %v2436 = vsel %vm44, %v2353, 0.0
    %v2437 = vadd.f32 %v2435, %v2436
    %v2438 = vrot.slane %v2437, 4
    %v2439 = vadd.f32 %v2437, %v2438
    %v2440 = vrot.slane %v2439, 2
    %v2441 = vadd.f32 %v2439, %v2440
    %v2442 = vrot.slane %v2441, 1
    %v2443 = vadd.f32 %v2441, %v2442
    %v2444 = vsel %vm44, %v2354, 0.0
    %v2445 = vsel %vm44, %v2355, 0.0
    %v2446 = vadd.f32 %v2444, %v2445
    %v2447 = vsel %vm44, %v2356, 0.0
    %v2448 = vadd.f32 %v2446, %v2447
    %v2449 = vsel %vm44, %v2357, 0.0
    %v2450 = vadd.f32 %v2448, %v2449
    %v2451 = vsel %vm44, %v2358, 0.0
    %v2452 = vadd.f32 %v2450, %v2451
    %v2453 = vsel %vm44, %v2359, 0.0
    %v2454 = vadd.f32 %v2452, %v2453
    %v2455 = vsel %vm44, %v2360, 0.0
    %v2456 = vadd.f32 %v2454, %v2455
    %v2457 = vsel %vm44, %v2361, 0.0
    %v2458 = vadd.f32 %v2456, %v2457
    %v2459 = vrot.slane %v2458, 4
    %v2460 = vadd.f32 %v2458, %v2459
    %v2461 = vrot.slane %v2460, 2
    %v2462 = vadd.f32 %v2460, %v2461
    %v2463 = vrot.slane %v2462, 1
    %v2464 = vadd.f32 %v2462, %v2463
    %v2465 = vsel %vm44, %v2362, 0.0
    %v2466 = vsel %vm44, %v2363, 0.0
    %v2467 = vadd.f32 %v2465, %v2466
    %v2468 = vsel %vm44, %v2364, 0.0
    %v2469 = vadd.f32 %v2467, %v2468
    %v2470 = vsel %vm44, %v2365, 0.0
    %v2471 = vadd.f32 %v2469, %v2470
    %v2472 = vsel %vm44, %v2366, 0.0
    %v2473 = vadd.f32 %v2471, %v2472
    %v2474 = vsel %vm44, %v2367, 0.0
    %v2475 = vadd.f32 %v2473, %v2474
    %v2476 = vsel %vm44, %v2368, 0.0
    %v2477 = vadd.f32 %v2475, %v2476
    %v2478 = vsel %vm44, %v2369, 0.0
    %v2479 = vadd.f32 %v2477, %v2478
    %v2480 = vrot.slane %v2479, 4
    %v2481 = vadd.f32 %v2479, %v2480
    %v2482 = vrot.slane %v2481, 2
    %v2483 = vadd.f32 %v2481, %v2482
    %v2484 = vrot.slane %v2483, 1
    %v2485 = vadd.f32 %v2483, %v2484
    %v2486 = vsel %vm44, %v2370, 0.0
    %v2487 = vsel %vm44, %v2371, 0.0
    %v2488 = vadd.f32 %v2486, %v2487
    %v2489 = vsel %vm44, %v2372, 0.0
    %v2490 = vadd.f32 %v2488, %v2489
    %v2491 = vsel %vm44, %v2373, 0.0
    %v2492 = vadd.f32 %v2490, %v2491
    %v2493 = vsel %vm44, %v2374, 0.0
    %v2494 = vadd.f32 %v2492, %v2493
    %v2495 = vsel %vm44, %v2375, 0.0
    %v2496 = vadd.f32 %v2494, %v2495
    %v2497 = vsel %vm44, %v2376, 0.0
    %v2498 = vadd.f32 %v2496, %v2497
    %v2499 = vsel %vm44, %v2377, 0.0
    %v2500 = vadd.f32 %v2498, %v2499
    %v2501 = vrot.slane %v2500, 4
    %v2502 = vadd.f32 %v2500, %v2501
    %v2503 = vrot.slane %v2502, 2
    %v2504 = vadd.f32 %v2502, %v2503
    %v2505 = vrot.slane %v2504, 1
    %v2506 = vadd.f32 %v2504, %v2505
    %v2507 = vsel %vm44, %v2378, 0.0
    %v2508 = vsel %vm44, %v2379, 0.0
    %v2509 = vadd.f32 %v2507, %v2508
    %v2510 = vsel %vm44, %v2380, 0.0
    %v2511 = vadd.f32 %v2509, %v2510
    %v2512 = vsel %vm44, %v2381, 0.0
    %v2513 = vadd.f32 %v2511, %v2512
    %v2514 = vsel %vm44, %v2382, 0.0
    %v2515 = vadd.f32 %v2513, %v2514
    %v2516 = vsel %vm44, %v2383, 0.0
    %v2517 = vadd.f32 %v2515, %v2516
    %v2518 = vsel %vm44, %v2384, 0.0
    %v2519 = vadd.f32 %v2517, %v2518
    %v2520 = vsel %vm44, %v2385, 0.0
    %v2521 = vadd.f32 %v2519, %v2520
    %v2522 = vrot.slane %v2521, 4
    %v2523 = vadd.f32 %v2521, %v2522
    %v2524 = vrot.slane %v2523, 2
    %v2525 = vadd.f32 %v2523, %v2524
    %v2526 = vrot.slane %v2525, 1
    %v2527 = vadd.f32 %v2525, %v2526
    %v2528 = vsel %vm44, %v2386, 0.0
    %v2529 = vsel %vm44, %v2387, 0.0
    %v2530 = vadd.f32 %v2528, %v2529
    %v2531 = vsel %vm44, %v2388, 0.0
    %v2532 = vadd.f32 %v2530, %v2531
    %v2533 = vsel %vm44, %v2389, 0.0
    %v2534 = vadd.f32 %v2532, %v2533
    %v2535 = vsel %vm44, %v2390, 0.0
    %v2536 = vadd.f32 %v2534, %v2535
    %v2537 = vsel %vm44, %v2391, 0.0
    %v2538 = vadd.f32 %v2536, %v2537
    %v2539 = vsel %vm44, %v2392, 0.0
    %v2540 = vadd.f32 %v2538, %v2539
    %v2541 = vsel %vm44, %v2393, 0.0
    %v2542 = vadd.f32 %v2540, %v2541
    %v2543 = vrot.slane %v2542, 4
    %v2544 = vadd.f32 %v2542, %v2543
    %v2545 = vrot.slane %v2544, 2
    %v2546 = vadd.f32 %v2544, %v2545
    %v2547 = vrot.slane %v2546, 1
    %v2548 = vadd.f32 %v2546, %v2547
    %v2549 = vsel %vm44, %v2394, 0.0
    %v2550 = vsel %vm44, %v2395, 0.0
    %v2551 = vadd.f32 %v2549, %v2550
    %v2552 = vsel %vm44, %v2396, 0.0
    %v2553 = vadd.f32 %v2551, %v2552
    %v2554 = vsel %vm44, %v2397, 0.0
    %v2555 = vadd.f32 %v2553, %v2554
    %v2556 = vsel %vm44, %v2398, 0.0
    %v2557 = vadd.f32 %v2555, %v2556
    %v2558 = vsel %vm44, %v2399, 0.0
    %v2559 = vadd.f32 %v2557, %v2558
    %v2560 = vsel %vm44, %v2400, 0.0
    %v2561 = vadd.f32 %v2559, %v2560
    %v2562 = vsel %vm44, %v2401, 0.0
    %v2563 = vadd.f32 %v2561, %v2562
    %v2564 = vrot.slane %v2563, 4
    %v2565 = vadd.f32 %v2563, %v2564
    %v2566 = vrot.slane %v2565, 2
    %v2567 = vadd.f32 %v2565, %v2566
    %v2568 = vrot.slane %v2567, 1
    %v2569 = vadd.f32 %v2567, %v2568
    %v2570 = vmul.f32 %v2422, %v93
    %v2571 = vmul.f32 %v2443, %v93
    %v2572 = vmul.f32 %v2464, %v93
    %v2573 = vmul.f32 %v2485, %v93
    %v2574 = vmul.f32 %v2506, %v93
    %v2575 = vmul.f32 %v2527, %v93
    %v2576 = vmul.f32 %v2548, %v93
    %v2577 = vmul.f32 %v2569, %v93
    %v2578 = vpack.c.bf16 %v2570, %v2570
    %v2579 = vpack.c.bf16 %v2571, %v2571
    %v2580 = vpack.c.bf16 %v2572, %v2572
    %v2581 = vpack.c.bf16 %v2573, %v2573
    %v2582 = vpack.c.bf16 %v2574, %v2574
    %v2583 = vpack.c.bf16 %v2575, %v2575
    %v2584 = vpack.c.bf16 %v2576, %v2576
    %v2585 = vpack.c.bf16 %v2577, %v2577
    %v2586 = vpack.c.bf16 %v433, %v429
    %v2587 = vpack.c.bf16 %v443, %v439
    %v2588 = vpack.c.bf16 %v453, %v449
    %v2589 = vpack.c.bf16 %v463, %v459
    %v2590 = vpack.c.bf16 %v692, %v690
    %v2591 = vpack.c.bf16 %v696, %v694
    %v2592 = vpack.c.bf16 %v700, %v698
    %v2593 = vpack.c.bf16 %v704, %v702
    %v2594 = vpack.c.bf16 %v716, %v714
    %v2595 = vpack.c.bf16 %v720, %v718
    %v2596 = vpack.c.bf16 %v724, %v722
    %v2597 = vpack.c.bf16 %v728, %v726
    %v2598 = vpack.c.bf16 %v740, %v738
    %v2599 = vpack.c.bf16 %v744, %v742
    %v2600 = vpack.c.bf16 %v748, %v746
    %v2601 = vpack.c.bf16 %v752, %v750
    %v2602 = vpack.c.bf16 %v764, %v762
    %v2603 = vpack.c.bf16 %v768, %v766
    %v2604 = vpack.c.bf16 %v772, %v770
    %v2605 = vpack.c.bf16 %v776, %v774
    %v2606 = vpack.c.bf16 %v788, %v786
    %v2607 = vpack.c.bf16 %v792, %v790
    %v2608 = vpack.c.bf16 %v796, %v794
    %v2609 = vpack.c.bf16 %v800, %v798
    %v2610 = vpack.c.bf16 %v812, %v810
    %v2611 = vpack.c.bf16 %v816, %v814
    %v2612 = vpack.c.bf16 %v820, %v818
    %v2613 = vpack.c.bf16 %v824, %v822
    %v2614 = vpack.c.bf16 %v836, %v834
    %v2615 = vpack.c.bf16 %v840, %v838
    %v2616 = vpack.c.bf16 %v844, %v842
    %v2617 = vpack.c.bf16 %v848, %v846
    %v2619 = vsel %vm44, %v2578, 0
    %2621 = vmatprep.subr.bf16.mxu0 0
    %2622 = vmatpush1.bf16.msra.mxu0 0
    %2623 = vmatprep.subr.bf16.mxu0 0
    %2624 = vmatpush1.bf16.msra.mxu0 0
    %2625 = vmatprep.subr.bf16.mxu0 0
    %2626 = vmatpush1.bf16.msra.mxu0 0
    %2627 = vmatprep.subr.bf16.mxu0 0
    %2628 = vmatpush1.bf16.msra.mxu0 0
    %2629 = vmatprep.subr.bf16.mxu0 0
    %2630 = vmatpush1.bf16.msra.mxu0 %v2589
    %2631 = vmatprep.subr.bf16.mxu0 0
    %2632 = vmatpush1.bf16.msra.mxu0 %v2588
    %2633 = vmatprep.subr.bf16.mxu0 0
    %2634 = vmatpush1.bf16.msra.mxu0 %v2587
    %2635 = vmatprep.subr.bf16.mxu0 0
    %2636 = vmatpush1.bf16.msra.mxu0 %v2586
    %2637 = vmatprep.subr.bf16.mxu0 0
    %2638 = vmatpush2.bf16.msra.mxu0 0
    %2639 = vmatprep.subr.bf16.mxu0 0
    %2640 = vmatpush2.bf16.msra.mxu0 0
    %2641 = vmatprep.subr.bf16.mxu0 0
    %2642 = vmatpush2.bf16.msra.mxu0 0
    %2643 = vmatprep.subr.bf16.mxu0 0
    %2644 = vmatpush2.bf16.msra.mxu0 0
    %2645 = vmatprep.subr.bf16.mxu0 0
    %2646 = vmatpush2.bf16.msra.mxu0 0
    %2647 = vmatprep.subr.bf16.mxu0 0
    %2648 = vmatpush2.bf16.msra.mxu0 0
    %2649 = vmatprep.subr.bf16.mxu0 0
    %2650 = vmatpush2.bf16.msra.mxu0 0
    %2651 = vmatprep.subr.bf16.mxu0 0
    %2652 = vmatpush2.bf16.msra.mxu0 0
    %2653 = vmatprep.mubr.bf16.mxu0 0
    %2654 = vmatmul.mubr.bf16.gmra.mxu0 %v2619
    %v2655 = vpop.f32.mrf.mxu0
    %v2656 = vadd.f32 0.0, %v2655
    %v2657 = vpop.f32.mrf.mxu0
    %v2658 = vpop.f32.mrf.mxu0
    %v2659 = vpop.f32.mrf.mxu0
    %2660 = vdwg.mxu0
    %v2662 = vsel %vm44, %v2579, 0
    %2664 = vmatprep.subr.bf16.mxu0 0
    %2665 = vmatpush1.bf16.msra.mxu0 0
    %2666 = vmatprep.subr.bf16.mxu0 0
    %2667 = vmatpush1.bf16.msra.mxu0 0
    %2668 = vmatprep.subr.bf16.mxu0 0
    %2669 = vmatpush1.bf16.msra.mxu0 0
    %2670 = vmatprep.subr.bf16.mxu0 0
    %2671 = vmatpush1.bf16.msra.mxu0 0
    %2672 = vmatprep.subr.bf16.mxu0 0
    %2673 = vmatpush1.bf16.msra.mxu0 %v2593
    %2674 = vmatprep.subr.bf16.mxu0 0
    %2675 = vmatpush1.bf16.msra.mxu0 %v2592
    %2676 = vmatprep.subr.bf16.mxu0 0
    %2677 = vmatpush1.bf16.msra.mxu0 %v2591
    %2678 = vmatprep.subr.bf16.mxu0 0
    %2679 = vmatpush1.bf16.msra.mxu0 %v2590
    %2680 = vmatprep.subr.bf16.mxu0 0
    %2681 = vmatpush2.bf16.msra.mxu0 0
    %2682 = vmatprep.subr.bf16.mxu0 0
    %2683 = vmatpush2.bf16.msra.mxu0 0
    %2684 = vmatprep.subr.bf16.mxu0 0
    %2685 = vmatpush2.bf16.msra.mxu0 0
    %2686 = vmatprep.subr.bf16.mxu0 0
    %2687 = vmatpush2.bf16.msra.mxu0 0
    %2688 = vmatprep.subr.bf16.mxu0 0
    %2689 = vmatpush2.bf16.msra.mxu0 0
    %2690 = vmatprep.subr.bf16.mxu0 0
    %2691 = vmatpush2.bf16.msra.mxu0 0
    %2692 = vmatprep.subr.bf16.mxu0 0
    %2693 = vmatpush2.bf16.msra.mxu0 0
    %2694 = vmatprep.subr.bf16.mxu0 0
    %2695 = vmatpush2.bf16.msra.mxu0 0
    %2696 = vmatprep.mubr.bf16.mxu0 0
    %2697 = vmatmul.mubr.bf16.gmra.mxu0 %v2662
    %v2698 = vpop.f32.mrf.mxu0
    %v2699 = vadd.f32 0.0, %v2698
    %v2700 = vpop.f32.mrf.mxu0
    %v2701 = vpop.f32.mrf.mxu0
    %v2702 = vpop.f32.mrf.mxu0
    %2703 = vdwg.mxu0
    %v2705 = vsel %vm44, %v2580, 0
    %2707 = vmatprep.subr.bf16.mxu0 0
    %2708 = vmatpush1.bf16.msra.mxu0 0
    %2709 = vmatprep.subr.bf16.mxu0 0
    %2710 = vmatpush1.bf16.msra.mxu0 0
    %2711 = vmatprep.subr.bf16.mxu0 0
    %2712 = vmatpush1.bf16.msra.mxu0 0
    %2713 = vmatprep.subr.bf16.mxu0 0
    %2714 = vmatpush1.bf16.msra.mxu0 0
    %2715 = vmatprep.subr.bf16.mxu0 0
    %2716 = vmatpush1.bf16.msra.mxu0 %v2597
    %2717 = vmatprep.subr.bf16.mxu0 0
    %2718 = vmatpush1.bf16.msra.mxu0 %v2596
    %2719 = vmatprep.subr.bf16.mxu0 0
    %2720 = vmatpush1.bf16.msra.mxu0 %v2595
    %2721 = vmatprep.subr.bf16.mxu0 0
    %2722 = vmatpush1.bf16.msra.mxu0 %v2594
    %2723 = vmatprep.subr.bf16.mxu0 0
    %2724 = vmatpush2.bf16.msra.mxu0 0
    %2725 = vmatprep.subr.bf16.mxu0 0
    %2726 = vmatpush2.bf16.msra.mxu0 0
    %2727 = vmatprep.subr.bf16.mxu0 0
    %2728 = vmatpush2.bf16.msra.mxu0 0
    %2729 = vmatprep.subr.bf16.mxu0 0
    %2730 = vmatpush2.bf16.msra.mxu0 0
    %2731 = vmatprep.subr.bf16.mxu0 0
    %2732 = vmatpush2.bf16.msra.mxu0 0
    %2733 = vmatprep.subr.bf16.mxu0 0
    %2734 = vmatpush2.bf16.msra.mxu0 0
    %2735 = vmatprep.subr.bf16.mxu0 0
    %2736 = vmatpush2.bf16.msra.mxu0 0
    %2737 = vmatprep.subr.bf16.mxu0 0
    %2738 = vmatpush2.bf16.msra.mxu0 0
    %2739 = vmatprep.mubr.bf16.mxu0 0
    %2740 = vmatmul.mubr.bf16.gmra.mxu0 %v2705
    %v2741 = vpop.f32.mrf.mxu0
    %v2742 = vadd.f32 0.0, %v2741
    %v2743 = vpop.f32.mrf.mxu0
    %v2744 = vpop.f32.mrf.mxu0
    %v2745 = vpop.f32.mrf.mxu0
    %2746 = vdwg.mxu0
    %v2748 = vsel %vm44, %v2581, 0
    %2750 = vmatprep.subr.bf16.mxu0 0
    %2751 = vmatpush1.bf16.msra.mxu0 0
    %2752 = vmatprep.subr.bf16.mxu0 0
    %2753 = vmatpush1.bf16.msra.mxu0 0
    %2754 = vmatprep.subr.bf16.mxu0 0
    %2755 = vmatpush1.bf16.msra.mxu0 0
    %2756 = vmatprep.subr.bf16.mxu0 0
    %2757 = vmatpush1.bf16.msra.mxu0 0
    %2758 = vmatprep.subr.bf16.mxu0 0
    %2759 = vmatpush1.bf16.msra.mxu0 %v2601
    %2760 = vmatprep.subr.bf16.mxu0 0
    %2761 = vmatpush1.bf16.msra.mxu0 %v2600
    %2762 = vmatprep.subr.bf16.mxu0 0
    %2763 = vmatpush1.bf16.msra.mxu0 %v2599
    %2764 = vmatprep.subr.bf16.mxu0 0
    %2765 = vmatpush1.bf16.msra.mxu0 %v2598
    %2766 = vmatprep.subr.bf16.mxu0 0
    %2767 = vmatpush2.bf16.msra.mxu0 0
    %2768 = vmatprep.subr.bf16.mxu0 0
    %2769 = vmatpush2.bf16.msra.mxu0 0
    %2770 = vmatprep.subr.bf16.mxu0 0
    %2771 = vmatpush2.bf16.msra.mxu0 0
    %2772 = vmatprep.subr.bf16.mxu0 0
    %2773 = vmatpush2.bf16.msra.mxu0 0
    %2774 = vmatprep.subr.bf16.mxu0 0
    %2775 = vmatpush2.bf16.msra.mxu0 0
    %2776 = vmatprep.subr.bf16.mxu0 0
    %2777 = vmatpush2.bf16.msra.mxu0 0
    %2778 = vmatprep.subr.bf16.mxu0 0
    %2779 = vmatpush2.bf16.msra.mxu0 0
    %2780 = vmatprep.subr.bf16.mxu0 0
    %2781 = vmatpush2.bf16.msra.mxu0 0
    %2782 = vmatprep.mubr.bf16.mxu0 0
    %2783 = vmatmul.mubr.bf16.gmra.mxu0 %v2748
    %v2784 = vpop.f32.mrf.mxu0
    %v2785 = vadd.f32 0.0, %v2784
    %v2786 = vpop.f32.mrf.mxu0
    %v2787 = vpop.f32.mrf.mxu0
    %v2788 = vpop.f32.mrf.mxu0
    %2789 = vdwg.mxu0
    %v2791 = vsel %vm44, %v2582, 0
    %2793 = vmatprep.subr.bf16.mxu0 0
    %2794 = vmatpush1.bf16.msra.mxu0 0
    %2795 = vmatprep.subr.bf16.mxu0 0
    %2796 = vmatpush1.bf16.msra.mxu0 0
    %2797 = vmatprep.subr.bf16.mxu0 0
    %2798 = vmatpush1.bf16.msra.mxu0 0
    %2799 = vmatprep.subr.bf16.mxu0 0
    %2800 = vmatpush1.bf16.msra.mxu0 0
    %2801 = vmatprep.subr.bf16.mxu0 0
    %2802 = vmatpush1.bf16.msra.mxu0 %v2605
    %2803 = vmatprep.subr.bf16.mxu0 0
    %2804 = vmatpush1.bf16.msra.mxu0 %v2604
    %2805 = vmatprep.subr.bf16.mxu0 0
    %2806 = vmatpush1.bf16.msra.mxu0 %v2603
    %2807 = vmatprep.subr.bf16.mxu0 0
    %2808 = vmatpush1.bf16.msra.mxu0 %v2602
    %2809 = vmatprep.subr.bf16.mxu0 0
    %2810 = vmatpush2.bf16.msra.mxu0 0
    %2811 = vmatprep.subr.bf16.mxu0 0
    %2812 = vmatpush2.bf16.msra.mxu0 0
    %2813 = vmatprep.subr.bf16.mxu0 0
    %2814 = vmatpush2.bf16.msra.mxu0 0
    %2815 = vmatprep.subr.bf16.mxu0 0
    %2816 = vmatpush2.bf16.msra.mxu0 0
    %2817 = vmatprep.subr.bf16.mxu0 0
    %2818 = vmatpush2.bf16.msra.mxu0 0
    %2819 = vmatprep.subr.bf16.mxu0 0
    %2820 = vmatpush2.bf16.msra.mxu0 0
    %2821 = vmatprep.subr.bf16.mxu0 0
    %2822 = vmatpush2.bf16.msra.mxu0 0
    %2823 = vmatprep.subr.bf16.mxu0 0
    %2824 = vmatpush2.bf16.msra.mxu0 0
    %2825 = vmatprep.mubr.bf16.mxu0 0
    %2826 = vmatmul.mubr.bf16.gmra.mxu0 %v2791
    %v2827 = vpop.f32.mrf.mxu0
    %v2828 = vadd.f32 0.0, %v2827
    %v2829 = vpop.f32.mrf.mxu0
    %v2830 = vpop.f32.mrf.mxu0
    %v2831 = vpop.f32.mrf.mxu0
    %2832 = vdwg.mxu0
    %v2834 = vsel %vm44, %v2583, 0
    %2836 = vmatprep.subr.bf16.mxu0 0
    %2837 = vmatpush1.bf16.msra.mxu0 0
    %2838 = vmatprep.subr.bf16.mxu0 0
    %2839 = vmatpush1.bf16.msra.mxu0 0
    %2840 = vmatprep.subr.bf16.mxu0 0
    %2841 = vmatpush1.bf16.msra.mxu0 0
    %2842 = vmatprep.subr.bf16.mxu0 0
    %2843 = vmatpush1.bf16.msra.mxu0 0
    %2844 = vmatprep.subr.bf16.mxu0 0
    %2845 = vmatpush1.bf16.msra.mxu0 %v2609
    %2846 = vmatprep.subr.bf16.mxu0 0
    %2847 = vmatpush1.bf16.msra.mxu0 %v2608
    %2848 = vmatprep.subr.bf16.mxu0 0
    %2849 = vmatpush1.bf16.msra.mxu0 %v2607
    %2850 = vmatprep.subr.bf16.mxu0 0
    %2851 = vmatpush1.bf16.msra.mxu0 %v2606
    %2852 = vmatprep.subr.bf16.mxu0 0
    %2853 = vmatpush2.bf16.msra.mxu0 0
    %2854 = vmatprep.subr.bf16.mxu0 0
    %2855 = vmatpush2.bf16.msra.mxu0 0
    %2856 = vmatprep.subr.bf16.mxu0 0
    %2857 = vmatpush2.bf16.msra.mxu0 0
    %2858 = vmatprep.subr.bf16.mxu0 0
    %2859 = vmatpush2.bf16.msra.mxu0 0
    %2860 = vmatprep.subr.bf16.mxu0 0
    %2861 = vmatpush2.bf16.msra.mxu0 0
    %2862 = vmatprep.subr.bf16.mxu0 0
    %2863 = vmatpush2.bf16.msra.mxu0 0
    %2864 = vmatprep.subr.bf16.mxu0 0
    %2865 = vmatpush2.bf16.msra.mxu0 0
    %2866 = vmatprep.subr.bf16.mxu0 0
    %2867 = vmatpush2.bf16.msra.mxu0 0
    %2868 = vmatprep.mubr.bf16.mxu0 0
    %2869 = vmatmul.mubr.bf16.gmra.mxu0 %v2834
    %v2870 = vpop.f32.mrf.mxu0
    %v2871 = vadd.f32 0.0, %v2870
    %v2872 = vpop.f32.mrf.mxu0
    %v2873 = vpop.f32.mrf.mxu0
    %v2874 = vpop.f32.mrf.mxu0
    %2875 = vdwg.mxu0
    %v2877 = vsel %vm44, %v2584, 0
    %2879 = vmatprep.subr.bf16.mxu0 0
    %2880 = vmatpush1.bf16.msra.mxu0 0
    %2881 = vmatprep.subr.bf16.mxu0 0
    %2882 = vmatpush1.bf16.msra.mxu0 0
    %2883 = vmatprep.subr.bf16.mxu0 0
    %2884 = vmatpush1.bf16.msra.mxu0 0
    %2885 = vmatprep.subr.bf16.mxu0 0
    %2886 = vmatpush1.bf16.msra.mxu0 0
    %2887 = vmatprep.subr.bf16.mxu0 0
    %2888 = vmatpush1.bf16.msra.mxu0 %v2613
    %2889 = vmatprep.subr.bf16.mxu0 0
    %2890 = vmatpush1.bf16.msra.mxu0 %v2612
    %2891 = vmatprep.subr.bf16.mxu0 0
    %2892 = vmatpush1.bf16.msra.mxu0 %v2611
    %2893 = vmatprep.subr.bf16.mxu0 0
    %2894 = vmatpush1.bf16.msra.mxu0 %v2610
    %2895 = vmatprep.subr.bf16.mxu0 0
    %2896 = vmatpush2.bf16.msra.mxu0 0
    %2897 = vmatprep.subr.bf16.mxu0 0
    %2898 = vmatpush2.bf16.msra.mxu0 0
    %2899 = vmatprep.subr.bf16.mxu0 0
    %2900 = vmatpush2.bf16.msra.mxu0 0
    %2901 = vmatprep.subr.bf16.mxu0 0
    %2902 = vmatpush2.bf16.msra.mxu0 0
    %2903 = vmatprep.subr.bf16.mxu0 0
    %2904 = vmatpush2.bf16.msra.mxu0 0
    %2905 = vmatprep.subr.bf16.mxu0 0
    %2906 = vmatpush2.bf16.msra.mxu0 0
    %2907 = vmatprep.subr.bf16.mxu0 0
    %2908 = vmatpush2.bf16.msra.mxu0 0
    %2909 = vmatprep.subr.bf16.mxu0 0
    %2910 = vmatpush2.bf16.msra.mxu0 0
    %2911 = vmatprep.mubr.bf16.mxu0 0
    %2912 = vmatmul.mubr.bf16.gmra.mxu0 %v2877
    %v2913 = vpop.f32.mrf.mxu0
    %v2914 = vadd.f32 0.0, %v2913
    %v2915 = vpop.f32.mrf.mxu0
    %v2916 = vpop.f32.mrf.mxu0
    %v2917 = vpop.f32.mrf.mxu0
    %2918 = vdwg.mxu0
    %v2920 = vsel %vm44, %v2585, 0
    %2922 = vmatprep.subr.bf16.mxu0 0
    %2923 = vmatpush1.bf16.msra.mxu0 0
    %2924 = vmatprep.subr.bf16.mxu0 0
    %2925 = vmatpush1.bf16.msra.mxu0 0
    %2926 = vmatprep.subr.bf16.mxu0 0
    %2927 = vmatpush1.bf16.msra.mxu0 0
    %2928 = vmatprep.subr.bf16.mxu0 0
    %2929 = vmatpush1.bf16.msra.mxu0 0
    %2930 = vmatprep.subr.bf16.mxu0 0
    %2931 = vmatpush1.bf16.msra.mxu0 %v2617
    %2932 = vmatprep.subr.bf16.mxu0 0
    %2933 = vmatpush1.bf16.msra.mxu0 %v2616
    %2934 = vmatprep.subr.bf16.mxu0 0
    %2935 = vmatpush1.bf16.msra.mxu0 %v2615
    %2936 = vmatprep.subr.bf16.mxu0 0
    %2937 = vmatpush1.bf16.msra.mxu0 %v2614
    %2938 = vmatprep.subr.bf16.mxu0 0
    %2939 = vmatpush2.bf16.msra.mxu0 0
    %2940 = vmatprep.subr.bf16.mxu0 0
    %2941 = vmatpush2.bf16.msra.mxu0 0
    %2942 = vmatprep.subr.bf16.mxu0 0
    %2943 = vmatpush2.bf16.msra.mxu0 0
    %2944 = vmatprep.subr.bf16.mxu0 0
    %2945 = vmatpush2.bf16.msra.mxu0 0
    %2946 = vmatprep.subr.bf16.mxu0 0
    %2947 = vmatpush2.bf16.msra.mxu0 0
    %2948 = vmatprep.subr.bf16.mxu0 0
    %2949 = vmatpush2.bf16.msra.mxu0 0
    %2950 = vmatprep.subr.bf16.mxu0 0
    %2951 = vmatpush2.bf16.msra.mxu0 0
    %2952 = vmatprep.subr.bf16.mxu0 0
    %2953 = vmatpush2.bf16.msra.mxu0 0
    %2954 = vmatprep.mubr.bf16.mxu0 0
    %2955 = vmatmul.mubr.bf16.gmra.mxu0 %v2920
    %v2956 = vpop.f32.mrf.mxu0
    %v2957 = vadd.f32 0.0, %v2956
    %v2958 = vpop.f32.mrf.mxu0
    %v2959 = vpop.f32.mrf.mxu0
    %v2960 = vpop.f32.mrf.mxu0
    %2961 = vdwg.mxu0
    %2963 = vrot.lane.b32.xlu0 %v2699, 8
    %v2964 = vpop.permute.xlu0 %2963
    %2967 = vrot.lane.b32.xlu0 %v2742, 16
    %v2968 = vpop.permute.xlu0 %2967
    %2971 = vrot.lane.b32.xlu0 %v2785, 24
    %v2972 = vpop.permute.xlu0 %2971
    %2975 = vrot.lane.b32.xlu0 %v2828, 32
    %v2976 = vpop.permute.xlu0 %2975
    %2979 = vrot.lane.b32.xlu0 %v2871, 40
    %v2980 = vpop.permute.xlu0 %2979
    %2983 = vrot.lane.b32.xlu0 %v2914, 48
    %v2984 = vpop.permute.xlu0 %2983
    %2987 = vrot.lane.b32.xlu0 %v2957, 56
    %v2988 = vpop.permute.xlu0 %2987
    %v2990 = vsel %vm901, %v2656, %v2964
    %vm2991 = vcmask 130048
    %v2992 = vsel %vm2991, %v2990, %v2968
    %vm2993 = vcmask 195584
    %v2994 = vsel %vm2993, %v2992, %v2972
    %vm2995 = vcmask 261120
    %v2996 = vsel %vm2995, %v2994, %v2976
    %vm2997 = vcmask 326656
    %v2998 = vsel %vm2997, %v2996, %v2980
    %vm2999 = vcmask 392192
    %v3000 = vsel %vm2999, %v2998, %v2984
    %vm3001 = vcmask 457728
    %v3002 = vsel %vm3001, %v3000, %v2988
    %3011 = vrot.lane.b32.xlu0 %v467, 120
    %v3012 = vpop.permute.xlu0 %3011
    %3013 = vrot.lane.b32.xlu0 %v471, 120
    %v3014 = vpop.permute.xlu0 %3013
    %3015 = vrot.lane.b32.xlu0 %v477, 120
    %v3016 = vpop.permute.xlu0 %3015
    %3017 = vrot.lane.b32.xlu0 %v481, 120
    %v3018 = vpop.permute.xlu0 %3017
    %3019 = vrot.lane.b32.xlu0 %v487, 120
    %v3020 = vpop.permute.xlu0 %3019
    %3021 = vrot.lane.b32.xlu0 %v491, 120
    %v3022 = vpop.permute.xlu0 %3021
    %3023 = vrot.lane.b32.xlu0 %v497, 120
    %v3024 = vpop.permute.xlu0 %3023
    %3025 = vrot.lane.b32.xlu0 %v501, 120
    %v3026 = vpop.permute.xlu0 %3025
    %3035 = vrot.lane.b32.xlu0 %v467, 112
    %v3036 = vpop.permute.xlu0 %3035
    %3037 = vrot.lane.b32.xlu0 %v471, 112
    %v3038 = vpop.permute.xlu0 %3037
    %3039 = vrot.lane.b32.xlu0 %v477, 112
    %v3040 = vpop.permute.xlu0 %3039
    %3041 = vrot.lane.b32.xlu0 %v481, 112
    %v3042 = vpop.permute.xlu0 %3041
    %3043 = vrot.lane.b32.xlu0 %v487, 112
    %v3044 = vpop.permute.xlu0 %3043
    %3045 = vrot.lane.b32.xlu0 %v491, 112
    %v3046 = vpop.permute.xlu0 %3045
    %3047 = vrot.lane.b32.xlu0 %v497, 112
    %v3048 = vpop.permute.xlu0 %3047
    %3049 = vrot.lane.b32.xlu0 %v501, 112
    %v3050 = vpop.permute.xlu0 %3049
    %3059 = vrot.lane.b32.xlu0 %v467, 104
    %v3060 = vpop.permute.xlu0 %3059
    %3061 = vrot.lane.b32.xlu0 %v471, 104
    %v3062 = vpop.permute.xlu0 %3061
    %3063 = vrot.lane.b32.xlu0 %v477, 104
    %v3064 = vpop.permute.xlu0 %3063
    %3065 = vrot.lane.b32.xlu0 %v481, 104
    %v3066 = vpop.permute.xlu0 %3065
    %3067 = vrot.lane.b32.xlu0 %v487, 104
    %v3068 = vpop.permute.xlu0 %3067
    %3069 = vrot.lane.b32.xlu0 %v491, 104
    %v3070 = vpop.permute.xlu0 %3069
    %3071 = vrot.lane.b32.xlu0 %v497, 104
    %v3072 = vpop.permute.xlu0 %3071
    %3073 = vrot.lane.b32.xlu0 %v501, 104
    %v3074 = vpop.permute.xlu0 %3073
    %3083 = vrot.lane.b32.xlu0 %v467, 96
    %v3084 = vpop.permute.xlu0 %3083
    %3085 = vrot.lane.b32.xlu0 %v471, 96
    %v3086 = vpop.permute.xlu0 %3085
    %3087 = vrot.lane.b32.xlu0 %v477, 96
    %v3088 = vpop.permute.xlu0 %3087
    %3089 = vrot.lane.b32.xlu0 %v481, 96
    %v3090 = vpop.permute.xlu0 %3089
    %3091 = vrot.lane.b32.xlu0 %v487, 96
    %v3092 = vpop.permute.xlu0 %3091
    %3093 = vrot.lane.b32.xlu0 %v491, 96
    %v3094 = vpop.permute.xlu0 %3093
    %3095 = vrot.lane.b32.xlu0 %v497, 96
    %v3096 = vpop.permute.xlu0 %3095
    %3097 = vrot.lane.b32.xlu0 %v501, 96
    %v3098 = vpop.permute.xlu0 %3097
    %3107 = vrot.lane.b32.xlu0 %v467, 88
    %v3108 = vpop.permute.xlu0 %3107
    %3109 = vrot.lane.b32.xlu0 %v471, 88
    %v3110 = vpop.permute.xlu0 %3109
    %3111 = vrot.lane.b32.xlu0 %v477, 88
    %v3112 = vpop.permute.xlu0 %3111
    %3113 = vrot.lane.b32.xlu0 %v481, 88
    %v3114 = vpop.permute.xlu0 %3113
    %3115 = vrot.lane.b32.xlu0 %v487, 88
    %v3116 = vpop.permute.xlu0 %3115
    %3117 = vrot.lane.b32.xlu0 %v491, 88
    %v3118 = vpop.permute.xlu0 %3117
    %3119 = vrot.lane.b32.xlu0 %v497, 88
    %v3120 = vpop.permute.xlu0 %3119
    %3121 = vrot.lane.b32.xlu0 %v501, 88
    %v3122 = vpop.permute.xlu0 %3121
    %3131 = vrot.lane.b32.xlu0 %v467, 80
    %v3132 = vpop.permute.xlu0 %3131
    %3133 = vrot.lane.b32.xlu0 %v471, 80
    %v3134 = vpop.permute.xlu0 %3133
    %3135 = vrot.lane.b32.xlu0 %v477, 80
    %v3136 = vpop.permute.xlu0 %3135
    %3137 = vrot.lane.b32.xlu0 %v481, 80
    %v3138 = vpop.permute.xlu0 %3137
    %3139 = vrot.lane.b32.xlu0 %v487, 80
    %v3140 = vpop.permute.xlu0 %3139
    %3141 = vrot.lane.b32.xlu0 %v491, 80
    %v3142 = vpop.permute.xlu0 %3141
    %3143 = vrot.lane.b32.xlu0 %v497, 80
    %v3144 = vpop.permute.xlu0 %3143
    %3145 = vrot.lane.b32.xlu0 %v501, 80
    %v3146 = vpop.permute.xlu0 %3145
    %3155 = vrot.lane.b32.xlu0 %v467, 72
    %v3156 = vpop.permute.xlu0 %3155
    %3157 = vrot.lane.b32.xlu0 %v471, 72
    %v3158 = vpop.permute.xlu0 %3157
    %3159 = vrot.lane.b32.xlu0 %v477, 72
    %v3160 = vpop.permute.xlu0 %3159
    %3161 = vrot.lane.b32.xlu0 %v481, 72
    %v3162 = vpop.permute.xlu0 %3161
    %3163 = vrot.lane.b32.xlu0 %v487, 72
    %v3164 = vpop.permute.xlu0 %3163
    %3165 = vrot.lane.b32.xlu0 %v491, 72
    %v3166 = vpop.permute.xlu0 %3165
    %3167 = vrot.lane.b32.xlu0 %v497, 72
    %v3168 = vpop.permute.xlu0 %3167
    %3169 = vrot.lane.b32.xlu0 %v501, 72
    %v3170 = vpop.permute.xlu0 %3169
    %3187 = vrot.lane.b32.xlu0 %v469, 120
    %v3188 = vpop.permute.xlu0 %3187
    %3189 = vrot.lane.b32.xlu0 %v473, 120
    %v3190 = vpop.permute.xlu0 %3189
    %3191 = vrot.lane.b32.xlu0 %v479, 120
    %v3192 = vpop.permute.xlu0 %3191
    %3193 = vrot.lane.b32.xlu0 %v483, 120
    %v3194 = vpop.permute.xlu0 %3193
    %3195 = vrot.lane.b32.xlu0 %v489, 120
    %v3196 = vpop.permute.xlu0 %3195
    %3197 = vrot.lane.b32.xlu0 %v493, 120
    %v3198 = vpop.permute.xlu0 %3197
    %3199 = vrot.lane.b32.xlu0 %v499, 120
    %v3200 = vpop.permute.xlu0 %3199
    %3201 = vrot.lane.b32.xlu0 %v503, 120
    %v3202 = vpop.permute.xlu0 %3201
    %3211 = vrot.lane.b32.xlu0 %v469, 112
    %v3212 = vpop.permute.xlu0 %3211
    %3213 = vrot.lane.b32.xlu0 %v473, 112
    %v3214 = vpop.permute.xlu0 %3213
    %3215 = vrot.lane.b32.xlu0 %v479, 112
    %v3216 = vpop.permute.xlu0 %3215
    %3217 = vrot.lane.b32.xlu0 %v483, 112
    %v3218 = vpop.permute.xlu0 %3217
    %3219 = vrot.lane.b32.xlu0 %v489, 112
    %v3220 = vpop.permute.xlu0 %3219
    %3221 = vrot.lane.b32.xlu0 %v493, 112
    %v3222 = vpop.permute.xlu0 %3221
    %3223 = vrot.lane.b32.xlu0 %v499, 112
    %v3224 = vpop.permute.xlu0 %3223
    %3225 = vrot.lane.b32.xlu0 %v503, 112
    %v3226 = vpop.permute.xlu0 %3225
    %3235 = vrot.lane.b32.xlu0 %v469, 104
    %v3236 = vpop.permute.xlu0 %3235
    %3237 = vrot.lane.b32.xlu0 %v473, 104
    %v3238 = vpop.permute.xlu0 %3237
    %3239 = vrot.lane.b32.xlu0 %v479, 104
    %v3240 = vpop.permute.xlu0 %3239
    %3241 = vrot.lane.b32.xlu0 %v483, 104
    %v3242 = vpop.permute.xlu0 %3241
    %3243 = vrot.lane.b32.xlu0 %v489, 104
    %v3244 = vpop.permute.xlu0 %3243
    %3245 = vrot.lane.b32.xlu0 %v493, 104
    %v3246 = vpop.permute.xlu0 %3245
    %3247 = vrot.lane.b32.xlu0 %v499, 104
    %v3248 = vpop.permute.xlu0 %3247
    %3249 = vrot.lane.b32.xlu0 %v503, 104
    %v3250 = vpop.permute.xlu0 %3249
    %3259 = vrot.lane.b32.xlu0 %v469, 96
    %v3260 = vpop.permute.xlu0 %3259
    %3261 = vrot.lane.b32.xlu0 %v473, 96
    %v3262 = vpop.permute.xlu0 %3261
    %3263 = vrot.lane.b32.xlu0 %v479, 96
    %v3264 = vpop.permute.xlu0 %3263
    %3265 = vrot.lane.b32.xlu0 %v483, 96
    %v3266 = vpop.permute.xlu0 %3265
    %3267 = vrot.lane.b32.xlu0 %v489, 96
    %v3268 = vpop.permute.xlu0 %3267
    %3269 = vrot.lane.b32.xlu0 %v493, 96
    %v3270 = vpop.permute.xlu0 %3269
    %3271 = vrot.lane.b32.xlu0 %v499, 96
    %v3272 = vpop.permute.xlu0 %3271
    %3273 = vrot.lane.b32.xlu0 %v503, 96
    %v3274 = vpop.permute.xlu0 %3273
    %3283 = vrot.lane.b32.xlu0 %v469, 88
    %v3284 = vpop.permute.xlu0 %3283
    %3285 = vrot.lane.b32.xlu0 %v473, 88
    %v3286 = vpop.permute.xlu0 %3285
    %3287 = vrot.lane.b32.xlu0 %v479, 88
    %v3288 = vpop.permute.xlu0 %3287
    %3289 = vrot.lane.b32.xlu0 %v483, 88
    %v3290 = vpop.permute.xlu0 %3289
    %3291 = vrot.lane.b32.xlu0 %v489, 88
    %v3292 = vpop.permute.xlu0 %3291
    %3293 = vrot.lane.b32.xlu0 %v493, 88
    %v3294 = vpop.permute.xlu0 %3293
    %3295 = vrot.lane.b32.xlu0 %v499, 88
    %v3296 = vpop.permute.xlu0 %3295
    %3297 = vrot.lane.b32.xlu0 %v503, 88
    %v3298 = vpop.permute.xlu0 %3297
    %3307 = vrot.lane.b32.xlu0 %v469, 80
    %v3308 = vpop.permute.xlu0 %3307
    %3309 = vrot.lane.b32.xlu0 %v473, 80
    %v3310 = vpop.permute.xlu0 %3309
    %3311 = vrot.lane.b32.xlu0 %v479, 80
    %v3312 = vpop.permute.xlu0 %3311
    %3313 = vrot.lane.b32.xlu0 %v483, 80
    %v3314 = vpop.permute.xlu0 %3313
    %3315 = vrot.lane.b32.xlu0 %v489, 80
    %v3316 = vpop.permute.xlu0 %3315
    %3317 = vrot.lane.b32.xlu0 %v493, 80
    %v3318 = vpop.permute.xlu0 %3317
    %3319 = vrot.lane.b32.xlu0 %v499, 80
    %v3320 = vpop.permute.xlu0 %3319
    %3321 = vrot.lane.b32.xlu0 %v503, 80
    %v3322 = vpop.permute.xlu0 %3321
    %3331 = vrot.lane.b32.xlu0 %v469, 72
    %v3332 = vpop.permute.xlu0 %3331
    %3333 = vrot.lane.b32.xlu0 %v473, 72
    %v3334 = vpop.permute.xlu0 %3333
    %3335 = vrot.lane.b32.xlu0 %v479, 72
    %v3336 = vpop.permute.xlu0 %3335
    %3337 = vrot.lane.b32.xlu0 %v483, 72
    %v3338 = vpop.permute.xlu0 %3337
    %3339 = vrot.lane.b32.xlu0 %v489, 72
    %v3340 = vpop.permute.xlu0 %3339
    %3341 = vrot.lane.b32.xlu0 %v493, 72
    %v3342 = vpop.permute.xlu0 %3341
    %3343 = vrot.lane.b32.xlu0 %v499, 72
    %v3344 = vpop.permute.xlu0 %3343
    %3345 = vrot.lane.b32.xlu0 %v503, 72
    %v3346 = vpop.permute.xlu0 %3345
    %v3355 = vpack.c.bf16 %v471, %v467
    %v3356 = vpack.c.bf16 %v481, %v477
    %v3357 = vpack.c.bf16 %v491, %v487
    %v3358 = vpack.c.bf16 %v501, %v497
    %v3359 = vpack.c.bf16 %v3014, %v3012
    %v3360 = vpack.c.bf16 %v3018, %v3016
    %v3361 = vpack.c.bf16 %v3022, %v3020
    %v3362 = vpack.c.bf16 %v3026, %v3024
    %v3363 = vpack.c.bf16 %v3038, %v3036
    %v3364 = vpack.c.bf16 %v3042, %v3040
    %v3365 = vpack.c.bf16 %v3046, %v3044
    %v3366 = vpack.c.bf16 %v3050, %v3048
    %v3367 = vpack.c.bf16 %v3062, %v3060
    %v3368 = vpack.c.bf16 %v3066, %v3064
    %v3369 = vpack.c.bf16 %v3070, %v3068
    %v3370 = vpack.c.bf16 %v3074, %v3072
    %v3371 = vpack.c.bf16 %v3086, %v3084
    %v3372 = vpack.c.bf16 %v3090, %v3088
    %v3373 = vpack.c.bf16 %v3094, %v3092
    %v3374 = vpack.c.bf16 %v3098, %v3096
    %v3375 = vpack.c.bf16 %v3110, %v3108
    %v3376 = vpack.c.bf16 %v3114, %v3112
    %v3377 = vpack.c.bf16 %v3118, %v3116
    %v3378 = vpack.c.bf16 %v3122, %v3120
    %v3379 = vpack.c.bf16 %v3134, %v3132
    %v3380 = vpack.c.bf16 %v3138, %v3136
    %v3381 = vpack.c.bf16 %v3142, %v3140
    %v3382 = vpack.c.bf16 %v3146, %v3144
    %v3383 = vpack.c.bf16 %v3158, %v3156
    %v3384 = vpack.c.bf16 %v3162, %v3160
    %v3385 = vpack.c.bf16 %v3166, %v3164
    %v3386 = vpack.c.bf16 %v3170, %v3168
    %3391 = vrot.lane.b32.xlu0 %v3355, 64
    %v3392 = vpop.permute.xlu0 %3391
    %3393 = vrot.lane.b32.xlu0 %v3356, 64
    %v3394 = vpop.permute.xlu0 %3393
    %3395 = vrot.lane.b32.xlu0 %v3357, 64
    %v3396 = vpop.permute.xlu0 %3395
    %3397 = vrot.lane.b32.xlu0 %v3358, 64
    %v3398 = vpop.permute.xlu0 %3397
    %v3400 = vsel %vm901, %v3355, 0
    %v3403 = vsel %vm901, %v3356, 0
    %v3406 = vsel %vm901, %v3357, 0
    %v3409 = vsel %vm901, %v3358, 0
    %v3412 = vsel %vm901, %v3392, 0
    %v3415 = vsel %vm901, %v3394, 0
    %v3418 = vsel %vm901, %v3396, 0
    %v3421 = vsel %vm901, %v3398, 0
    %3423 = vmatprep.subr.bf16.mxu0 0
    %3424 = vmatpush1.bf16.xpose.msra.mxu0 0
    %3425 = vmatprep.subr.bf16.mxu0 0
    %3426 = vmatpush1.bf16.xpose.msra.mxu0 0
    %3427 = vmatprep.subr.bf16.mxu0 0
    %3428 = vmatpush1.bf16.xpose.msra.mxu0 0
    %3429 = vmatprep.subr.bf16.mxu0 0
    %3430 = vmatpush1.bf16.xpose.msra.mxu0 0
    %3431 = vmatprep.subr.bf16.mxu0 0
    %3432 = vmatpush1.bf16.xpose.msra.mxu0 %v3421
    %3433 = vmatprep.subr.bf16.mxu0 0
    %3434 = vmatpush1.bf16.xpose.msra.mxu0 %v3418
    %3435 = vmatprep.subr.bf16.mxu0 0
    %3436 = vmatpush1.bf16.xpose.msra.mxu0 %v3415
    %3437 = vmatprep.subr.bf16.mxu0 0
    %3438 = vmatpush1.bf16.xpose.msra.mxu0 %v3412
    %3439 = vmatprep.subr.bf16.mxu0 0
    %3440 = vmatpush2.bf16.xpose.msra.mxu0 0
    %3441 = vmatprep.subr.bf16.mxu0 0
    %3442 = vmatpush2.bf16.xpose.msra.mxu0 0
    %3443 = vmatprep.subr.bf16.mxu0 0
    %3444 = vmatpush2.bf16.xpose.msra.mxu0 0
    %3445 = vmatprep.subr.bf16.mxu0 0
    %3446 = vmatpush2.bf16.xpose.msra.mxu0 0
    %3447 = vmatprep.subr.bf16.mxu0 0
    %3448 = vmatpush2.bf16.xpose.msra.mxu0 0
    %3449 = vmatprep.subr.bf16.mxu0 0
    %3450 = vmatpush2.bf16.xpose.msra.mxu0 0
    %3451 = vmatprep.subr.bf16.mxu0 0
    %3452 = vmatpush2.bf16.xpose.msra.mxu0 0
    %3453 = vmatprep.subr.bf16.mxu0 0
    %3454 = vmatpush2.bf16.xpose.msra.mxu0 0
    %3455 = vmatprep.mubr.bf16.mxu0 0
    %3456 = vmatmul.mubr.bf16.gmra.mxu0 %v3400
    %v3457 = vpop.f32.mrf.mxu0
    %v3458 = vadd.f32 0.0, %v3457
    %v3459 = vpop.f32.mrf.mxu0
    %v3460 = vpop.f32.mrf.mxu0
    %v3461 = vadd.f32 0.0, %v3460
    %v3462 = vpop.f32.mrf.mxu0
    %3463 = vmatprep.mubr.bf16.mxu0 0
    %3464 = vmatmul.mubr.bf16.gmra.mxu0 %v3403
    %v3465 = vpop.f32.mrf.mxu0
    %v3466 = vadd.f32 0.0, %v3465
    %v3467 = vpop.f32.mrf.mxu0
    %v3468 = vpop.f32.mrf.mxu0
    %v3469 = vadd.f32 0.0, %v3468
    %v3470 = vpop.f32.mrf.mxu0
    %3471 = vmatprep.mubr.bf16.mxu0 0
    %3472 = vmatmul.mubr.bf16.gmra.mxu0 %v3406
    %v3473 = vpop.f32.mrf.mxu0
    %v3474 = vadd.f32 0.0, %v3473
    %v3475 = vpop.f32.mrf.mxu0
    %v3476 = vpop.f32.mrf.mxu0
    %v3477 = vadd.f32 0.0, %v3476
    %v3478 = vpop.f32.mrf.mxu0
    %3479 = vmatprep.mubr.bf16.mxu0 0
    %3480 = vmatmul.mubr.bf16.gmra.mxu0 %v3409
    %v3481 = vpop.f32.mrf.mxu0
    %v3482 = vadd.f32 0.0, %v3481
    %v3483 = vpop.f32.mrf.mxu0
    %v3484 = vpop.f32.mrf.mxu0
    %v3485 = vadd.f32 0.0, %v3484
    %v3486 = vpop.f32.mrf.mxu0
    %3487 = vdwg.mxu0
    %3492 = vrot.lane.b32.xlu0 %v3359, 64
    %v3493 = vpop.permute.xlu0 %3492
    %3494 = vrot.lane.b32.xlu0 %v3360, 64
    %v3495 = vpop.permute.xlu0 %3494
    %3496 = vrot.lane.b32.xlu0 %v3361, 64
    %v3497 = vpop.permute.xlu0 %3496
    %3498 = vrot.lane.b32.xlu0 %v3362, 64
    %v3499 = vpop.permute.xlu0 %3498
    %v3501 = vsel %vm901, %v3359, 0
    %v3504 = vsel %vm901, %v3360, 0
    %v3507 = vsel %vm901, %v3361, 0
    %v3510 = vsel %vm901, %v3362, 0
    %v3513 = vsel %vm901, %v3493, 0
    %v3516 = vsel %vm901, %v3495, 0
    %v3519 = vsel %vm901, %v3497, 0
    %v3522 = vsel %vm901, %v3499, 0
    %3524 = vmatprep.subr.bf16.mxu0 0
    %3525 = vmatpush1.bf16.xpose.msra.mxu0 0
    %3526 = vmatprep.subr.bf16.mxu0 0
    %3527 = vmatpush1.bf16.xpose.msra.mxu0 0
    %3528 = vmatprep.subr.bf16.mxu0 0
    %3529 = vmatpush1.bf16.xpose.msra.mxu0 0
    %3530 = vmatprep.subr.bf16.mxu0 0
    %3531 = vmatpush1.bf16.xpose.msra.mxu0 0
    %3532 = vmatprep.subr.bf16.mxu0 0
    %3533 = vmatpush1.bf16.xpose.msra.mxu0 %v3522
    %3534 = vmatprep.subr.bf16.mxu0 0
    %3535 = vmatpush1.bf16.xpose.msra.mxu0 %v3519
    %3536 = vmatprep.subr.bf16.mxu0 0
    %3537 = vmatpush1.bf16.xpose.msra.mxu0 %v3516
    %3538 = vmatprep.subr.bf16.mxu0 0
    %3539 = vmatpush1.bf16.xpose.msra.mxu0 %v3513
    %3540 = vmatprep.subr.bf16.mxu0 0
    %3541 = vmatpush2.bf16.xpose.msra.mxu0 0
    %3542 = vmatprep.subr.bf16.mxu0 0
    %3543 = vmatpush2.bf16.xpose.msra.mxu0 0
    %3544 = vmatprep.subr.bf16.mxu0 0
    %3545 = vmatpush2.bf16.xpose.msra.mxu0 0
    %3546 = vmatprep.subr.bf16.mxu0 0
    %3547 = vmatpush2.bf16.xpose.msra.mxu0 0
    %3548 = vmatprep.subr.bf16.mxu0 0
    %3549 = vmatpush2.bf16.xpose.msra.mxu0 0
    %3550 = vmatprep.subr.bf16.mxu0 0
    %3551 = vmatpush2.bf16.xpose.msra.mxu0 0
    %3552 = vmatprep.subr.bf16.mxu0 0
    %3553 = vmatpush2.bf16.xpose.msra.mxu0 0
    %3554 = vmatprep.subr.bf16.mxu0 0
    %3555 = vmatpush2.bf16.xpose.msra.mxu0 0
    %3556 = vmatprep.mubr.bf16.mxu0 0
    %3557 = vmatmul.mubr.bf16.gmra.mxu0 %v3501
    %v3558 = vpop.f32.mrf.mxu0
    %v3559 = vadd.f32 0.0, %v3558
    %v3560 = vpop.f32.mrf.mxu0
    %v3561 = vpop.f32.mrf.mxu0
    %v3562 = vadd.f32 0.0, %v3561
    %v3563 = vpop.f32.mrf.mxu0
    %3564 = vmatprep.mubr.bf16.mxu0 0
    %3565 = vmatmul.mubr.bf16.gmra.mxu0 %v3504
    %v3566 = vpop.f32.mrf.mxu0
    %v3567 = vadd.f32 0.0, %v3566
    %v3568 = vpop.f32.mrf.mxu0
    %v3569 = vpop.f32.mrf.mxu0
    %v3570 = vadd.f32 0.0, %v3569
    %v3571 = vpop.f32.mrf.mxu0
    %3572 = vmatprep.mubr.bf16.mxu0 0
    %3573 = vmatmul.mubr.bf16.gmra.mxu0 %v3507
    %v3574 = vpop.f32.mrf.mxu0
    %v3575 = vadd.f32 0.0, %v3574
    %v3576 = vpop.f32.mrf.mxu0
    %v3577 = vpop.f32.mrf.mxu0
    %v3578 = vadd.f32 0.0, %v3577
    %v3579 = vpop.f32.mrf.mxu0
    %3580 = vmatprep.mubr.bf16.mxu0 0
    %3581 = vmatmul.mubr.bf16.gmra.mxu0 %v3510
    %v3582 = vpop.f32.mrf.mxu0
    %v3583 = vadd.f32 0.0, %v3582
    %v3584 = vpop.f32.mrf.mxu0
    %v3585 = vpop.f32.mrf.mxu0
    %v3586 = vadd.f32 0.0, %v3585
    %v3587 = vpop.f32.mrf.mxu0
    %3588 = vdwg.mxu0
    %3593 = vrot.lane.b32.xlu0 %v3363, 64
    %v3594 = vpop.permute.xlu0 %3593
    %3595 = vrot.lane.b32.xlu0 %v3364, 64
    %v3596 = vpop.permute.xlu0 %3595
    %3597 = vrot.lane.b32.xlu0 %v3365, 64
    %v3598 = vpop.permute.xlu0 %3597
    %3599 = vrot.lane.b32.xlu0 %v3366, 64
    %v3600 = vpop.permute.xlu0 %3599
    %v3602 = vsel %vm901, %v3363, 0
    %v3605 = vsel %vm901, %v3364, 0
    %v3608 = vsel %vm901, %v3365, 0
    %v3611 = vsel %vm901, %v3366, 0
    %v3614 = vsel %vm901, %v3594, 0
    %v3617 = vsel %vm901, %v3596, 0
    %v3620 = vsel %vm901, %v3598, 0
    %v3623 = vsel %vm901, %v3600, 0
    %3625 = vmatprep.subr.bf16.mxu0 0
    %3626 = vmatpush1.bf16.xpose.msra.mxu0 0
    %3627 = vmatprep.subr.bf16.mxu0 0
    %3628 = vmatpush1.bf16.xpose.msra.mxu0 0
    %3629 = vmatprep.subr.bf16.mxu0 0
    %3630 = vmatpush1.bf16.xpose.msra.mxu0 0
    %3631 = vmatprep.subr.bf16.mxu0 0
    %3632 = vmatpush1.bf16.xpose.msra.mxu0 0
    %3633 = vmatprep.subr.bf16.mxu0 0
    %3634 = vmatpush1.bf16.xpose.msra.mxu0 %v3623
    %3635 = vmatprep.subr.bf16.mxu0 0
    %3636 = vmatpush1.bf16.xpose.msra.mxu0 %v3620
    %3637 = vmatprep.subr.bf16.mxu0 0
    %3638 = vmatpush1.bf16.xpose.msra.mxu0 %v3617
    %3639 = vmatprep.subr.bf16.mxu0 0
    %3640 = vmatpush1.bf16.xpose.msra.mxu0 %v3614
    %3641 = vmatprep.subr.bf16.mxu0 0
    %3642 = vmatpush2.bf16.xpose.msra.mxu0 0
    %3643 = vmatprep.subr.bf16.mxu0 0
    %3644 = vmatpush2.bf16.xpose.msra.mxu0 0
    %3645 = vmatprep.subr.bf16.mxu0 0
    %3646 = vmatpush2.bf16.xpose.msra.mxu0 0
    %3647 = vmatprep.subr.bf16.mxu0 0
    %3648 = vmatpush2.bf16.xpose.msra.mxu0 0
    %3649 = vmatprep.subr.bf16.mxu0 0
    %3650 = vmatpush2.bf16.xpose.msra.mxu0 0
    %3651 = vmatprep.subr.bf16.mxu0 0
    %3652 = vmatpush2.bf16.xpose.msra.mxu0 0
    %3653 = vmatprep.subr.bf16.mxu0 0
    %3654 = vmatpush2.bf16.xpose.msra.mxu0 0
    %3655 = vmatprep.subr.bf16.mxu0 0
    %3656 = vmatpush2.bf16.xpose.msra.mxu0 0
    %3657 = vmatprep.mubr.bf16.mxu0 0
    %3658 = vmatmul.mubr.bf16.gmra.mxu0 %v3602
    %v3659 = vpop.f32.mrf.mxu0
    %v3660 = vadd.f32 0.0, %v3659
    %v3661 = vpop.f32.mrf.mxu0
    %v3662 = vpop.f32.mrf.mxu0
    %v3663 = vadd.f32 0.0, %v3662
    %v3664 = vpop.f32.mrf.mxu0
    %3665 = vmatprep.mubr.bf16.mxu0 0
    %3666 = vmatmul.mubr.bf16.gmra.mxu0 %v3605
    %v3667 = vpop.f32.mrf.mxu0
    %v3668 = vadd.f32 0.0, %v3667
    %v3669 = vpop.f32.mrf.mxu0
    %v3670 = vpop.f32.mrf.mxu0
    %v3671 = vadd.f32 0.0, %v3670
    %v3672 = vpop.f32.mrf.mxu0
    %3673 = vmatprep.mubr.bf16.mxu0 0
    %3674 = vmatmul.mubr.bf16.gmra.mxu0 %v3608
    %v3675 = vpop.f32.mrf.mxu0
    %v3676 = vadd.f32 0.0, %v3675
    %v3677 = vpop.f32.mrf.mxu0
    %v3678 = vpop.f32.mrf.mxu0
    %v3679 = vadd.f32 0.0, %v3678
    %v3680 = vpop.f32.mrf.mxu0
    %3681 = vmatprep.mubr.bf16.mxu0 0
    %3682 = vmatmul.mubr.bf16.gmra.mxu0 %v3611
    %v3683 = vpop.f32.mrf.mxu0
    %v3684 = vadd.f32 0.0, %v3683
    %v3685 = vpop.f32.mrf.mxu0
    %v3686 = vpop.f32.mrf.mxu0
    %v3687 = vadd.f32 0.0, %v3686
    %v3688 = vpop.f32.mrf.mxu0
    %3689 = vdwg.mxu0
    %3694 = vrot.lane.b32.xlu0 %v3367, 64
    %v3695 = vpop.permute.xlu0 %3694
    %3696 = vrot.lane.b32.xlu0 %v3368, 64
    %v3697 = vpop.permute.xlu0 %3696
    %3698 = vrot.lane.b32.xlu0 %v3369, 64
    %v3699 = vpop.permute.xlu0 %3698
    %3700 = vrot.lane.b32.xlu0 %v3370, 64
    %v3701 = vpop.permute.xlu0 %3700
    %v3703 = vsel %vm901, %v3367, 0
    %v3706 = vsel %vm901, %v3368, 0
    %v3709 = vsel %vm901, %v3369, 0
    %v3712 = vsel %vm901, %v3370, 0
    %v3715 = vsel %vm901, %v3695, 0
    %v3718 = vsel %vm901, %v3697, 0
    %v3721 = vsel %vm901, %v3699, 0
    %v3724 = vsel %vm901, %v3701, 0
    %3726 = vmatprep.subr.bf16.mxu0 0
    %3727 = vmatpush1.bf16.xpose.msra.mxu0 0
    %3728 = vmatprep.subr.bf16.mxu0 0
    %3729 = vmatpush1.bf16.xpose.msra.mxu0 0
    %3730 = vmatprep.subr.bf16.mxu0 0
    %3731 = vmatpush1.bf16.xpose.msra.mxu0 0
    %3732 = vmatprep.subr.bf16.mxu0 0
    %3733 = vmatpush1.bf16.xpose.msra.mxu0 0
    %3734 = vmatprep.subr.bf16.mxu0 0
    %3735 = vmatpush1.bf16.xpose.msra.mxu0 %v3724
    %3736 = vmatprep.subr.bf16.mxu0 0
    %3737 = vmatpush1.bf16.xpose.msra.mxu0 %v3721
    %3738 = vmatprep.subr.bf16.mxu0 0
    %3739 = vmatpush1.bf16.xpose.msra.mxu0 %v3718
    %3740 = vmatprep.subr.bf16.mxu0 0
    %3741 = vmatpush1.bf16.xpose.msra.mxu0 %v3715
    %3742 = vmatprep.subr.bf16.mxu0 0
    %3743 = vmatpush2.bf16.xpose.msra.mxu0 0
    %3744 = vmatprep.subr.bf16.mxu0 0
    %3745 = vmatpush2.bf16.xpose.msra.mxu0 0
    %3746 = vmatprep.subr.bf16.mxu0 0
    %3747 = vmatpush2.bf16.xpose.msra.mxu0 0
    %3748 = vmatprep.subr.bf16.mxu0 0
    %3749 = vmatpush2.bf16.xpose.msra.mxu0 0
    %3750 = vmatprep.subr.bf16.mxu0 0
    %3751 = vmatpush2.bf16.xpose.msra.mxu0 0
    %3752 = vmatprep.subr.bf16.mxu0 0
    %3753 = vmatpush2.bf16.xpose.msra.mxu0 0
    %3754 = vmatprep.subr.bf16.mxu0 0
    %3755 = vmatpush2.bf16.xpose.msra.mxu0 0
    %3756 = vmatprep.subr.bf16.mxu0 0
    %3757 = vmatpush2.bf16.xpose.msra.mxu0 0
    %3758 = vmatprep.mubr.bf16.mxu0 0
    %3759 = vmatmul.mubr.bf16.gmra.mxu0 %v3703
    %v3760 = vpop.f32.mrf.mxu0
    %v3761 = vadd.f32 0.0, %v3760
    %v3762 = vpop.f32.mrf.mxu0
    %v3763 = vpop.f32.mrf.mxu0
    %v3764 = vadd.f32 0.0, %v3763
    %v3765 = vpop.f32.mrf.mxu0
    %3766 = vmatprep.mubr.bf16.mxu0 0
    %3767 = vmatmul.mubr.bf16.gmra.mxu0 %v3706
    %v3768 = vpop.f32.mrf.mxu0
    %v3769 = vadd.f32 0.0, %v3768
    %v3770 = vpop.f32.mrf.mxu0
    %v3771 = vpop.f32.mrf.mxu0
    %v3772 = vadd.f32 0.0, %v3771
    %v3773 = vpop.f32.mrf.mxu0
    %3774 = vmatprep.mubr.bf16.mxu0 0
    %3775 = vmatmul.mubr.bf16.gmra.mxu0 %v3709
    %v3776 = vpop.f32.mrf.mxu0
    %v3777 = vadd.f32 0.0, %v3776
    %v3778 = vpop.f32.mrf.mxu0
    %v3779 = vpop.f32.mrf.mxu0
    %v3780 = vadd.f32 0.0, %v3779
    %v3781 = vpop.f32.mrf.mxu0
    %3782 = vmatprep.mubr.bf16.mxu0 0
    %3783 = vmatmul.mubr.bf16.gmra.mxu0 %v3712
    %v3784 = vpop.f32.mrf.mxu0
    %v3785 = vadd.f32 0.0, %v3784
    %v3786 = vpop.f32.mrf.mxu0
    %v3787 = vpop.f32.mrf.mxu0
    %v3788 = vadd.f32 0.0, %v3787
    %v3789 = vpop.f32.mrf.mxu0
    %3790 = vdwg.mxu0
    %3795 = vrot.lane.b32.xlu0 %v3371, 64
    %v3796 = vpop.permute.xlu0 %3795
    %3797 = vrot.lane.b32.xlu0 %v3372, 64
    %v3798 = vpop.permute.xlu0 %3797
    %3799 = vrot.lane.b32.xlu0 %v3373, 64
    %v3800 = vpop.permute.xlu0 %3799
    %3801 = vrot.lane.b32.xlu0 %v3374, 64
    %v3802 = vpop.permute.xlu0 %3801
    %v3804 = vsel %vm901, %v3371, 0
    %v3807 = vsel %vm901, %v3372, 0
    %v3810 = vsel %vm901, %v3373, 0
    %v3813 = vsel %vm901, %v3374, 0
    %v3816 = vsel %vm901, %v3796, 0
    %v3819 = vsel %vm901, %v3798, 0
    %v3822 = vsel %vm901, %v3800, 0
    %v3825 = vsel %vm901, %v3802, 0
    %3827 = vmatprep.subr.bf16.mxu0 0
    %3828 = vmatpush1.bf16.xpose.msra.mxu0 0
    %3829 = vmatprep.subr.bf16.mxu0 0
    %3830 = vmatpush1.bf16.xpose.msra.mxu0 0
    %3831 = vmatprep.subr.bf16.mxu0 0
    %3832 = vmatpush1.bf16.xpose.msra.mxu0 0
    %3833 = vmatprep.subr.bf16.mxu0 0
    %3834 = vmatpush1.bf16.xpose.msra.mxu0 0
    %3835 = vmatprep.subr.bf16.mxu0 0
    %3836 = vmatpush1.bf16.xpose.msra.mxu0 %v3825
    %3837 = vmatprep.subr.bf16.mxu0 0
    %3838 = vmatpush1.bf16.xpose.msra.mxu0 %v3822
    %3839 = vmatprep.subr.bf16.mxu0 0
    %3840 = vmatpush1.bf16.xpose.msra.mxu0 %v3819
    %3841 = vmatprep.subr.bf16.mxu0 0
    %3842 = vmatpush1.bf16.xpose.msra.mxu0 %v3816
    %3843 = vmatprep.subr.bf16.mxu0 0
    %3844 = vmatpush2.bf16.xpose.msra.mxu0 0
    %3845 = vmatprep.subr.bf16.mxu0 0
    %3846 = vmatpush2.bf16.xpose.msra.mxu0 0
    %3847 = vmatprep.subr.bf16.mxu0 0
    %3848 = vmatpush2.bf16.xpose.msra.mxu0 0
    %3849 = vmatprep.subr.bf16.mxu0 0
    %3850 = vmatpush2.bf16.xpose.msra.mxu0 0
    %3851 = vmatprep.subr.bf16.mxu0 0
    %3852 = vmatpush2.bf16.xpose.msra.mxu0 0
    %3853 = vmatprep.subr.bf16.mxu0 0
    %3854 = vmatpush2.bf16.xpose.msra.mxu0 0
    %3855 = vmatprep.subr.bf16.mxu0 0
    %3856 = vmatpush2.bf16.xpose.msra.mxu0 0
    %3857 = vmatprep.subr.bf16.mxu0 0
    %3858 = vmatpush2.bf16.xpose.msra.mxu0 0
    %3859 = vmatprep.mubr.bf16.mxu0 0
    %3860 = vmatmul.mubr.bf16.gmra.mxu0 %v3804
    %v3861 = vpop.f32.mrf.mxu0
    %v3862 = vadd.f32 0.0, %v3861
    %v3863 = vpop.f32.mrf.mxu0
    %v3864 = vpop.f32.mrf.mxu0
    %v3865 = vadd.f32 0.0, %v3864
    %v3866 = vpop.f32.mrf.mxu0
    %3867 = vmatprep.mubr.bf16.mxu0 0
    %3868 = vmatmul.mubr.bf16.gmra.mxu0 %v3807
    %v3869 = vpop.f32.mrf.mxu0
    %v3870 = vadd.f32 0.0, %v3869
    %v3871 = vpop.f32.mrf.mxu0
    %v3872 = vpop.f32.mrf.mxu0
    %v3873 = vadd.f32 0.0, %v3872
    %v3874 = vpop.f32.mrf.mxu0
    %3875 = vmatprep.mubr.bf16.mxu0 0
    %3876 = vmatmul.mubr.bf16.gmra.mxu0 %v3810
    %v3877 = vpop.f32.mrf.mxu0
    %v3878 = vadd.f32 0.0, %v3877
    %v3879 = vpop.f32.mrf.mxu0
    %v3880 = vpop.f32.mrf.mxu0
    %v3881 = vadd.f32 0.0, %v3880
    %v3882 = vpop.f32.mrf.mxu0
    %3883 = vmatprep.mubr.bf16.mxu0 0
    %3884 = vmatmul.mubr.bf16.gmra.mxu0 %v3813
    %v3885 = vpop.f32.mrf.mxu0
    %v3886 = vadd.f32 0.0, %v3885
    %v3887 = vpop.f32.mrf.mxu0
    %v3888 = vpop.f32.mrf.mxu0
    %v3889 = vadd.f32 0.0, %v3888
    %v3890 = vpop.f32.mrf.mxu0
    %3891 = vdwg.mxu0
    %3896 = vrot.lane.b32.xlu0 %v3375, 64
    %v3897 = vpop.permute.xlu0 %3896
    %3898 = vrot.lane.b32.xlu0 %v3376, 64
    %v3899 = vpop.permute.xlu0 %3898
    %3900 = vrot.lane.b32.xlu0 %v3377, 64
    %v3901 = vpop.permute.xlu0 %3900
    %3902 = vrot.lane.b32.xlu0 %v3378, 64
    %v3903 = vpop.permute.xlu0 %3902
    %v3905 = vsel %vm901, %v3375, 0
    %v3908 = vsel %vm901, %v3376, 0
    %v3911 = vsel %vm901, %v3377, 0
    %v3914 = vsel %vm901, %v3378, 0
    %v3917 = vsel %vm901, %v3897, 0
    %v3920 = vsel %vm901, %v3899, 0
    %v3923 = vsel %vm901, %v3901, 0
    %v3926 = vsel %vm901, %v3903, 0
    %3928 = vmatprep.subr.bf16.mxu0 0
    %3929 = vmatpush1.bf16.xpose.msra.mxu0 0
    %3930 = vmatprep.subr.bf16.mxu0 0
    %3931 = vmatpush1.bf16.xpose.msra.mxu0 0
    %3932 = vmatprep.subr.bf16.mxu0 0
    %3933 = vmatpush1.bf16.xpose.msra.mxu0 0
    %3934 = vmatprep.subr.bf16.mxu0 0
    %3935 = vmatpush1.bf16.xpose.msra.mxu0 0
    %3936 = vmatprep.subr.bf16.mxu0 0
    %3937 = vmatpush1.bf16.xpose.msra.mxu0 %v3926
    %3938 = vmatprep.subr.bf16.mxu0 0
    %3939 = vmatpush1.bf16.xpose.msra.mxu0 %v3923
    %3940 = vmatprep.subr.bf16.mxu0 0
    %3941 = vmatpush1.bf16.xpose.msra.mxu0 %v3920
    %3942 = vmatprep.subr.bf16.mxu0 0
    %3943 = vmatpush1.bf16.xpose.msra.mxu0 %v3917
    %3944 = vmatprep.subr.bf16.mxu0 0
    %3945 = vmatpush2.bf16.xpose.msra.mxu0 0
    %3946 = vmatprep.subr.bf16.mxu0 0
    %3947 = vmatpush2.bf16.xpose.msra.mxu0 0
    %3948 = vmatprep.subr.bf16.mxu0 0
    %3949 = vmatpush2.bf16.xpose.msra.mxu0 0
    %3950 = vmatprep.subr.bf16.mxu0 0
    %3951 = vmatpush2.bf16.xpose.msra.mxu0 0
    %3952 = vmatprep.subr.bf16.mxu0 0
    %3953 = vmatpush2.bf16.xpose.msra.mxu0 0
    %3954 = vmatprep.subr.bf16.mxu0 0
    %3955 = vmatpush2.bf16.xpose.msra.mxu0 0
    %3956 = vmatprep.subr.bf16.mxu0 0
    %3957 = vmatpush2.bf16.xpose.msra.mxu0 0
    %3958 = vmatprep.subr.bf16.mxu0 0
    %3959 = vmatpush2.bf16.xpose.msra.mxu0 0
    %3960 = vmatprep.mubr.bf16.mxu0 0
    %3961 = vmatmul.mubr.bf16.gmra.mxu0 %v3905
    %v3962 = vpop.f32.mrf.mxu0
    %v3963 = vadd.f32 0.0, %v3962
    %v3964 = vpop.f32.mrf.mxu0
    %v3965 = vpop.f32.mrf.mxu0
    %v3966 = vadd.f32 0.0, %v3965
    %v3967 = vpop.f32.mrf.mxu0
    %3968 = vmatprep.mubr.bf16.mxu0 0
    %3969 = vmatmul.mubr.bf16.gmra.mxu0 %v3908
    %v3970 = vpop.f32.mrf.mxu0
    %v3971 = vadd.f32 0.0, %v3970
    %v3972 = vpop.f32.mrf.mxu0
    %v3973 = vpop.f32.mrf.mxu0
    %v3974 = vadd.f32 0.0, %v3973
    %v3975 = vpop.f32.mrf.mxu0
    %3976 = vmatprep.mubr.bf16.mxu0 0
    %3977 = vmatmul.mubr.bf16.gmra.mxu0 %v3911
    %v3978 = vpop.f32.mrf.mxu0
    %v3979 = vadd.f32 0.0, %v3978
    %v3980 = vpop.f32.mrf.mxu0
    %v3981 = vpop.f32.mrf.mxu0
    %v3982 = vadd.f32 0.0, %v3981
    %v3983 = vpop.f32.mrf.mxu0
    %3984 = vmatprep.mubr.bf16.mxu0 0
    %3985 = vmatmul.mubr.bf16.gmra.mxu0 %v3914
    %v3986 = vpop.f32.mrf.mxu0
    %v3987 = vadd.f32 0.0, %v3986
    %v3988 = vpop.f32.mrf.mxu0
    %v3989 = vpop.f32.mrf.mxu0
    %v3990 = vadd.f32 0.0, %v3989
    %v3991 = vpop.f32.mrf.mxu0
    %3992 = vdwg.mxu0
    %3997 = vrot.lane.b32.xlu0 %v3379, 64
    %v3998 = vpop.permute.xlu0 %3997
    %3999 = vrot.lane.b32.xlu0 %v3380, 64
    %v4000 = vpop.permute.xlu0 %3999
    %4001 = vrot.lane.b32.xlu0 %v3381, 64
    %v4002 = vpop.permute.xlu0 %4001
    %4003 = vrot.lane.b32.xlu0 %v3382, 64
    %v4004 = vpop.permute.xlu0 %4003
    %v4006 = vsel %vm901, %v3379, 0
    %v4009 = vsel %vm901, %v3380, 0
    %v4012 = vsel %vm901, %v3381, 0
    %v4015 = vsel %vm901, %v3382, 0
    %v4018 = vsel %vm901, %v3998, 0
    %v4021 = vsel %vm901, %v4000, 0
    %v4024 = vsel %vm901, %v4002, 0
    %v4027 = vsel %vm901, %v4004, 0
    %4029 = vmatprep.subr.bf16.mxu0 0
    %4030 = vmatpush1.bf16.xpose.msra.mxu0 0
    %4031 = vmatprep.subr.bf16.mxu0 0
    %4032 = vmatpush1.bf16.xpose.msra.mxu0 0
    %4033 = vmatprep.subr.bf16.mxu0 0
    %4034 = vmatpush1.bf16.xpose.msra.mxu0 0
    %4035 = vmatprep.subr.bf16.mxu0 0
    %4036 = vmatpush1.bf16.xpose.msra.mxu0 0
    %4037 = vmatprep.subr.bf16.mxu0 0
    %4038 = vmatpush1.bf16.xpose.msra.mxu0 %v4027
    %4039 = vmatprep.subr.bf16.mxu0 0
    %4040 = vmatpush1.bf16.xpose.msra.mxu0 %v4024
    %4041 = vmatprep.subr.bf16.mxu0 0
    %4042 = vmatpush1.bf16.xpose.msra.mxu0 %v4021
    %4043 = vmatprep.subr.bf16.mxu0 0
    %4044 = vmatpush1.bf16.xpose.msra.mxu0 %v4018
    %4045 = vmatprep.subr.bf16.mxu0 0
    %4046 = vmatpush2.bf16.xpose.msra.mxu0 0
    %4047 = vmatprep.subr.bf16.mxu0 0
    %4048 = vmatpush2.bf16.xpose.msra.mxu0 0
    %4049 = vmatprep.subr.bf16.mxu0 0
    %4050 = vmatpush2.bf16.xpose.msra.mxu0 0
    %4051 = vmatprep.subr.bf16.mxu0 0
    %4052 = vmatpush2.bf16.xpose.msra.mxu0 0
    %4053 = vmatprep.subr.bf16.mxu0 0
    %4054 = vmatpush2.bf16.xpose.msra.mxu0 0
    %4055 = vmatprep.subr.bf16.mxu0 0
    %4056 = vmatpush2.bf16.xpose.msra.mxu0 0
    %4057 = vmatprep.subr.bf16.mxu0 0
    %4058 = vmatpush2.bf16.xpose.msra.mxu0 0
    %4059 = vmatprep.subr.bf16.mxu0 0
    %4060 = vmatpush2.bf16.xpose.msra.mxu0 0
    %4061 = vmatprep.mubr.bf16.mxu0 0
    %4062 = vmatmul.mubr.bf16.gmra.mxu0 %v4006
    %v4063 = vpop.f32.mrf.mxu0
    %v4064 = vadd.f32 0.0, %v4063
    %v4065 = vpop.f32.mrf.mxu0
    %v4066 = vpop.f32.mrf.mxu0
    %v4067 = vadd.f32 0.0, %v4066
    %v4068 = vpop.f32.mrf.mxu0
    %4069 = vmatprep.mubr.bf16.mxu0 0
    %4070 = vmatmul.mubr.bf16.gmra.mxu0 %v4009
    %v4071 = vpop.f32.mrf.mxu0
    %v4072 = vadd.f32 0.0, %v4071
    %v4073 = vpop.f32.mrf.mxu0
    %v4074 = vpop.f32.mrf.mxu0
    %v4075 = vadd.f32 0.0, %v4074
    %v4076 = vpop.f32.mrf.mxu0
    %4077 = vmatprep.mubr.bf16.mxu0 0
    %4078 = vmatmul.mubr.bf16.gmra.mxu0 %v4012
    %v4079 = vpop.f32.mrf.mxu0
    %v4080 = vadd.f32 0.0, %v4079
    %v4081 = vpop.f32.mrf.mxu0
    %v4082 = vpop.f32.mrf.mxu0
    %v4083 = vadd.f32 0.0, %v4082
    %v4084 = vpop.f32.mrf.mxu0
    %4085 = vmatprep.mubr.bf16.mxu0 0
    %4086 = vmatmul.mubr.bf16.gmra.mxu0 %v4015
    %v4087 = vpop.f32.mrf.mxu0
    %v4088 = vadd.f32 0.0, %v4087
    %v4089 = vpop.f32.mrf.mxu0
    %v4090 = vpop.f32.mrf.mxu0
    %v4091 = vadd.f32 0.0, %v4090
    %v4092 = vpop.f32.mrf.mxu0
    %4093 = vdwg.mxu0
    %4098 = vrot.lane.b32.xlu0 %v3383, 64
    %v4099 = vpop.permute.xlu0 %4098
    %4100 = vrot.lane.b32.xlu0 %v3384, 64
    %v4101 = vpop.permute.xlu0 %4100
    %4102 = vrot.lane.b32.xlu0 %v3385, 64
    %v4103 = vpop.permute.xlu0 %4102
    %4104 = vrot.lane.b32.xlu0 %v3386, 64
    %v4105 = vpop.permute.xlu0 %4104
    %v4107 = vsel %vm901, %v3383, 0
    %v4110 = vsel %vm901, %v3384, 0
    %v4113 = vsel %vm901, %v3385, 0
    %v4116 = vsel %vm901, %v3386, 0
    %v4119 = vsel %vm901, %v4099, 0
    %v4122 = vsel %vm901, %v4101, 0
    %v4125 = vsel %vm901, %v4103, 0
    %v4128 = vsel %vm901, %v4105, 0
    %4130 = vmatprep.subr.bf16.mxu0 0
    %4131 = vmatpush1.bf16.xpose.msra.mxu0 0
    %4132 = vmatprep.subr.bf16.mxu0 0
    %4133 = vmatpush1.bf16.xpose.msra.mxu0 0
    %4134 = vmatprep.subr.bf16.mxu0 0
    %4135 = vmatpush1.bf16.xpose.msra.mxu0 0
    %4136 = vmatprep.subr.bf16.mxu0 0
    %4137 = vmatpush1.bf16.xpose.msra.mxu0 0
    %4138 = vmatprep.subr.bf16.mxu0 0
    %4139 = vmatpush1.bf16.xpose.msra.mxu0 %v4128
    %4140 = vmatprep.subr.bf16.mxu0 0
    %4141 = vmatpush1.bf16.xpose.msra.mxu0 %v4125
    %4142 = vmatprep.subr.bf16.mxu0 0
    %4143 = vmatpush1.bf16.xpose.msra.mxu0 %v4122
    %4144 = vmatprep.subr.bf16.mxu0 0
    %4145 = vmatpush1.bf16.xpose.msra.mxu0 %v4119
    %4146 = vmatprep.subr.bf16.mxu0 0
    %4147 = vmatpush2.bf16.xpose.msra.mxu0 0
    %4148 = vmatprep.subr.bf16.mxu0 0
    %4149 = vmatpush2.bf16.xpose.msra.mxu0 0
    %4150 = vmatprep.subr.bf16.mxu0 0
    %4151 = vmatpush2.bf16.xpose.msra.mxu0 0
    %4152 = vmatprep.subr.bf16.mxu0 0
    %4153 = vmatpush2.bf16.xpose.msra.mxu0 0
    %4154 = vmatprep.subr.bf16.mxu0 0
    %4155 = vmatpush2.bf16.xpose.msra.mxu0 0
    %4156 = vmatprep.subr.bf16.mxu0 0
    %4157 = vmatpush2.bf16.xpose.msra.mxu0 0
    %4158 = vmatprep.subr.bf16.mxu0 0
    %4159 = vmatpush2.bf16.xpose.msra.mxu0 0
    %4160 = vmatprep.subr.bf16.mxu0 0
    %4161 = vmatpush2.bf16.xpose.msra.mxu0 0
    %4162 = vmatprep.mubr.bf16.mxu0 0
    %4163 = vmatmul.mubr.bf16.gmra.mxu0 %v4107
    %v4164 = vpop.f32.mrf.mxu0
    %v4165 = vadd.f32 0.0, %v4164
    %v4166 = vpop.f32.mrf.mxu0
    %v4167 = vpop.f32.mrf.mxu0
    %v4168 = vadd.f32 0.0, %v4167
    %v4169 = vpop.f32.mrf.mxu0
    %4170 = vmatprep.mubr.bf16.mxu0 0
    %4171 = vmatmul.mubr.bf16.gmra.mxu0 %v4110
    %v4172 = vpop.f32.mrf.mxu0
    %v4173 = vadd.f32 0.0, %v4172
    %v4174 = vpop.f32.mrf.mxu0
    %v4175 = vpop.f32.mrf.mxu0
    %v4176 = vadd.f32 0.0, %v4175
    %v4177 = vpop.f32.mrf.mxu0
    %4178 = vmatprep.mubr.bf16.mxu0 0
    %4179 = vmatmul.mubr.bf16.gmra.mxu0 %v4113
    %v4180 = vpop.f32.mrf.mxu0
    %v4181 = vadd.f32 0.0, %v4180
    %v4182 = vpop.f32.mrf.mxu0
    %v4183 = vpop.f32.mrf.mxu0
    %v4184 = vadd.f32 0.0, %v4183
    %v4185 = vpop.f32.mrf.mxu0
    %4186 = vmatprep.mubr.bf16.mxu0 0
    %4187 = vmatmul.mubr.bf16.gmra.mxu0 %v4116
    %v4188 = vpop.f32.mrf.mxu0
    %v4189 = vadd.f32 0.0, %v4188
    %v4190 = vpop.f32.mrf.mxu0
    %v4191 = vpop.f32.mrf.mxu0
    %v4192 = vadd.f32 0.0, %v4191
    %v4193 = vpop.f32.mrf.mxu0
    %4194 = vdwg.mxu0
    %v4195 = vsel %vm44, %v3458, -inf
    %4196 = vmax.xlane.f32.xlu0 %v4195
    %v4197 = vpop.xlane.xlu0 %4196
    %v4198 = vsel %vm44, %v3461, -inf
    %4199 = vmax.xlane.f32.xlu0 %v4198
    %v4200 = vpop.xlane.xlu0 %4199
    %v4201 = vsel %vm44, %v3466, -inf
    %4202 = vmax.xlane.f32.xlu0 %v4201
    %v4203 = vpop.xlane.xlu0 %4202
    %v4204 = vsel %vm44, %v3469, -inf
    %4205 = vmax.xlane.f32.xlu0 %v4204
    %v4206 = vpop.xlane.xlu0 %4205
    %v4207 = vsel %vm44, %v3474, -inf
    %4208 = vmax.xlane.f32.xlu0 %v4207
    %v4209 = vpop.xlane.xlu0 %4208
    %v4210 = vsel %vm44, %v3477, -inf
    %4211 = vmax.xlane.f32.xlu0 %v4210
    %v4212 = vpop.xlane.xlu0 %4211
    %v4213 = vsel %vm44, %v3482, -inf
    %4214 = vmax.xlane.f32.xlu0 %v4213
    %v4215 = vpop.xlane.xlu0 %4214
    %v4216 = vsel %vm44, %v3485, -inf
    %4217 = vmax.xlane.f32.xlu0 %v4216
    %v4218 = vpop.xlane.xlu0 %4217
    %v4219 = vsel %vm44, %v3559, -inf
    %4220 = vmax.xlane.f32.xlu0 %v4219
    %v4221 = vpop.xlane.xlu0 %4220
    %v4222 = vsel %vm44, %v3562, -inf
    %4223 = vmax.xlane.f32.xlu0 %v4222
    %v4224 = vpop.xlane.xlu0 %4223
    %v4225 = vsel %vm44, %v3567, -inf
    %4226 = vmax.xlane.f32.xlu0 %v4225
    %v4227 = vpop.xlane.xlu0 %4226
    %v4228 = vsel %vm44, %v3570, -inf
    %4229 = vmax.xlane.f32.xlu0 %v4228
    %v4230 = vpop.xlane.xlu0 %4229
    %v4231 = vsel %vm44, %v3575, -inf
    %4232 = vmax.xlane.f32.xlu0 %v4231
    %v4233 = vpop.xlane.xlu0 %4232
    %v4234 = vsel %vm44, %v3578, -inf
    %4235 = vmax.xlane.f32.xlu0 %v4234
    %v4236 = vpop.xlane.xlu0 %4235
    %v4237 = vsel %vm44, %v3583, -inf
    %4238 = vmax.xlane.f32.xlu0 %v4237
    %v4239 = vpop.xlane.xlu0 %4238
    %v4240 = vsel %vm44, %v3586, -inf
    %4241 = vmax.xlane.f32.xlu0 %v4240
    %v4242 = vpop.xlane.xlu0 %4241
    %v4243 = vsel %vm44, %v3660, -inf
    %4244 = vmax.xlane.f32.xlu0 %v4243
    %v4245 = vpop.xlane.xlu0 %4244
    %v4246 = vsel %vm44, %v3663, -inf
    %4247 = vmax.xlane.f32.xlu0 %v4246
    %v4248 = vpop.xlane.xlu0 %4247
    %v4249 = vsel %vm44, %v3668, -inf
    %4250 = vmax.xlane.f32.xlu0 %v4249
    %v4251 = vpop.xlane.xlu0 %4250
    %v4252 = vsel %vm44, %v3671, -inf
    %4253 = vmax.xlane.f32.xlu0 %v4252
    %v4254 = vpop.xlane.xlu0 %4253
    %v4255 = vsel %vm44, %v3676, -inf
    %4256 = vmax.xlane.f32.xlu0 %v4255
    %v4257 = vpop.xlane.xlu0 %4256
    %v4258 = vsel %vm44, %v3679, -inf
    %4259 = vmax.xlane.f32.xlu0 %v4258
    %v4260 = vpop.xlane.xlu0 %4259
    %v4261 = vsel %vm44, %v3684, -inf
    %4262 = vmax.xlane.f32.xlu0 %v4261
    %v4263 = vpop.xlane.xlu0 %4262
    %v4264 = vsel %vm44, %v3687, -inf
    %4265 = vmax.xlane.f32.xlu0 %v4264
    %v4266 = vpop.xlane.xlu0 %4265
    %v4267 = vsel %vm44, %v3761, -inf
    %4268 = vmax.xlane.f32.xlu0 %v4267
    %v4269 = vpop.xlane.xlu0 %4268
    %v4270 = vsel %vm44, %v3764, -inf
    %4271 = vmax.xlane.f32.xlu0 %v4270
    %v4272 = vpop.xlane.xlu0 %4271
    %v4273 = vsel %vm44, %v3769, -inf
    %4274 = vmax.xlane.f32.xlu0 %v4273
    %v4275 = vpop.xlane.xlu0 %4274
    %v4276 = vsel %vm44, %v3772, -inf
    %4277 = vmax.xlane.f32.xlu0 %v4276
    %v4278 = vpop.xlane.xlu0 %4277
    %v4279 = vsel %vm44, %v3777, -inf
    %4280 = vmax.xlane.f32.xlu0 %v4279
    %v4281 = vpop.xlane.xlu0 %4280
    %v4282 = vsel %vm44, %v3780, -inf
    %4283 = vmax.xlane.f32.xlu0 %v4282
    %v4284 = vpop.xlane.xlu0 %4283
    %v4285 = vsel %vm44, %v3785, -inf
    %4286 = vmax.xlane.f32.xlu0 %v4285
    %v4287 = vpop.xlane.xlu0 %4286
    %v4288 = vsel %vm44, %v3788, -inf
    %4289 = vmax.xlane.f32.xlu0 %v4288
    %v4290 = vpop.xlane.xlu0 %4289
    %v4291 = vsel %vm44, %v3862, -inf
    %4292 = vmax.xlane.f32.xlu0 %v4291
    %v4293 = vpop.xlane.xlu0 %4292
    %v4294 = vsel %vm44, %v3865, -inf
    %4295 = vmax.xlane.f32.xlu0 %v4294
    %v4296 = vpop.xlane.xlu0 %4295
    %v4297 = vsel %vm44, %v3870, -inf
    %4298 = vmax.xlane.f32.xlu0 %v4297
    %v4299 = vpop.xlane.xlu0 %4298
    %v4300 = vsel %vm44, %v3873, -inf
    %4301 = vmax.xlane.f32.xlu0 %v4300
    %v4302 = vpop.xlane.xlu0 %4301
    %v4303 = vsel %vm44, %v3878, -inf
    %4304 = vmax.xlane.f32.xlu0 %v4303
    %v4305 = vpop.xlane.xlu0 %4304
    %v4306 = vsel %vm44, %v3881, -inf
    %4307 = vmax.xlane.f32.xlu0 %v4306
    %v4308 = vpop.xlane.xlu0 %4307
    %v4309 = vsel %vm44, %v3886, -inf
    %4310 = vmax.xlane.f32.xlu0 %v4309
    %v4311 = vpop.xlane.xlu0 %4310
    %v4312 = vsel %vm44, %v3889, -inf
    %4313 = vmax.xlane.f32.xlu0 %v4312
    %v4314 = vpop.xlane.xlu0 %4313
    %v4315 = vsel %vm44, %v3963, -inf
    %4316 = vmax.xlane.f32.xlu0 %v4315
    %v4317 = vpop.xlane.xlu0 %4316
    %v4318 = vsel %vm44, %v3966, -inf
    %4319 = vmax.xlane.f32.xlu0 %v4318
    %v4320 = vpop.xlane.xlu0 %4319
    %v4321 = vsel %vm44, %v3971, -inf
    %4322 = vmax.xlane.f32.xlu0 %v4321
    %v4323 = vpop.xlane.xlu0 %4322
    %v4324 = vsel %vm44, %v3974, -inf
    %4325 = vmax.xlane.f32.xlu0 %v4324
    %v4326 = vpop.xlane.xlu0 %4325
    %v4327 = vsel %vm44, %v3979, -inf
    %4328 = vmax.xlane.f32.xlu0 %v4327
    %v4329 = vpop.xlane.xlu0 %4328
    %v4330 = vsel %vm44, %v3982, -inf
    %4331 = vmax.xlane.f32.xlu0 %v4330
    %v4332 = vpop.xlane.xlu0 %4331
    %v4333 = vsel %vm44, %v3987, -inf
    %4334 = vmax.xlane.f32.xlu0 %v4333
    %v4335 = vpop.xlane.xlu0 %4334
    %v4336 = vsel %vm44, %v3990, -inf
    %4337 = vmax.xlane.f32.xlu0 %v4336
    %v4338 = vpop.xlane.xlu0 %4337
    %v4339 = vsel %vm44, %v4064, -inf
    %4340 = vmax.xlane.f32.xlu0 %v4339
    %v4341 = vpop.xlane.xlu0 %4340
    %v4342 = vsel %vm44, %v4067, -inf
    %4343 = vmax.xlane.f32.xlu0 %v4342
    %v4344 = vpop.xlane.xlu0 %4343
    %v4345 = vsel %vm44, %v4072, -inf
    %4346 = vmax.xlane.f32.xlu0 %v4345
    %v4347 = vpop.xlane.xlu0 %4346
    %v4348 = vsel %vm44, %v4075, -inf
    %4349 = vmax.xlane.f32.xlu0 %v4348
    %v4350 = vpop.xlane.xlu0 %4349
    %v4351 = vsel %vm44, %v4080, -inf
    %4352 = vmax.xlane.f32.xlu0 %v4351
    %v4353 = vpop.xlane.xlu0 %4352
    %v4354 = vsel %vm44, %v4083, -inf
    %4355 = vmax.xlane.f32.xlu0 %v4354
    %v4356 = vpop.xlane.xlu0 %4355
    %v4357 = vsel %vm44, %v4088, -inf
    %4358 = vmax.xlane.f32.xlu0 %v4357
    %v4359 = vpop.xlane.xlu0 %4358
    %v4360 = vsel %vm44, %v4091, -inf
    %4361 = vmax.xlane.f32.xlu0 %v4360
    %v4362 = vpop.xlane.xlu0 %4361
    %v4363 = vsel %vm44, %v4165, -inf
    %4364 = vmax.xlane.f32.xlu0 %v4363
    %v4365 = vpop.xlane.xlu0 %4364
    %v4366 = vsel %vm44, %v4168, -inf
    %4367 = vmax.xlane.f32.xlu0 %v4366
    %v4368 = vpop.xlane.xlu0 %4367
    %v4369 = vsel %vm44, %v4173, -inf
    %4370 = vmax.xlane.f32.xlu0 %v4369
    %v4371 = vpop.xlane.xlu0 %4370
    %v4372 = vsel %vm44, %v4176, -inf
    %4373 = vmax.xlane.f32.xlu0 %v4372
    %v4374 = vpop.xlane.xlu0 %4373
    %v4375 = vsel %vm44, %v4181, -inf
    %4376 = vmax.xlane.f32.xlu0 %v4375
    %v4377 = vpop.xlane.xlu0 %4376
    %v4378 = vsel %vm44, %v4184, -inf
    %4379 = vmax.xlane.f32.xlu0 %v4378
    %v4380 = vpop.xlane.xlu0 %4379
    %v4381 = vsel %vm44, %v4189, -inf
    %4382 = vmax.xlane.f32.xlu0 %v4381
    %v4383 = vpop.xlane.xlu0 %4382
    %v4384 = vsel %vm44, %v4192, -inf
    %4385 = vmax.xlane.f32.xlu0 %v4384
    %v4386 = vpop.xlane.xlu0 %4385
    %v4387 = vsub.f32 %v3458, %v4197
    %v4388 = vsub.f32 %v3461, %v4200
    %v4389 = vsub.f32 %v3466, %v4203
    %v4390 = vsub.f32 %v3469, %v4206
    %v4391 = vsub.f32 %v3474, %v4209
    %v4392 = vsub.f32 %v3477, %v4212
    %v4393 = vsub.f32 %v3482, %v4215
    %v4394 = vsub.f32 %v3485, %v4218
    %v4395 = vsub.f32 %v3559, %v4221
    %v4396 = vsub.f32 %v3562, %v4224
    %v4397 = vsub.f32 %v3567, %v4227
    %v4398 = vsub.f32 %v3570, %v4230
    %v4399 = vsub.f32 %v3575, %v4233
    %v4400 = vsub.f32 %v3578, %v4236
    %v4401 = vsub.f32 %v3583, %v4239
    %v4402 = vsub.f32 %v3586, %v4242
    %v4403 = vsub.f32 %v3660, %v4245
    %v4404 = vsub.f32 %v3663, %v4248
    %v4405 = vsub.f32 %v3668, %v4251
    %v4406 = vsub.f32 %v3671, %v4254
    %v4407 = vsub.f32 %v3676, %v4257
    %v4408 = vsub.f32 %v3679, %v4260
    %v4409 = vsub.f32 %v3684, %v4263
    %v4410 = vsub.f32 %v3687, %v4266
    %v4411 = vsub.f32 %v3761, %v4269
    %v4412 = vsub.f32 %v3764, %v4272
    %v4413 = vsub.f32 %v3769, %v4275
    %v4414 = vsub.f32 %v3772, %v4278
    %v4415 = vsub.f32 %v3777, %v4281
    %v4416 = vsub.f32 %v3780, %v4284
    %v4417 = vsub.f32 %v3785, %v4287
    %v4418 = vsub.f32 %v3788, %v4290
    %v4419 = vsub.f32 %v3862, %v4293
    %v4420 = vsub.f32 %v3865, %v4296
    %v4421 = vsub.f32 %v3870, %v4299
    %v4422 = vsub.f32 %v3873, %v4302
    %v4423 = vsub.f32 %v3878, %v4305
    %v4424 = vsub.f32 %v3881, %v4308
    %v4425 = vsub.f32 %v3886, %v4311
    %v4426 = vsub.f32 %v3889, %v4314
    %v4427 = vsub.f32 %v3963, %v4317
    %v4428 = vsub.f32 %v3966, %v4320
    %v4429 = vsub.f32 %v3971, %v4323
    %v4430 = vsub.f32 %v3974, %v4326
    %v4431 = vsub.f32 %v3979, %v4329
    %v4432 = vsub.f32 %v3982, %v4332
    %v4433 = vsub.f32 %v3987, %v4335
    %v4434 = vsub.f32 %v3990, %v4338
    %v4435 = vsub.f32 %v4064, %v4341
    %v4436 = vsub.f32 %v4067, %v4344
    %v4437 = vsub.f32 %v4072, %v4347
    %v4438 = vsub.f32 %v4075, %v4350
    %v4439 = vsub.f32 %v4080, %v4353
    %v4440 = vsub.f32 %v4083, %v4356
    %v4441 = vsub.f32 %v4088, %v4359
    %v4442 = vsub.f32 %v4091, %v4362
    %v4443 = vsub.f32 %v4165, %v4365
    %v4444 = vsub.f32 %v4168, %v4368
    %v4445 = vsub.f32 %v4173, %v4371
    %v4446 = vsub.f32 %v4176, %v4374
    %v4447 = vsub.f32 %v4181, %v4377
    %v4448 = vsub.f32 %v4184, %v4380
    %v4449 = vsub.f32 %v4189, %v4383
    %v4450 = vsub.f32 %v4192, %v4386
    %v4451 = vmul.f32 %v4387, 1.442695
    %v4452 = vpow.pop %v4451
    %v4453 = vmul.f32 %v4388, 1.442695
    %v4454 = vpow.pop %v4453
    %v4455 = vmul.f32 %v4389, 1.442695
    %v4456 = vpow.pop %v4455
    %v4457 = vmul.f32 %v4390, 1.442695
    %v4458 = vpow.pop %v4457
    %v4459 = vmul.f32 %v4391, 1.442695
    %v4460 = vpow.pop %v4459
    %v4461 = vmul.f32 %v4392, 1.442695
    %v4462 = vpow.pop %v4461
    %v4463 = vmul.f32 %v4393, 1.442695
    %v4464 = vpow.pop %v4463
    %v4465 = vmul.f32 %v4394, 1.442695
    %v4466 = vpow.pop %v4465
    %v4467 = vmul.f32 %v4395, 1.442695
    %v4468 = vpow.pop %v4467
    %v4469 = vmul.f32 %v4396, 1.442695
    %v4470 = vpow.pop %v4469
    %v4471 = vmul.f32 %v4397, 1.442695
    %v4472 = vpow.pop %v4471
    %v4473 = vmul.f32 %v4398, 1.442695
    %v4474 = vpow.pop %v4473
    %v4475 = vmul.f32 %v4399, 1.442695
    %v4476 = vpow.pop %v4475
    %v4477 = vmul.f32 %v4400, 1.442695
    %v4478 = vpow.pop %v4477
    %v4479 = vmul.f32 %v4401, 1.442695
    %v4480 = vpow.pop %v4479
    %v4481 = vmul.f32 %v4402, 1.442695
    %v4482 = vpow.pop %v4481
    %v4483 = vmul.f32 %v4403, 1.442695
    %v4484 = vpow.pop %v4483
    %v4485 = vmul.f32 %v4404, 1.442695
    %v4486 = vpow.pop %v4485
    %v4487 = vmul.f32 %v4405, 1.442695
    %v4488 = vpow.pop %v4487
    %v4489 = vmul.f32 %v4406, 1.442695
    %v4490 = vpow.pop %v4489
    %v4491 = vmul.f32 %v4407, 1.442695
    %v4492 = vpow.pop %v4491
    %v4493 = vmul.f32 %v4408, 1.442695
    %v4494 = vpow.pop %v4493
    %v4495 = vmul.f32 %v4409, 1.442695
    %v4496 = vpow.pop %v4495
    %v4497 = vmul.f32 %v4410, 1.442695
    %v4498 = vpow.pop %v4497
    %v4499 = vmul.f32 %v4411, 1.442695
    %v4500 = vpow.pop %v4499
    %v4501 = vmul.f32 %v4412, 1.442695
    %v4502 = vpow.pop %v4501
    %v4503 = vmul.f32 %v4413, 1.442695
    %v4504 = vpow.pop %v4503
    %v4505 = vmul.f32 %v4414, 1.442695
    %v4506 = vpow.pop %v4505
    %v4507 = vmul.f32 %v4415, 1.442695
    %v4508 = vpow.pop %v4507
    %v4509 = vmul.f32 %v4416, 1.442695
    %v4510 = vpow.pop %v4509
    %v4511 = vmul.f32 %v4417, 1.442695
    %v4512 = vpow.pop %v4511
    %v4513 = vmul.f32 %v4418, 1.442695
    %v4514 = vpow.pop %v4513
    %v4515 = vmul.f32 %v4419, 1.442695
    %v4516 = vpow.pop %v4515
    %v4517 = vmul.f32 %v4420, 1.442695
    %v4518 = vpow.pop %v4517
    %v4519 = vmul.f32 %v4421, 1.442695
    %v4520 = vpow.pop %v4519
    %v4521 = vmul.f32 %v4422, 1.442695
    %v4522 = vpow.pop %v4521
    %v4523 = vmul.f32 %v4423, 1.442695
    %v4524 = vpow.pop %v4523
    %v4525 = vmul.f32 %v4424, 1.442695
    %v4526 = vpow.pop %v4525
    %v4527 = vmul.f32 %v4425, 1.442695
    %v4528 = vpow.pop %v4527
    %v4529 = vmul.f32 %v4426, 1.442695
    %v4530 = vpow.pop %v4529
    %v4531 = vmul.f32 %v4427, 1.442695
    %v4532 = vpow.pop %v4531
    %v4533 = vmul.f32 %v4428, 1.442695
    %v4534 = vpow.pop %v4533
    %v4535 = vmul.f32 %v4429, 1.442695
    %v4536 = vpow.pop %v4535
    %v4537 = vmul.f32 %v4430, 1.442695
    %v4538 = vpow.pop %v4537
    %v4539 = vmul.f32 %v4431, 1.442695
    %v4540 = vpow.pop %v4539
    %v4541 = vmul.f32 %v4432, 1.442695
    %v4542 = vpow.pop %v4541
    %v4543 = vmul.f32 %v4433, 1.442695
    %v4544 = vpow.pop %v4543
    %v4545 = vmul.f32 %v4434, 1.442695
    %v4546 = vpow.pop %v4545
    %v4547 = vmul.f32 %v4435, 1.442695
    %v4548 = vpow.pop %v4547
    %v4549 = vmul.f32 %v4436, 1.442695
    %v4550 = vpow.pop %v4549
    %v4551 = vmul.f32 %v4437, 1.442695
    %v4552 = vpow.pop %v4551
    %v4553 = vmul.f32 %v4438, 1.442695
    %v4554 = vpow.pop %v4553
    %v4555 = vmul.f32 %v4439, 1.442695
    %v4556 = vpow.pop %v4555
    %v4557 = vmul.f32 %v4440, 1.442695
    %v4558 = vpow.pop %v4557
    %v4559 = vmul.f32 %v4441, 1.442695
    %v4560 = vpow.pop %v4559
    %v4561 = vmul.f32 %v4442, 1.442695
    %v4562 = vpow.pop %v4561
    %v4563 = vmul.f32 %v4443, 1.442695
    %v4564 = vpow.pop %v4563
    %v4565 = vmul.f32 %v4444, 1.442695
    %v4566 = vpow.pop %v4565
    %v4567 = vmul.f32 %v4445, 1.442695
    %v4568 = vpow.pop %v4567
    %v4569 = vmul.f32 %v4446, 1.442695
    %v4570 = vpow.pop %v4569
    %v4571 = vmul.f32 %v4447, 1.442695
    %v4572 = vpow.pop %v4571
    %v4573 = vmul.f32 %v4448, 1.442695
    %v4574 = vpow.pop %v4573
    %v4575 = vmul.f32 %v4449, 1.442695
    %v4576 = vpow.pop %v4575
    %v4577 = vmul.f32 %v4450, 1.442695
    %v4578 = vpow.pop %v4577
    %v4579 = vsel %vm44, %v4452, 0.0
    %4580 = vadd.xlane.f32.xlu0 %v4579
    %v4581 = vpop.xlane.xlu0 %4580
    %v4582 = vsel %vm44, %v4454, 0.0
    %4583 = vadd.xlane.f32.xlu0 %v4582
    %v4584 = vpop.xlane.xlu0 %4583
    %v4585 = vsel %vm44, %v4456, 0.0
    %4586 = vadd.xlane.f32.xlu0 %v4585
    %v4587 = vpop.xlane.xlu0 %4586
    %v4588 = vsel %vm44, %v4458, 0.0
    %4589 = vadd.xlane.f32.xlu0 %v4588
    %v4590 = vpop.xlane.xlu0 %4589
    %v4591 = vsel %vm44, %v4460, 0.0
    %4592 = vadd.xlane.f32.xlu0 %v4591
    %v4593 = vpop.xlane.xlu0 %4592
    %v4594 = vsel %vm44, %v4462, 0.0
    %4595 = vadd.xlane.f32.xlu0 %v4594
    %v4596 = vpop.xlane.xlu0 %4595
    %v4597 = vsel %vm44, %v4464, 0.0
    %4598 = vadd.xlane.f32.xlu0 %v4597
    %v4599 = vpop.xlane.xlu0 %4598
    %v4600 = vsel %vm44, %v4466, 0.0
    %4601 = vadd.xlane.f32.xlu0 %v4600
    %v4602 = vpop.xlane.xlu0 %4601
    %v4603 = vsel %vm44, %v4468, 0.0
    %4604 = vadd.xlane.f32.xlu0 %v4603
    %v4605 = vpop.xlane.xlu0 %4604
    %v4606 = vsel %vm44, %v4470, 0.0
    %4607 = vadd.xlane.f32.xlu0 %v4606
    %v4608 = vpop.xlane.xlu0 %4607
    %v4609 = vsel %vm44, %v4472, 0.0
    %4610 = vadd.xlane.f32.xlu0 %v4609
    %v4611 = vpop.xlane.xlu0 %4610
    %v4612 = vsel %vm44, %v4474, 0.0
    %4613 = vadd.xlane.f32.xlu0 %v4612
    %v4614 = vpop.xlane.xlu0 %4613
    %v4615 = vsel %vm44, %v4476, 0.0
    %4616 = vadd.xlane.f32.xlu0 %v4615
    %v4617 = vpop.xlane.xlu0 %4616
    %v4618 = vsel %vm44, %v4478, 0.0
    %4619 = vadd.xlane.f32.xlu0 %v4618
    %v4620 = vpop.xlane.xlu0 %4619
    %v4621 = vsel %vm44, %v4480, 0.0
    %4622 = vadd.xlane.f32.xlu0 %v4621
    %v4623 = vpop.xlane.xlu0 %4622
    %v4624 = vsel %vm44, %v4482, 0.0
    %4625 = vadd.xlane.f32.xlu0 %v4624
    %v4626 = vpop.xlane.xlu0 %4625
    %v4627 = vsel %vm44, %v4484, 0.0
    %4628 = vadd.xlane.f32.xlu0 %v4627
    %v4629 = vpop.xlane.xlu0 %4628
    %v4630 = vsel %vm44, %v4486, 0.0
    %4631 = vadd.xlane.f32.xlu0 %v4630
    %v4632 = vpop.xlane.xlu0 %4631
    %v4633 = vsel %vm44, %v4488, 0.0
    %4634 = vadd.xlane.f32.xlu0 %v4633
    %v4635 = vpop.xlane.xlu0 %4634
    %v4636 = vsel %vm44, %v4490, 0.0
    %4637 = vadd.xlane.f32.xlu0 %v4636
    %v4638 = vpop.xlane.xlu0 %4637
    %v4639 = vsel %vm44, %v4492, 0.0
    %4640 = vadd.xlane.f32.xlu0 %v4639
    %v4641 = vpop.xlane.xlu0 %4640
    %v4642 = vsel %vm44, %v4494, 0.0
    %4643 = vadd.xlane.f32.xlu0 %v4642
    %v4644 = vpop.xlane.xlu0 %4643
    %v4645 = vsel %vm44, %v4496, 0.0
    %4646 = vadd.xlane.f32.xlu0 %v4645
    %v4647 = vpop.xlane.xlu0 %4646
    %v4648 = vsel %vm44, %v4498, 0.0
    %4649 = vadd.xlane.f32.xlu0 %v4648
    %v4650 = vpop.xlane.xlu0 %4649
    %v4651 = vsel %vm44, %v4500, 0.0
    %4652 = vadd.xlane.f32.xlu0 %v4651
    %v4653 = vpop.xlane.xlu0 %4652
    %v4654 = vsel %vm44, %v4502, 0.0
    %4655 = vadd.xlane.f32.xlu0 %v4654
    %v4656 = vpop.xlane.xlu0 %4655
    %v4657 = vsel %vm44, %v4504, 0.0
    %4658 = vadd.xlane.f32.xlu0 %v4657
    %v4659 = vpop.xlane.xlu0 %4658
    %v4660 = vsel %vm44, %v4506, 0.0
    %4661 = vadd.xlane.f32.xlu0 %v4660
    %v4662 = vpop.xlane.xlu0 %4661
    %v4663 = vsel %vm44, %v4508, 0.0
    %4664 = vadd.xlane.f32.xlu0 %v4663
    %v4665 = vpop.xlane.xlu0 %4664
    %v4666 = vsel %vm44, %v4510, 0.0
    %4667 = vadd.xlane.f32.xlu0 %v4666
    %v4668 = vpop.xlane.xlu0 %4667
    %v4669 = vsel %vm44, %v4512, 0.0
    %4670 = vadd.xlane.f32.xlu0 %v4669
    %v4671 = vpop.xlane.xlu0 %4670
    %v4672 = vsel %vm44, %v4514, 0.0
    %4673 = vadd.xlane.f32.xlu0 %v4672
    %v4674 = vpop.xlane.xlu0 %4673
    %v4675 = vsel %vm44, %v4516, 0.0
    %4676 = vadd.xlane.f32.xlu0 %v4675
    %v4677 = vpop.xlane.xlu0 %4676
    %v4678 = vsel %vm44, %v4518, 0.0
    %4679 = vadd.xlane.f32.xlu0 %v4678
    %v4680 = vpop.xlane.xlu0 %4679
    %v4681 = vsel %vm44, %v4520, 0.0
    %4682 = vadd.xlane.f32.xlu0 %v4681
    %v4683 = vpop.xlane.xlu0 %4682
    %v4684 = vsel %vm44, %v4522, 0.0
    %4685 = vadd.xlane.f32.xlu0 %v4684
    %v4686 = vpop.xlane.xlu0 %4685
    %v4687 = vsel %vm44, %v4524, 0.0
    %4688 = vadd.xlane.f32.xlu0 %v4687
    %v4689 = vpop.xlane.xlu0 %4688
    %v4690 = vsel %vm44, %v4526, 0.0
    %4691 = vadd.xlane.f32.xlu0 %v4690
    %v4692 = vpop.xlane.xlu0 %4691
    %v4693 = vsel %vm44, %v4528, 0.0
    %4694 = vadd.xlane.f32.xlu0 %v4693
    %v4695 = vpop.xlane.xlu0 %4694
    %v4696 = vsel %vm44, %v4530, 0.0
    %4697 = vadd.xlane.f32.xlu0 %v4696
    %v4698 = vpop.xlane.xlu0 %4697
    %v4699 = vsel %vm44, %v4532, 0.0
    %4700 = vadd.xlane.f32.xlu0 %v4699
    %v4701 = vpop.xlane.xlu0 %4700
    %v4702 = vsel %vm44, %v4534, 0.0
    %4703 = vadd.xlane.f32.xlu0 %v4702
    %v4704 = vpop.xlane.xlu0 %4703
    %v4705 = vsel %vm44, %v4536, 0.0
    %4706 = vadd.xlane.f32.xlu0 %v4705
    %v4707 = vpop.xlane.xlu0 %4706
    %v4708 = vsel %vm44, %v4538, 0.0
    %4709 = vadd.xlane.f32.xlu0 %v4708
    %v4710 = vpop.xlane.xlu0 %4709
    %v4711 = vsel %vm44, %v4540, 0.0
    %4712 = vadd.xlane.f32.xlu0 %v4711
    %v4713 = vpop.xlane.xlu0 %4712
    %v4714 = vsel %vm44, %v4542, 0.0
    %4715 = vadd.xlane.f32.xlu0 %v4714
    %v4716 = vpop.xlane.xlu0 %4715
    %v4717 = vsel %vm44, %v4544, 0.0
    %4718 = vadd.xlane.f32.xlu0 %v4717
    %v4719 = vpop.xlane.xlu0 %4718
    %v4720 = vsel %vm44, %v4546, 0.0
    %4721 = vadd.xlane.f32.xlu0 %v4720
    %v4722 = vpop.xlane.xlu0 %4721
    %v4723 = vsel %vm44, %v4548, 0.0
    %4724 = vadd.xlane.f32.xlu0 %v4723
    %v4725 = vpop.xlane.xlu0 %4724
    %v4726 = vsel %vm44, %v4550, 0.0
    %4727 = vadd.xlane.f32.xlu0 %v4726
    %v4728 = vpop.xlane.xlu0 %4727
    %v4729 = vsel %vm44, %v4552, 0.0
    %4730 = vadd.xlane.f32.xlu0 %v4729
    %v4731 = vpop.xlane.xlu0 %4730
    %v4732 = vsel %vm44, %v4554, 0.0
    %4733 = vadd.xlane.f32.xlu0 %v4732
    %v4734 = vpop.xlane.xlu0 %4733
    %v4735 = vsel %vm44, %v4556, 0.0
    %4736 = vadd.xlane.f32.xlu0 %v4735
    %v4737 = vpop.xlane.xlu0 %4736
    %v4738 = vsel %vm44, %v4558, 0.0
    %4739 = vadd.xlane.f32.xlu0 %v4738
    %v4740 = vpop.xlane.xlu0 %4739
    %v4741 = vsel %vm44, %v4560, 0.0
    %4742 = vadd.xlane.f32.xlu0 %v4741
    %v4743 = vpop.xlane.xlu0 %4742
    %v4744 = vsel %vm44, %v4562, 0.0
    %4745 = vadd.xlane.f32.xlu0 %v4744
    %v4746 = vpop.xlane.xlu0 %4745
    %v4747 = vsel %vm44, %v4564, 0.0
    %4748 = vadd.xlane.f32.xlu0 %v4747
    %v4749 = vpop.xlane.xlu0 %4748
    %v4750 = vsel %vm44, %v4566, 0.0
    %4751 = vadd.xlane.f32.xlu0 %v4750
    %v4752 = vpop.xlane.xlu0 %4751
    %v4753 = vsel %vm44, %v4568, 0.0
    %4754 = vadd.xlane.f32.xlu0 %v4753
    %v4755 = vpop.xlane.xlu0 %4754
    %v4756 = vsel %vm44, %v4570, 0.0
    %4757 = vadd.xlane.f32.xlu0 %v4756
    %v4758 = vpop.xlane.xlu0 %4757
    %v4759 = vsel %vm44, %v4572, 0.0
    %4760 = vadd.xlane.f32.xlu0 %v4759
    %v4761 = vpop.xlane.xlu0 %4760
    %v4762 = vsel %vm44, %v4574, 0.0
    %4763 = vadd.xlane.f32.xlu0 %v4762
    %v4764 = vpop.xlane.xlu0 %4763
    %v4765 = vsel %vm44, %v4576, 0.0
    %4766 = vadd.xlane.f32.xlu0 %v4765
    %v4767 = vpop.xlane.xlu0 %4766
    %v4768 = vsel %vm44, %v4578, 0.0
    %4769 = vadd.xlane.f32.xlu0 %v4768
    %v4770 = vpop.xlane.xlu0 %4769
    %v4771 = vrcp.pop %v4581
    %v4772 = vrcp.pop %v4584
    %v4773 = vrcp.pop %v4587
    %v4774 = vrcp.pop %v4590
    %v4775 = vrcp.pop %v4593
    %v4776 = vrcp.pop %v4596
    %v4777 = vrcp.pop %v4599
    %v4778 = vrcp.pop %v4602
    %v4779 = vrcp.pop %v4605
    %v4780 = vrcp.pop %v4608
    %v4781 = vrcp.pop %v4611
    %v4782 = vrcp.pop %v4614
    %v4783 = vrcp.pop %v4617
    %v4784 = vrcp.pop %v4620
    %v4785 = vrcp.pop %v4623
    %v4786 = vrcp.pop %v4626
    %v4787 = vrcp.pop %v4629
    %v4788 = vrcp.pop %v4632
    %v4789 = vrcp.pop %v4635
    %v4790 = vrcp.pop %v4638
    %v4791 = vrcp.pop %v4641
    %v4792 = vrcp.pop %v4644
    %v4793 = vrcp.pop %v4647
    %v4794 = vrcp.pop %v4650
    %v4795 = vrcp.pop %v4653
    %v4796 = vrcp.pop %v4656
    %v4797 = vrcp.pop %v4659
    %v4798 = vrcp.pop %v4662
    %v4799 = vrcp.pop %v4665
    %v4800 = vrcp.pop %v4668
    %v4801 = vrcp.pop %v4671
    %v4802 = vrcp.pop %v4674
    %v4803 = vrcp.pop %v4677
    %v4804 = vrcp.pop %v4680
    %v4805 = vrcp.pop %v4683
    %v4806 = vrcp.pop %v4686
    %v4807 = vrcp.pop %v4689
    %v4808 = vrcp.pop %v4692
    %v4809 = vrcp.pop %v4695
    %v4810 = vrcp.pop %v4698
    %v4811 = vrcp.pop %v4701
    %v4812 = vrcp.pop %v4704
    %v4813 = vrcp.pop %v4707
    %v4814 = vrcp.pop %v4710
    %v4815 = vrcp.pop %v4713
    %v4816 = vrcp.pop %v4716
    %v4817 = vrcp.pop %v4719
    %v4818 = vrcp.pop %v4722
    %v4819 = vrcp.pop %v4725
    %v4820 = vrcp.pop %v4728
    %v4821 = vrcp.pop %v4731
    %v4822 = vrcp.pop %v4734
    %v4823 = vrcp.pop %v4737
    %v4824 = vrcp.pop %v4740
    %v4825 = vrcp.pop %v4743
    %v4826 = vrcp.pop %v4746
    %v4827 = vrcp.pop %v4749
    %v4828 = vrcp.pop %v4752
    %v4829 = vrcp.pop %v4755
    %v4830 = vrcp.pop %v4758
    %v4831 = vrcp.pop %v4761
    %v4832 = vrcp.pop %v4764
    %v4833 = vrcp.pop %v4767
    %v4834 = vrcp.pop %v4770
    %v4835 = vmul.f32 %v4452, %v4771
    %v4836 = vmul.f32 %v4454, %v4772
    %v4837 = vmul.f32 %v4456, %v4773
    %v4838 = vmul.f32 %v4458, %v4774
    %v4839 = vmul.f32 %v4460, %v4775
    %v4840 = vmul.f32 %v4462, %v4776
    %v4841 = vmul.f32 %v4464, %v4777
    %v4842 = vmul.f32 %v4466, %v4778
    %v4843 = vmul.f32 %v4468, %v4779
    %v4844 = vmul.f32 %v4470, %v4780
    %v4845 = vmul.f32 %v4472, %v4781
    %v4846 = vmul.f32 %v4474, %v4782
    %v4847 = vmul.f32 %v4476, %v4783
    %v4848 = vmul.f32 %v4478, %v4784
    %v4849 = vmul.f32 %v4480, %v4785
    %v4850 = vmul.f32 %v4482, %v4786
    %v4851 = vmul.f32 %v4484, %v4787
    %v4852 = vmul.f32 %v4486, %v4788
    %v4853 = vmul.f32 %v4488, %v4789
    %v4854 = vmul.f32 %v4490, %v4790
    %v4855 = vmul.f32 %v4492, %v4791
    %v4856 = vmul.f32 %v4494, %v4792
    %v4857 = vmul.f32 %v4496, %v4793
    %v4858 = vmul.f32 %v4498, %v4794
    %v4859 = vmul.f32 %v4500, %v4795
    %v4860 = vmul.f32 %v4502, %v4796
    %v4861 = vmul.f32 %v4504, %v4797
    %v4862 = vmul.f32 %v4506, %v4798
    %v4863 = vmul.f32 %v4508, %v4799
    %v4864 = vmul.f32 %v4510, %v4800
    %v4865 = vmul.f32 %v4512, %v4801
    %v4866 = vmul.f32 %v4514, %v4802
    %v4867 = vmul.f32 %v4516, %v4803
    %v4868 = vmul.f32 %v4518, %v4804
    %v4869 = vmul.f32 %v4520, %v4805
    %v4870 = vmul.f32 %v4522, %v4806
    %v4871 = vmul.f32 %v4524, %v4807
    %v4872 = vmul.f32 %v4526, %v4808
    %v4873 = vmul.f32 %v4528, %v4809
    %v4874 = vmul.f32 %v4530, %v4810
    %v4875 = vmul.f32 %v4532, %v4811
    %v4876 = vmul.f32 %v4534, %v4812
    %v4877 = vmul.f32 %v4536, %v4813
    %v4878 = vmul.f32 %v4538, %v4814
    %v4879 = vmul.f32 %v4540, %v4815
    %v4880 = vmul.f32 %v4542, %v4816
    %v4881 = vmul.f32 %v4544, %v4817
    %v4882 = vmul.f32 %v4546, %v4818
    %v4883 = vmul.f32 %v4548, %v4819
    %v4884 = vmul.f32 %v4550, %v4820
    %v4885 = vmul.f32 %v4552, %v4821
    %v4886 = vmul.f32 %v4554, %v4822
    %v4887 = vmul.f32 %v4556, %v4823
    %v4888 = vmul.f32 %v4558, %v4824
    %v4889 = vmul.f32 %v4560, %v4825
    %v4890 = vmul.f32 %v4562, %v4826
    %v4891 = vmul.f32 %v4564, %v4827
    %v4892 = vmul.f32 %v4566, %v4828
    %v4893 = vmul.f32 %v4568, %v4829
    %v4894 = vmul.f32 %v4570, %v4830
    %v4895 = vmul.f32 %v4572, %v4831
    %v4896 = vmul.f32 %v4574, %v4832
    %v4897 = vmul.f32 %v4576, %v4833
    %v4898 = vmul.f32 %v4578, %v4834
    %v4899 = vsel %vm44, %v4835, 0.0
    %v4900 = vsel %vm44, %v4836, 0.0
    %v4901 = vadd.f32 %v4899, %v4900
    %v4902 = vsel %vm44, %v4837, 0.0
    %v4903 = vadd.f32 %v4901, %v4902
    %v4904 = vsel %vm44, %v4838, 0.0
    %v4905 = vadd.f32 %v4903, %v4904
    %v4906 = vsel %vm44, %v4839, 0.0
    %v4907 = vadd.f32 %v4905, %v4906
    %v4908 = vsel %vm44, %v4840, 0.0
    %v4909 = vadd.f32 %v4907, %v4908
    %v4910 = vsel %vm44, %v4841, 0.0
    %v4911 = vadd.f32 %v4909, %v4910
    %v4912 = vsel %vm44, %v4842, 0.0
    %v4913 = vadd.f32 %v4911, %v4912
    %v4914 = vrot.slane %v4913, 4
    %v4915 = vadd.f32 %v4913, %v4914
    %v4916 = vrot.slane %v4915, 2
    %v4917 = vadd.f32 %v4915, %v4916
    %v4918 = vrot.slane %v4917, 1
    %v4919 = vadd.f32 %v4917, %v4918
    %v4920 = vsel %vm44, %v4843, 0.0
    %v4921 = vsel %vm44, %v4844, 0.0
    %v4922 = vadd.f32 %v4920, %v4921
    %v4923 = vsel %vm44, %v4845, 0.0
    %v4924 = vadd.f32 %v4922, %v4923
    %v4925 = vsel %vm44, %v4846, 0.0
    %v4926 = vadd.f32 %v4924, %v4925
    %v4927 = vsel %vm44, %v4847, 0.0
    %v4928 = vadd.f32 %v4926, %v4927
    %v4929 = vsel %vm44, %v4848, 0.0
    %v4930 = vadd.f32 %v4928, %v4929
    %v4931 = vsel %vm44, %v4849, 0.0
    %v4932 = vadd.f32 %v4930, %v4931
    %v4933 = vsel %vm44, %v4850, 0.0
    %v4934 = vadd.f32 %v4932, %v4933
    %v4935 = vrot.slane %v4934, 4
    %v4936 = vadd.f32 %v4934, %v4935
    %v4937 = vrot.slane %v4936, 2
    %v4938 = vadd.f32 %v4936, %v4937
    %v4939 = vrot.slane %v4938, 1
    %v4940 = vadd.f32 %v4938, %v4939
    %v4941 = vsel %vm44, %v4851, 0.0
    %v4942 = vsel %vm44, %v4852, 0.0
    %v4943 = vadd.f32 %v4941, %v4942
    %v4944 = vsel %vm44, %v4853, 0.0
    %v4945 = vadd.f32 %v4943, %v4944
    %v4946 = vsel %vm44, %v4854, 0.0
    %v4947 = vadd.f32 %v4945, %v4946
    %v4948 = vsel %vm44, %v4855, 0.0
    %v4949 = vadd.f32 %v4947, %v4948
    %v4950 = vsel %vm44, %v4856, 0.0
    %v4951 = vadd.f32 %v4949, %v4950
    %v4952 = vsel %vm44, %v4857, 0.0
    %v4953 = vadd.f32 %v4951, %v4952
    %v4954 = vsel %vm44, %v4858, 0.0
    %v4955 = vadd.f32 %v4953, %v4954
    %v4956 = vrot.slane %v4955, 4
    %v4957 = vadd.f32 %v4955, %v4956
    %v4958 = vrot.slane %v4957, 2
    %v4959 = vadd.f32 %v4957, %v4958
    %v4960 = vrot.slane %v4959, 1
    %v4961 = vadd.f32 %v4959, %v4960
    %v4962 = vsel %vm44, %v4859, 0.0
    %v4963 = vsel %vm44, %v4860, 0.0
    %v4964 = vadd.f32 %v4962, %v4963
    %v4965 = vsel %vm44, %v4861, 0.0
    %v4966 = vadd.f32 %v4964, %v4965
    %v4967 = vsel %vm44, %v4862, 0.0
    %v4968 = vadd.f32 %v4966, %v4967
    %v4969 = vsel %vm44, %v4863, 0.0
    %v4970 = vadd.f32 %v4968, %v4969
    %v4971 = vsel %vm44, %v4864, 0.0
    %v4972 = vadd.f32 %v4970, %v4971
    %v4973 = vsel %vm44, %v4865, 0.0
    %v4974 = vadd.f32 %v4972, %v4973
    %v4975 = vsel %vm44, %v4866, 0.0
    %v4976 = vadd.f32 %v4974, %v4975
    %v4977 = vrot.slane %v4976, 4
    %v4978 = vadd.f32 %v4976, %v4977
    %v4979 = vrot.slane %v4978, 2
    %v4980 = vadd.f32 %v4978, %v4979
    %v4981 = vrot.slane %v4980, 1
    %v4982 = vadd.f32 %v4980, %v4981
    %v4983 = vsel %vm44, %v4867, 0.0
    %v4984 = vsel %vm44, %v4868, 0.0
    %v4985 = vadd.f32 %v4983, %v4984
    %v4986 = vsel %vm44, %v4869, 0.0
    %v4987 = vadd.f32 %v4985, %v4986
    %v4988 = vsel %vm44, %v4870, 0.0
    %v4989 = vadd.f32 %v4987, %v4988
    %v4990 = vsel %vm44, %v4871, 0.0
    %v4991 = vadd.f32 %v4989, %v4990
    %v4992 = vsel %vm44, %v4872, 0.0
    %v4993 = vadd.f32 %v4991, %v4992
    %v4994 = vsel %vm44, %v4873, 0.0
    %v4995 = vadd.f32 %v4993, %v4994
    %v4996 = vsel %vm44, %v4874, 0.0
    %v4997 = vadd.f32 %v4995, %v4996
    %v4998 = vrot.slane %v4997, 4
    %v4999 = vadd.f32 %v4997, %v4998
    %v5000 = vrot.slane %v4999, 2
    %v5001 = vadd.f32 %v4999, %v5000
    %v5002 = vrot.slane %v5001, 1
    %v5003 = vadd.f32 %v5001, %v5002
    %v5004 = vsel %vm44, %v4875, 0.0
    %v5005 = vsel %vm44, %v4876, 0.0
    %v5006 = vadd.f32 %v5004, %v5005
    %v5007 = vsel %vm44, %v4877, 0.0
    %v5008 = vadd.f32 %v5006, %v5007
    %v5009 = vsel %vm44, %v4878, 0.0
    %v5010 = vadd.f32 %v5008, %v5009
    %v5011 = vsel %vm44, %v4879, 0.0
    %v5012 = vadd.f32 %v5010, %v5011
    %v5013 = vsel %vm44, %v4880, 0.0
    %v5014 = vadd.f32 %v5012, %v5013
    %v5015 = vsel %vm44, %v4881, 0.0
    %v5016 = vadd.f32 %v5014, %v5015
    %v5017 = vsel %vm44, %v4882, 0.0
    %v5018 = vadd.f32 %v5016, %v5017
    %v5019 = vrot.slane %v5018, 4
    %v5020 = vadd.f32 %v5018, %v5019
    %v5021 = vrot.slane %v5020, 2
    %v5022 = vadd.f32 %v5020, %v5021
    %v5023 = vrot.slane %v5022, 1
    %v5024 = vadd.f32 %v5022, %v5023
    %v5025 = vsel %vm44, %v4883, 0.0
    %v5026 = vsel %vm44, %v4884, 0.0
    %v5027 = vadd.f32 %v5025, %v5026
    %v5028 = vsel %vm44, %v4885, 0.0
    %v5029 = vadd.f32 %v5027, %v5028
    %v5030 = vsel %vm44, %v4886, 0.0
    %v5031 = vadd.f32 %v5029, %v5030
    %v5032 = vsel %vm44, %v4887, 0.0
    %v5033 = vadd.f32 %v5031, %v5032
    %v5034 = vsel %vm44, %v4888, 0.0
    %v5035 = vadd.f32 %v5033, %v5034
    %v5036 = vsel %vm44, %v4889, 0.0
    %v5037 = vadd.f32 %v5035, %v5036
    %v5038 = vsel %vm44, %v4890, 0.0
    %v5039 = vadd.f32 %v5037, %v5038
    %v5040 = vrot.slane %v5039, 4
    %v5041 = vadd.f32 %v5039, %v5040
    %v5042 = vrot.slane %v5041, 2
    %v5043 = vadd.f32 %v5041, %v5042
    %v5044 = vrot.slane %v5043, 1
    %v5045 = vadd.f32 %v5043, %v5044
    %v5046 = vsel %vm44, %v4891, 0.0
    %v5047 = vsel %vm44, %v4892, 0.0
    %v5048 = vadd.f32 %v5046, %v5047
    %v5049 = vsel %vm44, %v4893, 0.0
    %v5050 = vadd.f32 %v5048, %v5049
    %v5051 = vsel %vm44, %v4894, 0.0
    %v5052 = vadd.f32 %v5050, %v5051
    %v5053 = vsel %vm44, %v4895, 0.0
    %v5054 = vadd.f32 %v5052, %v5053
    %v5055 = vsel %vm44, %v4896, 0.0
    %v5056 = vadd.f32 %v5054, %v5055
    %v5057 = vsel %vm44, %v4897, 0.0
    %v5058 = vadd.f32 %v5056, %v5057
    %v5059 = vsel %vm44, %v4898, 0.0
    %v5060 = vadd.f32 %v5058, %v5059
    %v5061 = vrot.slane %v5060, 4
    %v5062 = vadd.f32 %v5060, %v5061
    %v5063 = vrot.slane %v5062, 2
    %v5064 = vadd.f32 %v5062, %v5063
    %v5065 = vrot.slane %v5064, 1
    %v5066 = vadd.f32 %v5064, %v5065
    %v5067 = vmul.f32 %v4919, %v93
    %v5068 = vmul.f32 %v4940, %v93
    %v5069 = vmul.f32 %v4961, %v93
    %v5070 = vmul.f32 %v4982, %v93
    %v5071 = vmul.f32 %v5003, %v93
    %v5072 = vmul.f32 %v5024, %v93
    %v5073 = vmul.f32 %v5045, %v93
    %v5074 = vmul.f32 %v5066, %v93
    %v5075 = vpack.c.bf16 %v5067, %v5067
    %v5076 = vpack.c.bf16 %v5068, %v5068
    %v5077 = vpack.c.bf16 %v5069, %v5069
    %v5078 = vpack.c.bf16 %v5070, %v5070
    %v5079 = vpack.c.bf16 %v5071, %v5071
    %v5080 = vpack.c.bf16 %v5072, %v5072
    %v5081 = vpack.c.bf16 %v5073, %v5073
    %v5082 = vpack.c.bf16 %v5074, %v5074
    %v5083 = vpack.c.bf16 %v473, %v469
    %v5084 = vpack.c.bf16 %v483, %v479
    %v5085 = vpack.c.bf16 %v493, %v489
    %v5086 = vpack.c.bf16 %v503, %v499
    %v5087 = vpack.c.bf16 %v3190, %v3188
    %v5088 = vpack.c.bf16 %v3194, %v3192
    %v5089 = vpack.c.bf16 %v3198, %v3196
    %v5090 = vpack.c.bf16 %v3202, %v3200
    %v5091 = vpack.c.bf16 %v3214, %v3212
    %v5092 = vpack.c.bf16 %v3218, %v3216
    %v5093 = vpack.c.bf16 %v3222, %v3220
    %v5094 = vpack.c.bf16 %v3226, %v3224
    %v5095 = vpack.c.bf16 %v3238, %v3236
    %v5096 = vpack.c.bf16 %v3242, %v3240
    %v5097 = vpack.c.bf16 %v3246, %v3244
    %v5098 = vpack.c.bf16 %v3250, %v3248
    %v5099 = vpack.c.bf16 %v3262, %v3260
    %v5100 = vpack.c.bf16 %v3266, %v3264
    %v5101 = vpack.c.bf16 %v3270, %v3268
    %v5102 = vpack.c.bf16 %v3274, %v3272
    %v5103 = vpack.c.bf16 %v3286, %v3284
    %v5104 = vpack.c.bf16 %v3290, %v3288
    %v5105 = vpack.c.bf16 %v3294, %v3292
    %v5106 = vpack.c.bf16 %v3298, %v3296
    %v5107 = vpack.c.bf16 %v3310, %v3308
    %v5108 = vpack.c.bf16 %v3314, %v3312
    %v5109 = vpack.c.bf16 %v3318, %v3316
    %v5110 = vpack.c.bf16 %v3322, %v3320
    %v5111 = vpack.c.bf16 %v3334, %v3332
    %v5112 = vpack.c.bf16 %v3338, %v3336
    %v5113 = vpack.c.bf16 %v3342, %v3340
    %v5114 = vpack.c.bf16 %v3346, %v3344
    %v5116 = vsel %vm44, %v5075, 0
    %5118 = vmatprep.subr.bf16.mxu0 0
    %5119 = vmatpush1.bf16.msra.mxu0 0
    %5120 = vmatprep.subr.bf16.mxu0 0
    %5121 = vmatpush1.bf16.msra.mxu0 0
    %5122 = vmatprep.subr.bf16.mxu0 0
    %5123 = vmatpush1.bf16.msra.mxu0 0
    %5124 = vmatprep.subr.bf16.mxu0 0
    %5125 = vmatpush1.bf16.msra.mxu0 0
    %5126 = vmatprep.subr.bf16.mxu0 0
    %5127 = vmatpush1.bf16.msra.mxu0 %v5086
    %5128 = vmatprep.subr.bf16.mxu0 0
    %5129 = vmatpush1.bf16.msra.mxu0 %v5085
    %5130 = vmatprep.subr.bf16.mxu0 0
    %5131 = vmatpush1.bf16.msra.mxu0 %v5084
    %5132 = vmatprep.subr.bf16.mxu0 0
    %5133 = vmatpush1.bf16.msra.mxu0 %v5083
    %5134 = vmatprep.subr.bf16.mxu0 0
    %5135 = vmatpush2.bf16.msra.mxu0 0
    %5136 = vmatprep.subr.bf16.mxu0 0
    %5137 = vmatpush2.bf16.msra.mxu0 0
    %5138 = vmatprep.subr.bf16.mxu0 0
    %5139 = vmatpush2.bf16.msra.mxu0 0
    %5140 = vmatprep.subr.bf16.mxu0 0
    %5141 = vmatpush2.bf16.msra.mxu0 0
    %5142 = vmatprep.subr.bf16.mxu0 0
    %5143 = vmatpush2.bf16.msra.mxu0 0
    %5144 = vmatprep.subr.bf16.mxu0 0
    %5145 = vmatpush2.bf16.msra.mxu0 0
    %5146 = vmatprep.subr.bf16.mxu0 0
    %5147 = vmatpush2.bf16.msra.mxu0 0
    %5148 = vmatprep.subr.bf16.mxu0 0
    %5149 = vmatpush2.bf16.msra.mxu0 0
    %5150 = vmatprep.mubr.bf16.mxu0 0
    %5151 = vmatmul.mubr.bf16.gmra.mxu0 %v5116
    %v5152 = vpop.f32.mrf.mxu0
    %v5153 = vadd.f32 0.0, %v5152
    %v5154 = vpop.f32.mrf.mxu0
    %v5155 = vpop.f32.mrf.mxu0
    %v5156 = vpop.f32.mrf.mxu0
    %5157 = vdwg.mxu0
    %v5159 = vsel %vm44, %v5076, 0
    %5161 = vmatprep.subr.bf16.mxu0 0
    %5162 = vmatpush1.bf16.msra.mxu0 0
    %5163 = vmatprep.subr.bf16.mxu0 0
    %5164 = vmatpush1.bf16.msra.mxu0 0
    %5165 = vmatprep.subr.bf16.mxu0 0
    %5166 = vmatpush1.bf16.msra.mxu0 0
    %5167 = vmatprep.subr.bf16.mxu0 0
    %5168 = vmatpush1.bf16.msra.mxu0 0
    %5169 = vmatprep.subr.bf16.mxu0 0
    %5170 = vmatpush1.bf16.msra.mxu0 %v5090
    %5171 = vmatprep.subr.bf16.mxu0 0
    %5172 = vmatpush1.bf16.msra.mxu0 %v5089
    %5173 = vmatprep.subr.bf16.mxu0 0
    %5174 = vmatpush1.bf16.msra.mxu0 %v5088
    %5175 = vmatprep.subr.bf16.mxu0 0
    %5176 = vmatpush1.bf16.msra.mxu0 %v5087
    %5177 = vmatprep.subr.bf16.mxu0 0
    %5178 = vmatpush2.bf16.msra.mxu0 0
    %5179 = vmatprep.subr.bf16.mxu0 0
    %5180 = vmatpush2.bf16.msra.mxu0 0
    %5181 = vmatprep.subr.bf16.mxu0 0
    %5182 = vmatpush2.bf16.msra.mxu0 0
    %5183 = vmatprep.subr.bf16.mxu0 0
    %5184 = vmatpush2.bf16.msra.mxu0 0
    %5185 = vmatprep.subr.bf16.mxu0 0
    %5186 = vmatpush2.bf16.msra.mxu0 0
    %5187 = vmatprep.subr.bf16.mxu0 0
    %5188 = vmatpush2.bf16.msra.mxu0 0
    %5189 = vmatprep.subr.bf16.mxu0 0
    %5190 = vmatpush2.bf16.msra.mxu0 0
    %5191 = vmatprep.subr.bf16.mxu0 0
    %5192 = vmatpush2.bf16.msra.mxu0 0
    %5193 = vmatprep.mubr.bf16.mxu0 0
    %5194 = vmatmul.mubr.bf16.gmra.mxu0 %v5159
    %v5195 = vpop.f32.mrf.mxu0
    %v5196 = vadd.f32 0.0, %v5195
    %v5197 = vpop.f32.mrf.mxu0
    %v5198 = vpop.f32.mrf.mxu0
    %v5199 = vpop.f32.mrf.mxu0
    %5200 = vdwg.mxu0
    %v5202 = vsel %vm44, %v5077, 0
    %5204 = vmatprep.subr.bf16.mxu0 0
    %5205 = vmatpush1.bf16.msra.mxu0 0
    %5206 = vmatprep.subr.bf16.mxu0 0
    %5207 = vmatpush1.bf16.msra.mxu0 0
    %5208 = vmatprep.subr.bf16.mxu0 0
    %5209 = vmatpush1.bf16.msra.mxu0 0
    %5210 = vmatprep.subr.bf16.mxu0 0
    %5211 = vmatpush1.bf16.msra.mxu0 0
    %5212 = vmatprep.subr.bf16.mxu0 0
    %5213 = vmatpush1.bf16.msra.mxu0 %v5094
    %5214 = vmatprep.subr.bf16.mxu0 0
    %5215 = vmatpush1.bf16.msra.mxu0 %v5093
    %5216 = vmatprep.subr.bf16.mxu0 0
    %5217 = vmatpush1.bf16.msra.mxu0 %v5092
    %5218 = vmatprep.subr.bf16.mxu0 0
    %5219 = vmatpush1.bf16.msra.mxu0 %v5091
    %5220 = vmatprep.subr.bf16.mxu0 0
    %5221 = vmatpush2.bf16.msra.mxu0 0
    %5222 = vmatprep.subr.bf16.mxu0 0
    %5223 = vmatpush2.bf16.msra.mxu0 0
    %5224 = vmatprep.subr.bf16.mxu0 0
    %5225 = vmatpush2.bf16.msra.mxu0 0
    %5226 = vmatprep.subr.bf16.mxu0 0
    %5227 = vmatpush2.bf16.msra.mxu0 0
    %5228 = vmatprep.subr.bf16.mxu0 0
    %5229 = vmatpush2.bf16.msra.mxu0 0
    %5230 = vmatprep.subr.bf16.mxu0 0
    %5231 = vmatpush2.bf16.msra.mxu0 0
    %5232 = vmatprep.subr.bf16.mxu0 0
    %5233 = vmatpush2.bf16.msra.mxu0 0
    %5234 = vmatprep.subr.bf16.mxu0 0
    %5235 = vmatpush2.bf16.msra.mxu0 0
    %5236 = vmatprep.mubr.bf16.mxu0 0
    %5237 = vmatmul.mubr.bf16.gmra.mxu0 %v5202
    %v5238 = vpop.f32.mrf.mxu0
    %v5239 = vadd.f32 0.0, %v5238
    %v5240 = vpop.f32.mrf.mxu0
    %v5241 = vpop.f32.mrf.mxu0
    %v5242 = vpop.f32.mrf.mxu0
    %5243 = vdwg.mxu0
    %v5245 = vsel %vm44, %v5078, 0
    %5247 = vmatprep.subr.bf16.mxu0 0
    %5248 = vmatpush1.bf16.msra.mxu0 0
    %5249 = vmatprep.subr.bf16.mxu0 0
    %5250 = vmatpush1.bf16.msra.mxu0 0
    %5251 = vmatprep.subr.bf16.mxu0 0
    %5252 = vmatpush1.bf16.msra.mxu0 0
    %5253 = vmatprep.subr.bf16.mxu0 0
    %5254 = vmatpush1.bf16.msra.mxu0 0
    %5255 = vmatprep.subr.bf16.mxu0 0
    %5256 = vmatpush1.bf16.msra.mxu0 %v5098
    %5257 = vmatprep.subr.bf16.mxu0 0
    %5258 = vmatpush1.bf16.msra.mxu0 %v5097
    %5259 = vmatprep.subr.bf16.mxu0 0
    %5260 = vmatpush1.bf16.msra.mxu0 %v5096
    %5261 = vmatprep.subr.bf16.mxu0 0
    %5262 = vmatpush1.bf16.msra.mxu0 %v5095
    %5263 = vmatprep.subr.bf16.mxu0 0
    %5264 = vmatpush2.bf16.msra.mxu0 0
    %5265 = vmatprep.subr.bf16.mxu0 0
    %5266 = vmatpush2.bf16.msra.mxu0 0
    %5267 = vmatprep.subr.bf16.mxu0 0
    %5268 = vmatpush2.bf16.msra.mxu0 0
    %5269 = vmatprep.subr.bf16.mxu0 0
    %5270 = vmatpush2.bf16.msra.mxu0 0
    %5271 = vmatprep.subr.bf16.mxu0 0
    %5272 = vmatpush2.bf16.msra.mxu0 0
    %5273 = vmatprep.subr.bf16.mxu0 0
    %5274 = vmatpush2.bf16.msra.mxu0 0
    %5275 = vmatprep.subr.bf16.mxu0 0
    %5276 = vmatpush2.bf16.msra.mxu0 0
    %5277 = vmatprep.subr.bf16.mxu0 0
    %5278 = vmatpush2.bf16.msra.mxu0 0
    %5279 = vmatprep.mubr.bf16.mxu0 0
    %5280 = vmatmul.mubr.bf16.gmra.mxu0 %v5245
    %v5281 = vpop.f32.mrf.mxu0
    %v5282 = vadd.f32 0.0, %v5281
    %v5283 = vpop.f32.mrf.mxu0
    %v5284 = vpop.f32.mrf.mxu0
    %v5285 = vpop.f32.mrf.mxu0
    %5286 = vdwg.mxu0
    %v5288 = vsel %vm44, %v5079, 0
    %5290 = vmatprep.subr.bf16.mxu0 0
    %5291 = vmatpush1.bf16.msra.mxu0 0
    %5292 = vmatprep.subr.bf16.mxu0 0
    %5293 = vmatpush1.bf16.msra.mxu0 0
    %5294 = vmatprep.subr.bf16.mxu0 0
    %5295 = vmatpush1.bf16.msra.mxu0 0
    %5296 = vmatprep.subr.bf16.mxu0 0
    %5297 = vmatpush1.bf16.msra.mxu0 0
    %5298 = vmatprep.subr.bf16.mxu0 0
    %5299 = vmatpush1.bf16.msra.mxu0 %v5102
    %5300 = vmatprep.subr.bf16.mxu0 0
    %5301 = vmatpush1.bf16.msra.mxu0 %v5101
    %5302 = vmatprep.subr.bf16.mxu0 0
    %5303 = vmatpush1.bf16.msra.mxu0 %v5100
    %5304 = vmatprep.subr.bf16.mxu0 0
    %5305 = vmatpush1.bf16.msra.mxu0 %v5099
    %5306 = vmatprep.subr.bf16.mxu0 0
    %5307 = vmatpush2.bf16.msra.mxu0 0
    %5308 = vmatprep.subr.bf16.mxu0 0
    %5309 = vmatpush2.bf16.msra.mxu0 0
    %5310 = vmatprep.subr.bf16.mxu0 0
    %5311 = vmatpush2.bf16.msra.mxu0 0
    %5312 = vmatprep.subr.bf16.mxu0 0
    %5313 = vmatpush2.bf16.msra.mxu0 0
    %5314 = vmatprep.subr.bf16.mxu0 0
    %5315 = vmatpush2.bf16.msra.mxu0 0
    %5316 = vmatprep.subr.bf16.mxu0 0
    %5317 = vmatpush2.bf16.msra.mxu0 0
    %5318 = vmatprep.subr.bf16.mxu0 0
    %5319 = vmatpush2.bf16.msra.mxu0 0
    %5320 = vmatprep.subr.bf16.mxu0 0
    %5321 = vmatpush2.bf16.msra.mxu0 0
    %5322 = vmatprep.mubr.bf16.mxu0 0
    %5323 = vmatmul.mubr.bf16.gmra.mxu0 %v5288
    %v5324 = vpop.f32.mrf.mxu0
    %v5325 = vadd.f32 0.0, %v5324
    %v5326 = vpop.f32.mrf.mxu0
    %v5327 = vpop.f32.mrf.mxu0
    %v5328 = vpop.f32.mrf.mxu0
    %5329 = vdwg.mxu0
    %v5331 = vsel %vm44, %v5080, 0
    %5333 = vmatprep.subr.bf16.mxu0 0
    %5334 = vmatpush1.bf16.msra.mxu0 0
    %5335 = vmatprep.subr.bf16.mxu0 0
    %5336 = vmatpush1.bf16.msra.mxu0 0
    %5337 = vmatprep.subr.bf16.mxu0 0
    %5338 = vmatpush1.bf16.msra.mxu0 0
    %5339 = vmatprep.subr.bf16.mxu0 0
    %5340 = vmatpush1.bf16.msra.mxu0 0
    %5341 = vmatprep.subr.bf16.mxu0 0
    %5342 = vmatpush1.bf16.msra.mxu0 %v5106
    %5343 = vmatprep.subr.bf16.mxu0 0
    %5344 = vmatpush1.bf16.msra.mxu0 %v5105
    %5345 = vmatprep.subr.bf16.mxu0 0
    %5346 = vmatpush1.bf16.msra.mxu0 %v5104
    %5347 = vmatprep.subr.bf16.mxu0 0
    %5348 = vmatpush1.bf16.msra.mxu0 %v5103
    %5349 = vmatprep.subr.bf16.mxu0 0
    %5350 = vmatpush2.bf16.msra.mxu0 0
    %5351 = vmatprep.subr.bf16.mxu0 0
    %5352 = vmatpush2.bf16.msra.mxu0 0
    %5353 = vmatprep.subr.bf16.mxu0 0
    %5354 = vmatpush2.bf16.msra.mxu0 0
    %5355 = vmatprep.subr.bf16.mxu0 0
    %5356 = vmatpush2.bf16.msra.mxu0 0
    %5357 = vmatprep.subr.bf16.mxu0 0
    %5358 = vmatpush2.bf16.msra.mxu0 0
    %5359 = vmatprep.subr.bf16.mxu0 0
    %5360 = vmatpush2.bf16.msra.mxu0 0
    %5361 = vmatprep.subr.bf16.mxu0 0
    %5362 = vmatpush2.bf16.msra.mxu0 0
    %5363 = vmatprep.subr.bf16.mxu0 0
    %5364 = vmatpush2.bf16.msra.mxu0 0
    %5365 = vmatprep.mubr.bf16.mxu0 0
    %5366 = vmatmul.mubr.bf16.gmra.mxu0 %v5331
    %v5367 = vpop.f32.mrf.mxu0
    %v5368 = vadd.f32 0.0, %v5367
    %v5369 = vpop.f32.mrf.mxu0
    %v5370 = vpop.f32.mrf.mxu0
    %v5371 = vpop.f32.mrf.mxu0
    %5372 = vdwg.mxu0
    %v5374 = vsel %vm44, %v5081, 0
    %5376 = vmatprep.subr.bf16.mxu0 0
    %5377 = vmatpush1.bf16.msra.mxu0 0
    %5378 = vmatprep.subr.bf16.mxu0 0
    %5379 = vmatpush1.bf16.msra.mxu0 0
    %5380 = vmatprep.subr.bf16.mxu0 0
    %5381 = vmatpush1.bf16.msra.mxu0 0
    %5382 = vmatprep.subr.bf16.mxu0 0
    %5383 = vmatpush1.bf16.msra.mxu0 0
    %5384 = vmatprep.subr.bf16.mxu0 0
    %5385 = vmatpush1.bf16.msra.mxu0 %v5110
    %5386 = vmatprep.subr.bf16.mxu0 0
    %5387 = vmatpush1.bf16.msra.mxu0 %v5109
    %5388 = vmatprep.subr.bf16.mxu0 0
    %5389 = vmatpush1.bf16.msra.mxu0 %v5108
    %5390 = vmatprep.subr.bf16.mxu0 0
    %5391 = vmatpush1.bf16.msra.mxu0 %v5107
    %5392 = vmatprep.subr.bf16.mxu0 0
    %5393 = vmatpush2.bf16.msra.mxu0 0
    %5394 = vmatprep.subr.bf16.mxu0 0
    %5395 = vmatpush2.bf16.msra.mxu0 0
    %5396 = vmatprep.subr.bf16.mxu0 0
    %5397 = vmatpush2.bf16.msra.mxu0 0
    %5398 = vmatprep.subr.bf16.mxu0 0
    %5399 = vmatpush2.bf16.msra.mxu0 0
    %5400 = vmatprep.subr.bf16.mxu0 0
    %5401 = vmatpush2.bf16.msra.mxu0 0
    %5402 = vmatprep.subr.bf16.mxu0 0
    %5403 = vmatpush2.bf16.msra.mxu0 0
    %5404 = vmatprep.subr.bf16.mxu0 0
    %5405 = vmatpush2.bf16.msra.mxu0 0
    %5406 = vmatprep.subr.bf16.mxu0 0
    %5407 = vmatpush2.bf16.msra.mxu0 0
    %5408 = vmatprep.mubr.bf16.mxu0 0
    %5409 = vmatmul.mubr.bf16.gmra.mxu0 %v5374
    %v5410 = vpop.f32.mrf.mxu0
    %v5411 = vadd.f32 0.0, %v5410
    %v5412 = vpop.f32.mrf.mxu0
    %v5413 = vpop.f32.mrf.mxu0
    %v5414 = vpop.f32.mrf.mxu0
    %5415 = vdwg.mxu0
    %v5417 = vsel %vm44, %v5082, 0
    %5419 = vmatprep.subr.bf16.mxu0 0
    %5420 = vmatpush1.bf16.msra.mxu0 0
    %5421 = vmatprep.subr.bf16.mxu0 0
    %5422 = vmatpush1.bf16.msra.mxu0 0
    %5423 = vmatprep.subr.bf16.mxu0 0
    %5424 = vmatpush1.bf16.msra.mxu0 0
    %5425 = vmatprep.subr.bf16.mxu0 0
    %5426 = vmatpush1.bf16.msra.mxu0 0
    %5427 = vmatprep.subr.bf16.mxu0 0
    %5428 = vmatpush1.bf16.msra.mxu0 %v5114
    %5429 = vmatprep.subr.bf16.mxu0 0
    %5430 = vmatpush1.bf16.msra.mxu0 %v5113
    %5431 = vmatprep.subr.bf16.mxu0 0
    %5432 = vmatpush1.bf16.msra.mxu0 %v5112
    %5433 = vmatprep.subr.bf16.mxu0 0
    %5434 = vmatpush1.bf16.msra.mxu0 %v5111
    %5435 = vmatprep.subr.bf16.mxu0 0
    %5436 = vmatpush2.bf16.msra.mxu0 0
    %5437 = vmatprep.subr.bf16.mxu0 0
    %5438 = vmatpush2.bf16.msra.mxu0 0
    %5439 = vmatprep.subr.bf16.mxu0 0
    %5440 = vmatpush2.bf16.msra.mxu0 0
    %5441 = vmatprep.subr.bf16.mxu0 0
    %5442 = vmatpush2.bf16.msra.mxu0 0
    %5443 = vmatprep.subr.bf16.mxu0 0
    %5444 = vmatpush2.bf16.msra.mxu0 0
    %5445 = vmatprep.subr.bf16.mxu0 0
    %5446 = vmatpush2.bf16.msra.mxu0 0
    %5447 = vmatprep.subr.bf16.mxu0 0
    %5448 = vmatpush2.bf16.msra.mxu0 0
    %5449 = vmatprep.subr.bf16.mxu0 0
    %5450 = vmatpush2.bf16.msra.mxu0 0
    %5451 = vmatprep.mubr.bf16.mxu0 0
    %5452 = vmatmul.mubr.bf16.gmra.mxu0 %v5417
    %v5453 = vpop.f32.mrf.mxu0
    %v5454 = vadd.f32 0.0, %v5453
    %v5455 = vpop.f32.mrf.mxu0
    %v5456 = vpop.f32.mrf.mxu0
    %v5457 = vpop.f32.mrf.mxu0
    %5458 = vdwg.mxu0
    %5460 = vrot.lane.b32.xlu0 %v5196, 8
    %v5461 = vpop.permute.xlu0 %5460
    %5464 = vrot.lane.b32.xlu0 %v5239, 16
    %v5465 = vpop.permute.xlu0 %5464
    %5468 = vrot.lane.b32.xlu0 %v5282, 24
    %v5469 = vpop.permute.xlu0 %5468
    %5472 = vrot.lane.b32.xlu0 %v5325, 32
    %v5473 = vpop.permute.xlu0 %5472
    %5476 = vrot.lane.b32.xlu0 %v5368, 40
    %v5477 = vpop.permute.xlu0 %5476
    %5480 = vrot.lane.b32.xlu0 %v5411, 48
    %v5481 = vpop.permute.xlu0 %5480
    %5484 = vrot.lane.b32.xlu0 %v5454, 56
    %v5485 = vpop.permute.xlu0 %5484
    %v5487 = vsel %vm901, %v5153, %v5461
    %v5488 = vsel %vm2991, %v5487, %v5465
    %v5489 = vsel %vm2993, %v5488, %v5469
    %v5490 = vsel %vm2995, %v5489, %v5473
    %v5491 = vsel %vm2997, %v5490, %v5477
    %v5492 = vsel %vm2999, %v5491, %v5481
    %v5493 = vsel %vm3001, %v5492, %v5485
    %v5495 = vrot.slane %v5493, 7
    %vm5497 = vcmask 1040384
    %v5498 = vsel %vm5497, %v3002, %v5495
    %v5499 = vpack.c.bf16 %v5498, %v5498
    %v5500 = vld [vmem:[%s5] sm:$0xf]
    %v5501 = vld [vmem:[%s5 + $0x4] sm:$0xf]
    %v5502 = vld [vmem:[%s5 + $0x8] sm:$0xf]
    %v5503 = vld [vmem:[%s5 + $0xc] sm:$0xf]
    %v5504 = vld [vmem:[%s5 + $0x10] sm:$0xf]
    %v5505 = vld [vmem:[%s5 + $0x14] sm:$0xf]
    %v5506 = vld [vmem:[%s5 + $0x18] sm:$0xf]
    %v5507 = vld [vmem:[%s5 + $0x1c] sm:$0xf]
    %v5508 = vld [vmem:[%s6] sm:$0x1]
    %v5510 = vlaneseq
    %v5511 = vshrl.u32 %v5510, 7
    %v5512 = vsub.s32 0, %v5511
    %v5513 = vrot.slane %v5508, %v5512
    %v5523 = vunpack.c.l.b16 %v5500
    %v5524 = vunpack.c.l.b16 %v5501
    %v5525 = vunpack.c.l.b16 %v5502
    %v5526 = vunpack.c.l.b16 %v5503
    %v5527 = vunpack.c.l.b16 %v5504
    %v5528 = vunpack.c.l.b16 %v5505
    %v5529 = vunpack.c.l.b16 %v5506
    %v5530 = vunpack.c.l.b16 %v5507
    %v5531 = vpack.c.b16 %v5524, %v5523
    %v5532 = vpack.c.b16 %v5526, %v5525
    %v5533 = vpack.c.b16 %v5528, %v5527
    %v5534 = vpack.c.b16 %v5530, %v5529
    %v5540 = vsel %vm44, %v5499, 0
    %5542 = vmatprep.subr.bf16.mxu0 0
    %5543 = vmatpush1.bf16.msra.mxu0 0
    %5544 = vmatprep.subr.bf16.mxu0 0
    %5545 = vmatpush1.bf16.msra.mxu0 0
    %5546 = vmatprep.subr.bf16.mxu0 0
    %5547 = vmatpush1.bf16.msra.mxu0 0
    %5548 = vmatprep.subr.bf16.mxu0 0
    %5549 = vmatpush1.bf16.msra.mxu0 0
    %5550 = vmatprep.subr.bf16.mxu0 0
    %5551 = vmatpush1.bf16.msra.mxu0 %v5534
    %5552 = vmatprep.subr.bf16.mxu0 0
    %5553 = vmatpush1.bf16.msra.mxu0 %v5533
    %5554 = vmatprep.subr.bf16.mxu0 0
    %5555 = vmatpush1.bf16.msra.mxu0 %v5532
    %5556 = vmatprep.subr.bf16.mxu0 0
    %5557 = vmatpush1.bf16.msra.mxu0 %v5531
    %5558 = vmatprep.subr.bf16.mxu0 0
    %5559 = vmatpush2.bf16.msra.mxu0 0
    %5560 = vmatprep.subr.bf16.mxu0 0
    %5561 = vmatpush2.bf16.msra.mxu0 0
    %5562 = vmatprep.subr.bf16.mxu0 0
    %5563 = vmatpush2.bf16.msra.mxu0 0
    %5564 = vmatprep.subr.bf16.mxu0 0
    %5565 = vmatpush2.bf16.msra.mxu0 0
    %5566 = vmatprep.subr.bf16.mxu0 0
    %5567 = vmatpush2.bf16.msra.mxu0 0
    %5568 = vmatprep.subr.bf16.mxu0 0
    %5569 = vmatpush2.bf16.msra.mxu0 0
    %5570 = vmatprep.subr.bf16.mxu0 0
    %5571 = vmatpush2.bf16.msra.mxu0 0
    %5572 = vmatprep.subr.bf16.mxu0 0
    %5573 = vmatpush2.bf16.msra.mxu0 0
    %5574 = vmatprep.mubr.bf16.mxu0 0
    %5575 = vmatmul.mubr.bf16.gmra.mxu0 %v5540
    %v5576 = vpop.f32.mrf.mxu0
    %v5577 = vadd.f32 %v5513, %v5576
    %v5578 = vpop.f32.mrf.mxu0
    %v5579 = vpop.f32.mrf.mxu0
    %v5580 = vpop.f32.mrf.mxu0
    %5581 = vdwg.mxu0
    %vm5582 = vcmask 517120
    %5583 = vst.msk [vmem:[#allocation2] sm:$0x3] %vm5582, %v5577
    // Predicated region
    $region30: #{tpu_custom_call.1} parent=1 // pred_check
      _
    $region31: #{tpu_custom_call.1} parent=1 // pred_check_branch
      %5585 = sbr.rel (0) target = $region33
    $region32: #{tpu_custom_call.1} parent=1 // pred_region
      %s5587 = ssub.s32 32, 32
      %5588 = vsyncadd [#allocation3], %s5587
      %s5590 = sshll.u32 [#allocation2], 4
      %s5591 = int_to_ptr.vmem [resolvable:$true] %s5590
      %5593 = dma.vmem_to_hbm [thread:$0]  %s5591, 32, %s7, [#allocation3]
    $region33: #{tpu_custom_call.1} parent=1 // pred_fallthru
      _
    // Predicated region
    $region34: #{tpu_custom_call.1} parent=1 // pred_check
      _
    $region35: #{tpu_custom_call.1} parent=1 // pred_check_branch
      %5595 = sbr.rel (0) target = $region37
    $region36: #{tpu_custom_call.1} parent=1 // pred_region
      %5596 = dma.done [#allocation3], 32
    $region37: #{tpu_custom_call.1} parent=1 // pred_fallthru
      _
    %5597 = vsyncpa [#allocation3], 1

</llo_original>
